<compile_context>
chip_gen: v7x
topology: tpu7x:2x2x1
jax: 0.10.0
libtpu: 0.0.40
codegen_flags: <defaults>
</compile_context>

<pallas_src>
import jax
import jax.numpy as jnp
from jax import lax
from jax.experimental import pallas as pl
from jax.experimental.pallas import tpu as pltpu

EPS = 1e-5                       # PyTorch BatchNorm1d default eps
VMEM_LIMIT = 48 * 1024 * 1024    # above 16/32 MiB defaults, below v7x's 64 MiB

_CONV_COMPILER_PARAMS = pltpu.CompilerParams(
    dimension_semantics=("parallel", "arbitrary"),
    vmem_limit_bytes=VMEM_LIMIT,
)


# ----------------------------------------------------------------------------
# kernels
# ----------------------------------------------------------------------------
def _conv1_from_x(x_ref, w1_ref, b1_ref):
    """a1 = x_tile^T @ w1 + b1.  NCW tile (k, TN) contracted on channel axis
    directly (fused transpose); bf16 MXU operands, f32 accumulation."""
    x = x_ref[0].astype(jnp.bfloat16)                              # (k, TN)
    return lax.dot_general(x, w1_ref[...], (((0,), (0,)), ((), ())),
                           preferred_element_type=jnp.float32) + b1_ref[...]


def _accum_sum_sq(t, a, s_ref, q_ref):
    """Accumulate per-batch per-channel sum / sum-of-squares (one-pass BN)."""
    @pl.when(t == 0)
    def _():
        s_ref[...] = jnp.zeros(s_ref.shape, s_ref.dtype)
        q_ref[...] = jnp.zeros(q_ref.shape, q_ref.dtype)
    s_ref[...] += jnp.sum(a, axis=0)[None, None, :]
    q_ref[...] += jnp.sum(a * a, axis=0)[None, None, :]


def _pass1_kernel(x_ref, w1_ref, b1_ref, s_ref, q_ref):
    """conv1 -> BN1 statistics.  No activation is written out."""
    t = pl.program_id(1)
    a1 = _conv1_from_x(x_ref, w1_ref, b1_ref)                      # (TN, C1) f32
    _accum_sum_sq(t, a1, s_ref, q_ref)


def _pass2_kernel(x_ref, w1_ref, b1_ref, sc1_ref, sh1_ref,
                  w2_ref, b2_ref, s_ref, q_ref):
    """Recompute conv1, apply BN1+ReLU, conv2 -> BN2 statistics only."""
    t = pl.program_id(1)
    a1 = _conv1_from_x(x_ref, w1_ref, b1_ref)                      # (TN, C1)
    z1 = jnp.maximum(a1 * sc1_ref[...] + sh1_ref[...], 0.0)        # f32 BN+ReLU
    a2 = jnp.dot(z1.astype(jnp.bfloat16), w2_ref[...],
                 preferred_element_type=jnp.float32) + b2_ref[...]  # (TN, C2)
    _accum_sum_sq(t, a2, s_ref, q_ref)


def _pass3_kernel(x_ref, w1_ref, b1_ref, sc1_ref, sh1_ref,
                  w2_ref, b2_ref, sc2_ref, sh2_ref, w3_ref, b3_ref,
                  s_ref, q_ref, mx_ref, mn_ref):
    """Recompute conv1/conv2, apply BN1/BN2+ReLU, conv3; accumulate BN3
    statistics plus the per-batch running max AND min of pre-BN conv3 — the
    (B*N, 1024) activation never touches HBM."""
    t = pl.program_id(1)
    a1 = _conv1_from_x(x_ref, w1_ref, b1_ref)
    z1 = jnp.maximum(a1 * sc1_ref[...] + sh1_ref[...], 0.0)
    a2 = jnp.dot(z1.astype(jnp.bfloat16), w2_ref[...],
                 preferred_element_type=jnp.float32) + b2_ref[...]
    z2 = jnp.maximum(a2 * sc2_ref[...] + sh2_ref[...], 0.0)
    a3 = jnp.dot(z2.astype(jnp.bfloat16), w3_ref[...],
                 preferred_element_type=jnp.float32) + b3_ref[...]  # (TN, C3)

    @pl.when(t == 0)
    def _():
        s_ref[...] = jnp.zeros(s_ref.shape, s_ref.dtype)
        q_ref[...] = jnp.zeros(q_ref.shape, q_ref.dtype)
        mx_ref[...] = jnp.full(mx_ref.shape, -jnp.inf, mx_ref.dtype)
        mn_ref[...] = jnp.full(mn_ref.shape, jnp.inf, mn_ref.dtype)

    s_ref[...] += jnp.sum(a3, axis=0)[None, None, :]
    q_ref[...] += jnp.sum(a3 * a3, axis=0)[None, None, :]
    mx_ref[...] = jnp.maximum(mx_ref[...], jnp.max(a3, axis=0)[None, None, :])
    mn_ref[...] = jnp.minimum(mn_ref[...], jnp.min(a3, axis=0)[None, None, :])


def _bn_relu_rows(h, gamma, beta):
    """Training-mode batch-norm over rows (axis 0) + ReLU, all in f32."""
    mean = jnp.mean(h, axis=0, keepdims=True)
    var = jnp.mean(jnp.square(h - mean), axis=0, keepdims=True)   # biased (torch)
    return jnp.maximum(gamma * (h - mean) * lax.rsqrt(var + EPS) + beta, 0.0)


def _fc_kernel(mx_ref, mn_ref, sc3_ref, sh3_ref,
               wf1_ref, bf1_ref, g4_ref, be4_ref,
               wf2_ref, bf2_ref, g5_ref, be5_ref,
               wf3_ref, bf3_ref, out_ref):
    """Max-pool finalisation + fc1/bn4/relu + fc2/bn5/relu + fc3 on B rows.
    Latency-bound (only B rows); kept in f32 end-to-end."""
    sc3 = sc3_ref[...]
    # bn3 is a per-channel affine map => monotone: pick running max when the
    # folded scale >= 0, running min otherwise.
    picked = jnp.where(sc3 >= 0.0, mx_ref[...], mn_ref[...])            # (B, C3)
    pooled = jnp.maximum(picked * sc3 + sh3_ref[...], 0.0)              # (B, C3)

    f = jnp.dot(pooled, wf1_ref[...], preferred_element_type=jnp.float32) + bf1_ref[...]
    f = _bn_relu_rows(f, g4_ref[...], be4_ref[...])                     # (B, 512)
    f = jnp.dot(f, wf2_ref[...], preferred_element_type=jnp.float32) + bf2_ref[...]
    f = _bn_relu_rows(f, g5_ref[...], be5_ref[...])                     # (B, 256)
    out_ref[...] = jnp.dot(f, wf3_ref[...],
                           preferred_element_type=jnp.float32) + bf3_ref[...]


# ----------------------------------------------------------------------------
# wrapper
# ----------------------------------------------------------------------------
def _bn_scale_shift(s, q, gamma, beta, count):
    """Fold global-batch BN into per-channel scale/shift from sum / sumsq.
    One-pass E[x^2]-E[x]^2 in f32 (clamped at 0); adequate here since the
    pre-BN activations of 1x1 convs over zero-ish-mean data have O(1) means."""
    total = jnp.sum(s, axis=0).reshape(1, -1)
    total_sq = jnp.sum(q, axis=0).reshape(1, -1)
    mean = total / count
    var = jnp.maximum(total_sq / count - mean * mean, 0.0)
    scale = gamma * lax.rsqrt(var + EPS)
    shift = beta - mean * scale
    return scale, shift


def _pick_block_n(N, k, c1=64, c2=128, c3=1024):
    """Largest point tile (matmul M dim) that divides N and whose per-step
    VMEM footprint fits comfortably even on v7x (64 MiB physical)."""
    def footprint(tn):
        x_in = 2 * k * tn * 4                               # double-buffered x tile
        weights = 2 * 2 * (k * c1 + c1 * c2 + c2 * c3)      # bf16, double-buffered
        inter = tn * (c1 + c2 + 2 * c3) * 4                 # a1+a2+a3(+a3*a3) f32
        return x_in + weights + inter
    budget = 40 * 1024 * 1024
    for t in (2048, 1024, 512, 256, 128):                   # >=128 keeps lane rule
        if N % t == 0 and footprint(t) <= budget:
            return t
    return N   # tiny / irregular N: whole-row tile (last dim == full array dim)


def stnkd_forward(x, p, k, *, block_n=None):
    """x: (B, k, N) float32 — same NCW layout as the PyTorch module input."""
    B, C, N = x.shape
    assert C == k
    if block_n is None:
        block_n = _pick_block_n(N, k)
    assert N % block_n == 0
    TN, NT = block_n, N // block_n
    C1, C2, C3 = p["w1"].shape[1], p["w2"].shape[1], p["w3"].shape[1]
    f32 = jnp.float32

    # conv matmul weights in bf16 (MXU fast path, half the weight traffic)
    w1 = p["w1"].astype(jnp.bfloat16)
    w2 = p["w2"].astype(jnp.bfloat16)
    w3 = p["w3"].astype(jnp.bfloat16)

    x_spec = pl.BlockSpec((1, k, TN), lambda b, t: (b, 0, t))      # fused NCW read

    def whole(shape):
        return pl.BlockSpec(shape, lambda b, t: tuple(0 for _ in shape))

    def stat_spec(c):
        # revisited per-batch accumulator block; written back once per batch
        return pl.BlockSpec((1, 1, c), lambda b, t: (b, 0, 0))

    def stat_shape(c):
        return jax.ShapeDtypeStruct((B, 1, c), f32)

    # ---- pass 1: conv1 -> BN1 statistics (no activation written)
    s1, q1 = pl.pallas_call(
        _pass1_kernel,
        grid=(B, NT),
        in_specs=[x_spec, whole((k, C1)), whole((1, C1))],
        out_specs=[stat_spec(C1), stat_spec(C1)],
        out_shape=[stat_shape(C1), stat_shape(C1)],
        compiler_params=_CONV_COMPILER_PARAMS,
    )(x, w1, p["b1"])
    sc1, sh1 = _bn_scale_shift(s1, q1, p["g1"], p["be1"], B * N)

    # ---- pass 2: recompute conv1, BN1+ReLU, conv2 -> BN2 statistics
    s2, q2 = pl.pallas_call(
        _pass2_kernel,
        grid=(B, NT),
        in_specs=[x_spec, whole((k, C1)), whole((1, C1)),
                  whole((1, C1)), whole((1, C1)),
                  whole((C1, C2)), whole((1, C2))],
        out_specs=[stat_spec(C2), stat_spec(C2)],
        out_shape=[stat_shape(C2), stat_shape(C2)],
        compiler_params=_CONV_COMPILER_PARAMS,
    )(x, w1, p["b1"], sc1, sh1, w2, p["b2"])
    sc2, sh2 = _bn_scale_shift(s2, q2, p["g2"], p["be2"], B * N)

    # ---- pass 3: recompute conv1/conv2, BN+ReLU, conv3 -> BN3 stats + max/min
    s3, q3, mx3, mn3 = pl.pallas_call(
        _pass3_kernel,
        grid=(B, NT),
        in_specs=[x_spec, whole((k, C1)), whole((1, C1)),
                  whole((1, C1)), whole((1, C1)),
                  whole((C1, C2)), whole((1, C2)),
                  whole((1, C2)), whole((1, C2)),
                  whole((C2, C3)), whole((1, C3))],
        out_specs=[stat_spec(C3), stat_spec(C3), stat_spec(C3), stat_spec(C3)],
        out_shape=[stat_shape(C3), stat_shape(C3), stat_shape(C3), stat_shape(C3)],
        compiler_params=_CONV_COMPILER_PARAMS,
    )(x, w1, p["b1"], sc1, sh1, w2, p["b2"], sc2, sh2, w3, p["b3"])
    sc3, sh3 = _bn_scale_shift(s3, q3, p["g3"], p["be3"], B * N)

    # ---- pass 4: tiny FC tail on B rows (separate small kernel, f32)
    fc_inputs = (mx3.reshape(B, C3), mn3.reshape(B, C3), sc3, sh3,
                 p["wf1"], p["bf1"], p["g4"], p["be4"],
                 p["wf2"], p["bf2"], p["g5"], p["be5"],
                 p["wf3"], p["bf3"])
    vmem = pl.BlockSpec(memory_space=pltpu.MemorySpace.VMEM)
    out = pl.pallas_call(
        _fc_kernel,
        out_shape=jax.ShapeDtypeStruct((B, k * k), f32),
        in_specs=[vmem] * len(fc_inputs),
        out_specs=vmem,
        compiler_params=pltpu.CompilerParams(vmem_limit_bytes=VMEM_LIMIT),
    )(*fc_inputs)

    # + flattened identity, hoisted out of the kernel (it never changes)
    out = out + jnp.eye(k, dtype=f32).reshape(1, k * k)
    return out.reshape(B, k, k)


# ----------------------------------------------------------------------------
# parameters + pure-JAX reference
# ----------------------------------------------------------------------------
def _layer(key, cin, cout, with_bn):
    kw, kb, kg, kbe = jax.random.split(key, 4)
    scale = 1.0 / jnp.sqrt(jnp.float32(cin))
    w = jax.random.normal(kw, (cin, cout), jnp.float32) * scale
    b = jax.random.normal(kb, (1, cout), jnp.float32) * 0.1
    if with_bn:
        g = 1.0 + 0.1 * jax.random.normal(kg, (1, cout), jnp.float32)
        be = 0.1 * jax.random.normal(kbe, (1, cout), jnp.float32)
        return w, b, g, be
    return w, b


def make_params(key, k):
    keys = jax.random.split(key, 6)
    p = {}
    p["w1"], p["b1"], p["g1"], p["be1"] = _layer(keys[0], k, 64, True)
    p["w2"], p["b2"], p["g2"], p["be2"] = _layer(keys[1], 64, 128, True)
    p["w3"], p["b3"], p["g3"], p["be3"] = _layer(keys[2], 128, 1024, True)
    p["wf1"], p["bf1"], p["g4"], p["be4"] = _layer(keys[3], 1024, 512, True)
    p["wf2"], p["bf2"], p["g5"], p["be5"] = _layer(keys[4], 512, 256, True)
    p["wf3"], p["bf3"] = _layer(keys[5], 256, k * k, False)
    return p


def stnkd_reference(x, p, k, matmul_dtype=jnp.float32):
    """Pure-JAX reference of the PyTorch forward (batchsize > 1 path).
    matmul_dtype=bfloat16 mirrors the kernel's mixed-precision conv matmuls
    (f32 accumulation); float32 is the exact module semantics."""
    B, C, N = x.shape
    h = jnp.transpose(x, (0, 2, 1)).reshape(B * N, C)

    def mm(a, w):
        return jnp.dot(a.astype(matmul_dtype), w.astype(matmul_dtype),
                       preferred_element_type=jnp.float32)

    def bn_relu(h, g, be):
        m = jnp.mean(h, axis=0, keepdims=True)
        v = jnp.mean((h - m) ** 2, axis=0, keepdims=True)
        return jnp.maximum(g * (h - m) / jnp.sqrt(v + EPS) + be, 0.0)

    h = bn_relu(mm(h, p["w1"]) + p["b1"], p["g1"], p["be1"])
    h = bn_relu(mm(h, p["w2"]) + p["b2"], p["g2"], p["be2"])
    h = bn_relu(mm(h, p["w3"]) + p["b3"], p["g3"], p["be3"])
    pooled = jnp.max(h.reshape(B, N, -1), axis=1)
    f = bn_relu(pooled @ p["wf1"] + p["bf1"], p["g4"], p["be4"])
    f = bn_relu(f @ p["wf2"] + p["bf2"], p["g5"], p["be5"])
    f = f @ p["wf3"] + p["bf3"]
    f = f + jnp.eye(k, dtype=jnp.float32).reshape(1, k * k)
    return f.reshape(B, k, k)


if __name__ == "__main__":
    # BatchNorm (batchsize > 1) path.  N=4096 so the auto-picked point tile is
    # the preferred large size (TN=2048 -> grid (B, 2)), exercising both the
    # big-tile path and the multi-tile stat accumulation.
    B, K, N = 8, 16, 4096
    key = jax.random.PRNGKey(0)
    key, kx = jax.random.split(key)
    x = jax.random.normal(kx, (B, K, N), jnp.float32)        # PyTorch NCW layout
    # give each batch element a different scale so the FC-tail BatchNorm (over
    # only B rows) is well conditioned for the f32-vs-bf16 comparison below
    x = x * jnp.linspace(0.5, 1.5, B, dtype=jnp.float32).reshape(B, 1, 1)
    params = make_params(key, K)
    # exercise the negative-gamma path of the monotone max-pool trick
    params["g3"] = params["g3"].at[0, 0].set(-0.5)

    out = stnkd_forward(x, params, K)          # auto tile -> TN=2048, grid (8, 2)
    out = jax.block_until_ready(out)
    assert out.shape == (B, K, K)

    # tight check vs a reference using the same mixed precision (real gate)
    ref_match = stnkd_reference(x, params, K, matmul_dtype=jnp.bfloat16)
    assert jnp.max(jnp.abs(out - ref_match)) < 2e-2, "mismatch vs matched-precision ref"
    # loose sanity bound vs exact f32 module semantics (bf16 matmul drift only)
    ref_f32 = stnkd_reference(x, params, K, matmul_dtype=jnp.float32)
    assert jnp.max(jnp.abs(out - ref_f32)) < 0.35, "mismatch vs f32 reference"
    print("KERNEL_OK")
</pallas_src>

<mosaic_0001>
module attributes {stable_mosaic.version = 11 : i64} {
  func.func @_pass1_kernel(%arg0: i32, %arg1: i32, %arg2: memref<1x16x2048xf32, #tpu.memory_space<vmem>>, %arg3: memref<16x64xbf16, #tpu.memory_space<vmem>>, %arg4: memref<1x64xf32, #tpu.memory_space<vmem>>, %arg5: memref<1x1x64xf32, #tpu.memory_space<vmem>>, %arg6: memref<1x1x64xf32, #tpu.memory_space<vmem>>) attributes {dimension_semantics = [#tpu.dimension_semantics<parallel>, #tpu.dimension_semantics<arbitrary>], iteration_bounds = array<i64: 8, 2>, scalar_prefetch = 0 : i64, scratch_operands = 0 : i64, tpu.core_type = #tpu.core_type<tc>, window_params = [{transform_indices = @transform_0, window_bounds = array<i64: 1, 16, 2048>}, {pipeline_mode = #tpu.pipeline_mode<synchronous>, transform_indices = @transform_1, window_bounds = array<i64: 16, 64>}, {pipeline_mode = #tpu.pipeline_mode<synchronous>, transform_indices = @transform_2, window_bounds = array<i64: 1, 64>}, {transform_indices = @transform_3, window_bounds = array<i64: 1, 1, 64>}, {transform_indices = @transform_4, window_bounds = array<i64: 1, 1, 64>}]} {
    %c0 = arith.constant 0 : index
    %c0_0 = arith.constant 0 : index
    %c0_1 = arith.constant 0 : index
    %0 = vector.load %arg2[%c0, %c0_0, %c0_1] : memref<1x16x2048xf32, #tpu.memory_space<vmem>>, vector<1x16x2048xf32>
    %1 = vector.shape_cast %0 : vector<1x16x2048xf32> to vector<16x2048xf32>
    %2 = arith.truncf %1 : vector<16x2048xf32> to vector<16x2048xbf16>
    %c0_2 = arith.constant 0 : index
    %c0_3 = arith.constant 0 : index
    %3 = vector.load %arg3[%c0_2, %c0_3] : memref<16x64xbf16, #tpu.memory_space<vmem>>, vector<16x64xbf16>
    %cst = arith.constant dense<0.000000e+00> : vector<2048x64xf32>
    %4 = tpu.matmul %2, %3, %cst {dimension_numbers = #tpu.dot_dimension_numbers<[0], [0], [1], [1], [0, 1, 1, 1], [], []>} : vector<16x2048xbf16>, vector<16x64xbf16>, vector<2048x64xf32> -> vector<2048x64xf32>
    %c0_4 = arith.constant 0 : index
    %c0_5 = arith.constant 0 : index
    %5 = vector.load %arg4[%c0_4, %c0_5] : memref<1x64xf32, #tpu.memory_space<vmem>>, vector<1x64xf32>
    %6 = vector.broadcast %5 : vector<1x64xf32> to vector<2048x64xf32>
    %7 = arith.addf %4, %6 : vector<2048x64xf32>
    %c0_i32 = arith.constant 0 : i32
    %8 = arith.cmpi eq, %arg1, %c0_i32 : i32
    %9 = arith.extui %8 : i1 to i32
    %c0_i32_6 = arith.constant 0 : i32
    %10 = arith.cmpi ne, %9, %c0_i32_6 : i32
    scf.if %10 {
      %cst_21 = arith.constant 0.000000e+00 : f32
      %22 = vector.broadcast %cst_21 : f32 to vector<1x1x64xf32>
      %c0_22 = arith.constant 0 : index
      %c0_23 = arith.constant 0 : index
      %c0_24 = arith.constant 0 : index
      %23 = vector.load %arg5[%c0_22, %c0_23, %c0_24] : memref<1x1x64xf32, #tpu.memory_space<vmem>>, vector<1x1x64xf32>
      tpu.vector_store %arg5[%c0_22, %c0_23, %c0_24], %22 {strides = array<i32>} : memref<1x1x64xf32, #tpu.memory_space<vmem>>, vector<1x1x64xf32>,
      %cst_25 = arith.constant 0.000000e+00 : f32
      %24 = vector.broadcast %cst_25 : f32 to vector<1x1x64xf32>
      %c0_26 = arith.constant 0 : index
      %c0_27 = arith.constant 0 : index
      %c0_28 = arith.constant 0 : index
      %25 = vector.load %arg6[%c0_26, %c0_27, %c0_28] : memref<1x1x64xf32, #tpu.memory_space<vmem>>, vector<1x1x64xf32>
      tpu.vector_store %arg6[%c0_26, %c0_27, %c0_28], %24 {strides = array<i32>} : memref<1x1x64xf32, #tpu.memory_space<vmem>>, vector<1x1x64xf32>,
    } else {
    }
    %c0_7 = arith.constant 0 : index
    %c0_8 = arith.constant 0 : index
    %c0_9 = arith.constant 0 : index
    %11 = vector.load %arg5[%c0_7, %c0_8, %c0_9] : memref<1x1x64xf32, #tpu.memory_space<vmem>>, vector<1x1x64xf32>
    %cst_10 = arith.constant dense<0.000000e+00> : vector<64xf32>
    %12 = vector.multi_reduction <add>, %7, %cst_10 [0] : vector<2048x64xf32> to vector<64xf32>
    %13 = vector.shape_cast %12 : vector<64xf32> to vector<1x1x64xf32>
    %14 = arith.addf %11, %13 : vector<1x1x64xf32>
    %c0_11 = arith.constant 0 : index
    %c0_12 = arith.constant 0 : index
    %c0_13 = arith.constant 0 : index
    %15 = vector.load %arg5[%c0_11, %c0_12, %c0_13] : memref<1x1x64xf32, #tpu.memory_space<vmem>>, vector<1x1x64xf32>
    tpu.vector_store %arg5[%c0_11, %c0_12, %c0_13], %14 {strides = array<i32>} : memref<1x1x64xf32, #tpu.memory_space<vmem>>, vector<1x1x64xf32>,
    %c0_14 = arith.constant 0 : index
    %c0_15 = arith.constant 0 : index
    %c0_16 = arith.constant 0 : index
    %16 = vector.load %arg6[%c0_14, %c0_15, %c0_16] : memref<1x1x64xf32, #tpu.memory_space<vmem>>, vector<1x1x64xf32>
    %17 = arith.mulf %7, %7 : vector<2048x64xf32>
    %cst_17 = arith.constant dense<0.000000e+00> : vector<64xf32>
    %18 = vector.multi_reduction <add>, %17, %cst_17 [0] : vector<2048x64xf32> to vector<64xf32>
    %19 = vector.shape_cast %18 : vector<64xf32> to vector<1x1x64xf32>
    %20 = arith.addf %16, %19 : vector<1x1x64xf32>
    %c0_18 = arith.constant 0 : index
    %c0_19 = arith.constant 0 : index
    %c0_20 = arith.constant 0 : index
    %21 = vector.load %arg6[%c0_18, %c0_19, %c0_20] : memref<1x1x64xf32, #tpu.memory_space<vmem>>, vector<1x1x64xf32>
    tpu.vector_store %arg6[%c0_18, %c0_19, %c0_20], %20 {strides = array<i32>} : memref<1x1x64xf32, #tpu.memory_space<vmem>>, vector<1x1x64xf32>,
    return
  }
  func.func @transform_0(%arg0: i32, %arg1: i32) -> (i32, i32, i32) {
    %c0_i32 = arith.constant 0 : i32
    %c0_i32_0 = arith.constant 0 : i32
    return %arg0, %c0_i32, %arg1 : i32, i32, i32
  }
  func.func @transform_1(%arg0: i32, %arg1: i32) -> (i32, i32) {
    %c0_i32 = arith.constant 0 : i32
    %c0_i32_0 = arith.constant 0 : i32
    %c0_i32_1 = arith.constant 0 : i32
    return %c0_i32, %c0_i32_0 : i32, i32
  }
  func.func @transform_2(%arg0: i32, %arg1: i32) -> (i32, i32) {
    %c0_i32 = arith.constant 0 : i32
    %c0_i32_0 = arith.constant 0 : i32
    %c0_i32_1 = arith.constant 0 : i32
    return %c0_i32, %c0_i32_0 : i32, i32
  }
  func.func @transform_3(%arg0: i32, %arg1: i32) -> (i32, i32, i32) {
    %c0_i32 = arith.constant 0 : i32
    %c0_i32_0 = arith.constant 0 : i32
    %c0_i32_1 = arith.constant 0 : i32
    return %arg0, %c0_i32, %c0_i32_0 : i32, i32, i32
  }
  func.func @transform_4(%arg0: i32, %arg1: i32) -> (i32, i32, i32) {
    %c0_i32 = arith.constant 0 : i32
    %c0_i32_0 = arith.constant 0 : i32
    %c0_i32_1 = arith.constant 0 : i32
    return %arg0, %c0_i32, %c0_i32_0 : i32, i32, i32
  }
}

</mosaic_0001>

<llo_original>
// kernel: tpu_custom_call.1
$region0: #{tpu_custom_call.1}
  #allocation0 [shape = 'u32[]', space=smem, size = 0x4, offset = 0x4, fixed_abs, tag = 'smem constant byte address 0x4 - core index']
  #allocation1 [shape = 'u32[144,128]{1,0:T(1,128)}', space=vmem, size = 0x12000, scoped, tag = 'internal scratch']
  %s0 = inlined_call_operand.hbm [shape: f32[8,16,4096], index: 0, kind: input, shape index: {}]
  %s1 = inlined_call_operand.hbm [shape: bf16[16,64], index: 1, kind: input, shape index: {}]
  %s2 = inlined_call_operand.hbm [shape: f32[1,64], index: 2, kind: input, shape index: {}]
  %s3 = inlined_call_operand.hbm [shape: f32[8,1,64], index: 3, kind: output, shape index: {0}]
  %s4 = inlined_call_operand.hbm [shape: f32[8,1,64], index: 4, kind: output, shape index: {1}]
  %5 = xla_tuple %s3, %s4
  %s6 = sld [smem:[#allocation0]]
  $region69: #{tpu_custom_call.1} parent=0
    _
  %s8 = ssub.s32 1, %s6
  %s9 = scalar_select 0, %s8, %s6
  $region1: #{tpu_custom_call.1} parent=0
    #allocation2 [shape = 'u8[262144]{0}', space=vmem, size = 0x40000, scoped, tag = 'input window, operand 0']
    #allocation3 [shape = 's32[2]{0}', space=sflag, size = 0x8, scoped, tag = 'scoped memory for tpu_custom_call.1']
    #allocation4 [shape = 's32[2]{0}', space=sflag, size = 0x8, scoped, tag = 'scoped memory for tpu_custom_call.1']
    #allocation5 [shape = 'u8[4096]{0}', space=vmem, size = 0x1000, scoped, tag = 'input window, operand 1, single buffered']
    #allocation6 [shape = 's32[1]{0}', space=sflag, size = 0x4, scoped, tag = 'scoped memory for tpu_custom_call.1']
    #allocation7 [shape = 'u8[512]{0}', space=vmem, size = 0x400, scoped, tag = 'input window, operand 2, single buffered']
    #allocation8 [shape = 'u8[1024]{0}', space=vmem, size = 0x400, scoped, tag = 'output window, operand 0']
    #allocation9 [shape = 'u8[1024]{0}', space=vmem, size = 0x400, scoped, tag = 'output window, operand 1']
    #allocation10 [shape = 's32[2]{0}', space=sflag, size = 0x8, scoped, tag = 'scoped memory for tpu_custom_call.1']
    %10 = vsyncpa [#allocation3], 0
    %s11 = scalar_lea.sflag [#allocation3], 1
    %12 = vsyncpa %s11, 0
    %13 = vsyncpa [#allocation6], 0
    %14 = vsyncpa [#allocation4], 0
    %s15 = scalar_lea.sflag [#allocation4], 1
    %16 = vsyncpa %s15, 0
    %17 = vsyncpa [#allocation10], 0
    %s18 = scalar_lea.sflag [#allocation10], 1
    %19 = vsyncpa %s18, 0
    loop: start=0, step=1, limit=18
    $region2: #{tpu_custom_call.1} parent=1 // loop_pre_header
      _
    $region3: #{tpu_custom_call.1} parent=1 // loop_header
      %s21 = sphi 0, %s25
      %p22 = scmp.ge.s32.totalorder %s21, 18
      %s28 = sphi 0, %s40
      %s29 = sphi 0, %s36
      %s30 = sphi 0, %s28
      %s31 = sphi 0, %s29
      %s32 = sphi 0, %s30
      %s33 = sphi 0, %s31
      %s45 = sphi 0, %s47
      %s48 = sphi 0, %s45
      %s49 = sphi 0, %s48
      %s65 = sphi 0, %s49
      %s69 = sphi 0, %s69
      %s71 = sphi 0, %s69
      %s72 = sphi 0, %s71
      %s86 = sphi 0, %s72
      %s90 = sphi 0, %s90
      %s92 = sphi 0, %s90
      %s93 = sphi 0, %s92
      %s107 = sphi 0, %s93
      %s113 = sphi 0, %s115
      %s116 = sphi 0, %s113
      %s117 = sphi 0, %s116
      %s133 = sphi 0, %s117
      %s139 = sphi 0, %s141
      %s142 = sphi 0, %s139
      %s143 = sphi 0, %s142
      %s159 = sphi 0, %s143
    $region4: #{tpu_custom_call.1} parent=1 // loop_header_branch
      %24 = sbr.rel (%p22) target = $region8
    $region5: #{tpu_custom_call.1} parent=1 // loop_body
      %s26 = ssub.s32 %s21, 1
      %s27 = ssub.s32 %s21, 2
      %s34 = sadd.s32 1, %s29
      %p35 = scmp.ge.s32.totalorder %s34, 2
      %s36 = scalar_select %p35, 0, %s34
      %s37 = sadd.s32 1, %s28
      %s38 = scalar_select %p35, %s37, %s28
      %p39 = scmp.ge.s32.totalorder %s38, 8
      %s40 = scalar_select %p39, 0, %s38
      %s41 = ssub.s32 %s28, %s40
      %s42 = ssub.s32 %s29, %s36
      %s43 = sor.u32 %s41, %s42
      %p44 = scmp.eq.s32.totalorder %s43, 0
      %s46 = sadd.s32 %s45, 1
      %s47 = scalar_select %p44, %s45, %s46
      %p50 = pneg %p44
      %p51 = scmp.eq.s32.totalorder %s21, 15
      %p52 = por %p50, %p51
      %p53 = scmp.ne.s32.totalorder %s45, %s48
      %p54 = scmp.eq.s32.totalorder %s21, 0
      %p55 = por %p53, %p54
      %p56 = scmp.ne.s32.totalorder %s45, %s48
      %p57 = scmp.eq.s32.totalorder %s26, 15
      %p58 = por %p56, %p57
      %p59 = scmp.ne.s32.totalorder %s48, %s49
      %p60 = scmp.eq.s32.totalorder %s26, 0
      %p61 = por %p59, %p60
      %p62 = scmp.ne.s32.totalorder %s48, %s49
      %p63 = scmp.eq.s32.totalorder %s27, 15
      %p64 = por %p62, %p63
      %p66 = scmp.ne.s32.totalorder %s49, %s65
      %p67 = scmp.eq.s32.totalorder %s27, 0
      %p68 = por %p66, %p67
      %s70 = sadd.s32 %s69, 1
      %p73 = scmp.eq.s32.totalorder %s21, 15
      %p74 = scmp.ne.s32.totalorder %s69, %s71
      %p75 = scmp.eq.s32.totalorder %s21, 0
      %p76 = por %p74, %p75
      %p77 = scmp.ne.s32.totalorder %s69, %s71
      %p78 = scmp.eq.s32.totalorder %s26, 15
      %p79 = por %p77, %p78
      %p80 = scmp.ne.s32.totalorder %s71, %s72
      %p81 = scmp.eq.s32.totalorder %s26, 0
      %p82 = por %p80, %p81
      %p83 = scmp.ne.s32.totalorder %s71, %s72
      %p84 = scmp.eq.s32.totalorder %s27, 15
      %p85 = por %p83, %p84
      %p87 = scmp.ne.s32.totalorder %s72, %s86
      %p88 = scmp.eq.s32.totalorder %s27, 0
      %p89 = por %p87, %p88
      %s91 = sadd.s32 %s90, 1
      %p94 = scmp.eq.s32.totalorder %s21, 15
      %p95 = scmp.ne.s32.totalorder %s90, %s92
      %p96 = scmp.eq.s32.totalorder %s21, 0
      %p97 = por %p95, %p96
      %p98 = scmp.ne.s32.totalorder %s90, %s92
      %p99 = scmp.eq.s32.totalorder %s26, 15
      %p100 = por %p98, %p99
      %p101 = scmp.ne.s32.totalorder %s92, %s93
      %p102 = scmp.eq.s32.totalorder %s26, 0
      %p103 = por %p101, %p102
      %p104 = scmp.ne.s32.totalorder %s92, %s93
      %p105 = scmp.eq.s32.totalorder %s27, 15
      %p106 = por %p104, %p105
      %p108 = scmp.ne.s32.totalorder %s93, %s107
      %p109 = scmp.eq.s32.totalorder %s27, 0
      %p110 = por %p108, %p109
      %s111 = ssub.s32 %s28, %s40
      %p112 = scmp.eq.s32.totalorder %s111, 0
      %s114 = sadd.s32 %s113, 1
      %s115 = scalar_select %p112, %s113, %s114
      %p118 = pneg %p112
      %p119 = scmp.eq.s32.totalorder %s21, 15
      %p120 = por %p118, %p119
      %p121 = scmp.ne.s32.totalorder %s113, %s116
      %p122 = scmp.eq.s32.totalorder %s21, 0
      %p123 = por %p121, %p122
      %p124 = scmp.ne.s32.totalorder %s113, %s116
      %p125 = scmp.eq.s32.totalorder %s26, 15
      %p126 = por %p124, %p125
      %p127 = scmp.ne.s32.totalorder %s116, %s117
      %p128 = scmp.eq.s32.totalorder %s26, 0
      %p129 = por %p127, %p128
      %p130 = scmp.ne.s32.totalorder %s116, %s117
      %p131 = scmp.eq.s32.totalorder %s27, 15
      %p132 = por %p130, %p131
      %p134 = scmp.ne.s32.totalorder %s117, %s133
      %p135 = scmp.eq.s32.totalorder %s27, 0
      %p136 = por %p134, %p135
      %s137 = ssub.s32 %s28, %s40
      %p138 = scmp.eq.s32.totalorder %s137, 0
      %s140 = sadd.s32 %s139, 1
      %s141 = scalar_select %p138, %s139, %s140
      %p144 = pneg %p138
      %p145 = scmp.eq.s32.totalorder %s21, 15
      %p146 = por %p144, %p145
      %p147 = scmp.ne.s32.totalorder %s139, %s142
      %p148 = scmp.eq.s32.totalorder %s21, 0
      %p149 = por %p147, %p148
      %p150 = scmp.ne.s32.totalorder %s139, %s142
      %p151 = scmp.eq.s32.totalorder %s26, 15
      %p152 = por %p150, %p151
      %p153 = scmp.ne.s32.totalorder %s142, %s143
      %p154 = scmp.eq.s32.totalorder %s26, 0
      %p155 = por %p153, %p154
      %p156 = scmp.ne.s32.totalorder %s142, %s143
      %p157 = scmp.eq.s32.totalorder %s27, 15
      %p158 = por %p156, %p157
      %p160 = scmp.ne.s32.totalorder %s143, %s159
      %p161 = scmp.eq.s32.totalorder %s27, 0
      %p162 = por %p160, %p161
      %p163 = scmp.le.s32.totalorder 1, %s21
      %p164 = scmp.lt.s32.totalorder %s21, 17
      %p165 = pnand %p163, %p164
      %p166 = pneg %p165
      // Predicated region
      $region9: #{tpu_custom_call.1} parent=5 // pred_check
        _
      $region10: #{tpu_custom_call.1} parent=5 // pred_check_branch
        %168 = sbr.rel (%p165) target = $region12
      $region11: #{tpu_custom_call.1} parent=5 // pred_region
        %s169 = ssub.s32 %s21, 1
        // Predicated region
        $region13: #{tpu_custom_call.1} parent=11 // pred_check
          %p170 = pneg %p82
        $region14: #{tpu_custom_call.1} parent=11 // pred_check_branch
          %172 = sbr.rel (%p170) target = $region16
        $region15: #{tpu_custom_call.1} parent=11 // pred_region
          %s174 = ssub.s32 128, 128
          %175 = vsyncadd [#allocation6], %s174
          %s176 = sshll.u32 [#allocation5], 4
          %s177 = int_to_ptr.vmem [resolvable:$true] %s176
          %182 = dma.hbm_to_vmem [thread:$0]  %s1, 128, %s177, [#allocation6], 64, 64, 4
        $region16: #{tpu_custom_call.1} parent=11 // pred_fallthru
          _
        // Predicated region
        $region17: #{tpu_custom_call.1} parent=11 // pred_check
          %p183 = pneg %p103
        $region18: #{tpu_custom_call.1} parent=11 // pred_check_branch
          %185 = sbr.rel (%p183) target = $region20
        $region19: #{tpu_custom_call.1} parent=11 // pred_region
          %s187 = ssub.s32 16, 16
          %188 = vsyncadd [#allocation6], %s187
          %s190 = sshll.u32 [#allocation7], 4
          %s191 = int_to_ptr.vmem [resolvable:$true] %s190
          %193 = dma.hbm_to_vmem [thread:$0]  %s2, 16, %s191, [#allocation6]
        $region20: #{tpu_custom_call.1} parent=11 // pred_fallthru
          _
      $region12: #{tpu_custom_call.1} parent=5 // pred_fallthru
        _
      %p194 = scmp.lt.s32.totalorder %s21, 16
      // Predicated region
      $region21: #{tpu_custom_call.1} parent=5 // pred_check
        %p195 = pneg %p194
      $region22: #{tpu_custom_call.1} parent=5 // pred_check_branch
        %197 = sbr.rel (%p195) target = $region24
      $region23: #{tpu_custom_call.1} parent=5 // pred_region
        // Predicated region
        $region25: #{tpu_custom_call.1} parent=23 // pred_check
          %p198 = pneg %p55
        $region26: #{tpu_custom_call.1} parent=23 // pred_check_branch
          %200 = sbr.rel (%p198) target = $region28
        $region27: #{tpu_custom_call.1} parent=23 // pred_region
          %s201 = sand.u32 %s45, 1
          %s202 = scalar_lea.sflag [#allocation3], %s201
          %s203 = sand.u32 %s45, 1
          %s204 = smul.addr %s203, 256
          %s205 = scalar_lea.vmem [#allocation2], %s204
          %s206 = smul.u32 16, %s29
          %s208 = ssub.s32 4096, 4096
          %209 = vsyncadd %s202, %s208
          %s210 = smul.addr %s28, 64
          %s211 = sadd.s32 %s206, %s210
          %s212 = smul.addr %s211, 128
          %s213 = scalar_lea.hbm %s0, %s212
          %s214 = sshll.u32 %s205, 4
          %s215 = int_to_ptr.vmem [resolvable:$true] %s214
          %220 = dma.hbm_to_vmem [thread:$0]  %s213, 4096, %s215, %s202, 4096, 2048, 128
        $region28: #{tpu_custom_call.1} parent=23 // pred_fallthru
          _
      $region24: #{tpu_custom_call.1} parent=5 // pred_fallthru
        _
      %p221 = scmp.le.s32.totalorder 1, %s21
      %p222 = scmp.lt.s32.totalorder %s21, 17
      %p223 = pnand %p221, %p222
      %p224 = pneg %p223
      // Predicated region
      $region29: #{tpu_custom_call.1} parent=5 // pred_check
        _
      $region30: #{tpu_custom_call.1} parent=5 // pred_check_branch
        %226 = sbr.rel (%p223) target = $region32
      $region31: #{tpu_custom_call.1} parent=5 // pred_region
        %s227 = ssub.s32 %s21, 1
        %s228 = sand.u32 %s48, 1
        %s229 = scalar_lea.sflag [#allocation3], %s228
        %s230 = sand.u32 %s48, 1
        %s231 = smul.addr %s230, 256
        %s232 = scalar_lea.vmem [#allocation2], %s231
        // Predicated region
        $region33: #{tpu_custom_call.1} parent=31 // pred_check
          %p233 = pneg %p61
        $region34: #{tpu_custom_call.1} parent=31 // pred_check_branch
          %235 = sbr.rel (%p233) target = $region36
        $region35: #{tpu_custom_call.1} parent=31 // pred_region
          %236 = dma.done %s229, 4096
        $region36: #{tpu_custom_call.1} parent=31 // pred_fallthru
          _
        // Predicated region
        $region37: #{tpu_custom_call.1} parent=31 // pred_check
          %p237 = pneg %p82
        $region38: #{tpu_custom_call.1} parent=31 // pred_check_branch
          %239 = sbr.rel (%p237) target = $region40
        $region39: #{tpu_custom_call.1} parent=31 // pred_region
          %240 = dma.done [#allocation6], 128
        $region40: #{tpu_custom_call.1} parent=31 // pred_fallthru
          _
        // Predicated region
        $region41: #{tpu_custom_call.1} parent=31 // pred_check
          %p241 = pneg %p103
        $region42: #{tpu_custom_call.1} parent=31 // pred_check_branch
          %243 = sbr.rel (%p241) target = $region44
        $region43: #{tpu_custom_call.1} parent=31 // pred_region
          %244 = dma.done [#allocation6], 16
        $region44: #{tpu_custom_call.1} parent=31 // pred_fallthru
          _
        %s245 = sand.u32 %s48, 1
        %s246 = scalar_lea.sflag [#allocation3], %s245
        %s247 = sand.u32 %s48, 1
        %s248 = smul.addr %s247, 256
        %s249 = scalar_lea.vmem [#allocation2], %s248
        %p250 = pneg %p61
        %p251 = pneg %p58
        %p252 = pneg %p82
        %p253 = pneg %p79
        %p254 = pneg %p103
        %p255 = pneg %p100
        %p256 = pneg %p129
        %p257 = pneg %p126
        %s258 = sand.u32 %s116, 1
        %s259 = scalar_lea.sflag [#allocation4], %s258
        %s260 = sand.u32 %s116, 1
        %s261 = scalar_lea.vmem [#allocation8], %s260
        %p262 = pneg %p155
        %p263 = pneg %p152
        %s264 = sand.u32 %s142, 1
        %s265 = scalar_lea.sflag [#allocation10], %s264
        %s266 = sand.u32 %s142, 1
        %s267 = scalar_lea.vmem [#allocation9], %s266
        %s268 = smul.u32 16, %s31
        %v270 = vld [vmem:[%s232] sm:$0xff]
        %v271 = vld [vmem:[%s232 + $0x8] sm:$0xff]
        %v272 = vld [vmem:[%s232 + $0x10] sm:$0xff]
        %v273 = vld [vmem:[%s232 + $0x18] sm:$0xff]
        %v274 = vld [vmem:[%s232 + $0x20] sm:$0xff]
        %v275 = vld [vmem:[%s232 + $0x28] sm:$0xff]
        %v276 = vld [vmem:[%s232 + $0x30] sm:$0xff]
        %v277 = vld [vmem:[%s232 + $0x38] sm:$0xff]
        %v278 = vld [vmem:[%s232 + $0x40] sm:$0xff]
        %v279 = vld [vmem:[%s232 + $0x48] sm:$0xff]
        %v280 = vld [vmem:[%s232 + $0x50] sm:$0xff]
        %v281 = vld [vmem:[%s232 + $0x58] sm:$0xff]
        %v282 = vld [vmem:[%s232 + $0x60] sm:$0xff]
        %v283 = vld [vmem:[%s232 + $0x68] sm:$0xff]
        %v284 = vld [vmem:[%s232 + $0x70] sm:$0xff]
        %v285 = vld [vmem:[%s232 + $0x78] sm:$0xff]
        %v286 = vld [vmem:[%s232 + $0x80] sm:$0xff]
        %v287 = vld [vmem:[%s232 + $0x88] sm:$0xff]
        %v288 = vld [vmem:[%s232 + $0x90] sm:$0xff]
        %v289 = vld [vmem:[%s232 + $0x98] sm:$0xff]
        %v290 = vld [vmem:[%s232 + $0xa0] sm:$0xff]
        %v291 = vld [vmem:[%s232 + $0xa8] sm:$0xff]
        %v292 = vld [vmem:[%s232 + $0xb0] sm:$0xff]
        %v293 = vld [vmem:[%s232 + $0xb8] sm:$0xff]
        %v294 = vld [vmem:[%s232 + $0xc0] sm:$0xff]
        %v295 = vld [vmem:[%s232 + $0xc8] sm:$0xff]
        %v296 = vld [vmem:[%s232 + $0xd0] sm:$0xff]
        %v297 = vld [vmem:[%s232 + $0xd8] sm:$0xff]
        %v298 = vld [vmem:[%s232 + $0xe0] sm:$0xff]
        %v299 = vld [vmem:[%s232 + $0xe8] sm:$0xff]
        %v300 = vld [vmem:[%s232 + $0xf0] sm:$0xff]
        %v301 = vld [vmem:[%s232 + $0xf8] sm:$0xff]
        %v302 = vpack.c.bf16 %v286, %v270
        %v303 = vpack.c.bf16 %v287, %v271
        %v304 = vpack.c.bf16 %v288, %v272
        %v305 = vpack.c.bf16 %v289, %v273
        %v306 = vpack.c.bf16 %v290, %v274
        %v307 = vpack.c.bf16 %v291, %v275
        %v308 = vpack.c.bf16 %v292, %v276
        %v309 = vpack.c.bf16 %v293, %v277
        %v310 = vpack.c.bf16 %v294, %v278
        %v311 = vpack.c.bf16 %v295, %v279
        %v312 = vpack.c.bf16 %v296, %v280
        %v313 = vpack.c.bf16 %v297, %v281
        %v314 = vpack.c.bf16 %v298, %v282
        %v315 = vpack.c.bf16 %v299, %v283
        %v316 = vpack.c.bf16 %v300, %v284
        %v317 = vpack.c.bf16 %v301, %v285
        %v318 = vld [vmem:[#allocation5] sm:$0xf]
        %v319 = vld [vmem:[#allocation5 + $0x4] sm:$0xf]
        %v320 = vld [vmem:[#allocation7] sm:$0x1]
        %v322 = vlaneseq
        %v323 = vshrl.u32 %v322, 7
        %v324 = vsub.s32 0, %v323
        %v325 = vrot.slane %v320, %v324
        %327 = vxpose.xlu0.c.b16.start [1/8] %v302, 128
        %328 = vxpose.xlu0.c.b16.cont [2/8] 0, 128
        %329 = vxpose.xlu0.c.b16.cont [3/8] 0, 128
        %330 = vxpose.xlu0.c.b16.cont [4/8] 0, 128
        %331 = vxpose.xlu0.c.b16.cont [5/8] 0, 128
        %332 = vxpose.xlu0.c.b16.cont [6/8] 0, 128
        %333 = vxpose.xlu0.c.b16.cont [7/8] 0, 128
        %334 = vxpose.xlu0.c.b16.end [8/8] 0, 128
        %v335 = vpop.trf.xlu0
        %v336 = vpop.trf.xlu0
        %v337 = vpop.trf.xlu0
        %v338 = vpop.trf.xlu0
        %v339 = vpop.trf.xlu0
        %v340 = vpop.trf.xlu0
        %v341 = vpop.trf.xlu0
        %v342 = vpop.trf.xlu0
        %343 = vxpose.xlu0.c.b16.start [1/8] %v303, 128
        %344 = vxpose.xlu0.c.b16.cont [2/8] 0, 128
        %345 = vxpose.xlu0.c.b16.cont [3/8] 0, 128
        %346 = vxpose.xlu0.c.b16.cont [4/8] 0, 128
        %347 = vxpose.xlu0.c.b16.cont [5/8] 0, 128
        %348 = vxpose.xlu0.c.b16.cont [6/8] 0, 128
        %349 = vxpose.xlu0.c.b16.cont [7/8] 0, 128
        %350 = vxpose.xlu0.c.b16.end [8/8] 0, 128
        %v351 = vpop.trf.xlu0
        %v352 = vpop.trf.xlu0
        %v353 = vpop.trf.xlu0
        %v354 = vpop.trf.xlu0
        %v355 = vpop.trf.xlu0
        %v356 = vpop.trf.xlu0
        %v357 = vpop.trf.xlu0
        %v358 = vpop.trf.xlu0
        %359 = vxpose.xlu0.c.b16.start [1/8] %v304, 128
        %360 = vxpose.xlu0.c.b16.cont [2/8] 0, 128
        %361 = vxpose.xlu0.c.b16.cont [3/8] 0, 128
        %362 = vxpose.xlu0.c.b16.cont [4/8] 0, 128
        %363 = vxpose.xlu0.c.b16.cont [5/8] 0, 128
        %364 = vxpose.xlu0.c.b16.cont [6/8] 0, 128
        %365 = vxpose.xlu0.c.b16.cont [7/8] 0, 128
        %366 = vxpose.xlu0.c.b16.end [8/8] 0, 128
        %v367 = vpop.trf.xlu0
        %v368 = vpop.trf.xlu0
        %v369 = vpop.trf.xlu0
        %v370 = vpop.trf.xlu0
        %v371 = vpop.trf.xlu0
        %v372 = vpop.trf.xlu0
        %v373 = vpop.trf.xlu0
        %v374 = vpop.trf.xlu0
        %375 = vxpose.xlu0.c.b16.start [1/8] %v305, 128
        %376 = vxpose.xlu0.c.b16.cont [2/8] 0, 128
        %377 = vxpose.xlu0.c.b16.cont [3/8] 0, 128
        %378 = vxpose.xlu0.c.b16.cont [4/8] 0, 128
        %379 = vxpose.xlu0.c.b16.cont [5/8] 0, 128
        %380 = vxpose.xlu0.c.b16.cont [6/8] 0, 128
        %381 = vxpose.xlu0.c.b16.cont [7/8] 0, 128
        %382 = vxpose.xlu0.c.b16.end [8/8] 0, 128
        %v383 = vpop.trf.xlu0
        %v384 = vpop.trf.xlu0
        %v385 = vpop.trf.xlu0
        %v386 = vpop.trf.xlu0
        %v387 = vpop.trf.xlu0
        %v388 = vpop.trf.xlu0
        %v389 = vpop.trf.xlu0
        %v390 = vpop.trf.xlu0
        %391 = vxpose.xlu0.c.b16.start [1/8] %v306, 128
        %392 = vxpose.xlu0.c.b16.cont [2/8] 0, 128
        %393 = vxpose.xlu0.c.b16.cont [3/8] 0, 128
        %394 = vxpose.xlu0.c.b16.cont [4/8] 0, 128
        %395 = vxpose.xlu0.c.b16.cont [5/8] 0, 128
        %396 = vxpose.xlu0.c.b16.cont [6/8] 0, 128
        %397 = vxpose.xlu0.c.b16.cont [7/8] 0, 128
        %398 = vxpose.xlu0.c.b16.end [8/8] 0, 128
        %v399 = vpop.trf.xlu0
        %v400 = vpop.trf.xlu0
        %v401 = vpop.trf.xlu0
        %v402 = vpop.trf.xlu0
        %v403 = vpop.trf.xlu0
        %v404 = vpop.trf.xlu0
        %v405 = vpop.trf.xlu0
        %v406 = vpop.trf.xlu0
        %407 = vxpose.xlu0.c.b16.start [1/8] %v307, 128
        %408 = vxpose.xlu0.c.b16.cont [2/8] 0, 128
        %409 = vxpose.xlu0.c.b16.cont [3/8] 0, 128
        %410 = vxpose.xlu0.c.b16.cont [4/8] 0, 128
        %411 = vxpose.xlu0.c.b16.cont [5/8] 0, 128
        %412 = vxpose.xlu0.c.b16.cont [6/8] 0, 128
        %413 = vxpose.xlu0.c.b16.cont [7/8] 0, 128
        %414 = vxpose.xlu0.c.b16.end [8/8] 0, 128
        %v415 = vpop.trf.xlu0
        %v416 = vpop.trf.xlu0
        %v417 = vpop.trf.xlu0
        %v418 = vpop.trf.xlu0
        %v419 = vpop.trf.xlu0
        %v420 = vpop.trf.xlu0
        %v421 = vpop.trf.xlu0
        %v422 = vpop.trf.xlu0
        %423 = vxpose.xlu0.c.b16.start [1/8] %v308, 128
        %424 = vxpose.xlu0.c.b16.cont [2/8] 0, 128
        %425 = vxpose.xlu0.c.b16.cont [3/8] 0, 128
        %426 = vxpose.xlu0.c.b16.cont [4/8] 0, 128
        %427 = vxpose.xlu0.c.b16.cont [5/8] 0, 128
        %428 = vxpose.xlu0.c.b16.cont [6/8] 0, 128
        %429 = vxpose.xlu0.c.b16.cont [7/8] 0, 128
        %430 = vxpose.xlu0.c.b16.end [8/8] 0, 128
        %v431 = vpop.trf.xlu0
        %v432 = vpop.trf.xlu0
        %v433 = vpop.trf.xlu0
        %v434 = vpop.trf.xlu0
        %v435 = vpop.trf.xlu0
        %v436 = vpop.trf.xlu0
        %v437 = vpop.trf.xlu0
        %v438 = vpop.trf.xlu0
        %439 = vxpose.xlu0.c.b16.start [1/8] %v309, 128
        %440 = vxpose.xlu0.c.b16.cont [2/8] 0, 128
        %441 = vxpose.xlu0.c.b16.cont [3/8] 0, 128
        %442 = vxpose.xlu0.c.b16.cont [4/8] 0, 128
        %443 = vxpose.xlu0.c.b16.cont [5/8] 0, 128
        %444 = vxpose.xlu0.c.b16.cont [6/8] 0, 128
        %445 = vxpose.xlu0.c.b16.cont [7/8] 0, 128
        %446 = vxpose.xlu0.c.b16.end [8/8] 0, 128
        %v447 = vpop.trf.xlu0
        %v448 = vpop.trf.xlu0
        %v449 = vpop.trf.xlu0
        %v450 = vpop.trf.xlu0
        %v451 = vpop.trf.xlu0
        %v452 = vpop.trf.xlu0
        %v453 = vpop.trf.xlu0
        %v454 = vpop.trf.xlu0
        %455 = vxpose.xlu0.c.b16.start [1/8] %v310, 128
        %456 = vxpose.xlu0.c.b16.cont [2/8] 0, 128
        %457 = vxpose.xlu0.c.b16.cont [3/8] 0, 128
        %458 = vxpose.xlu0.c.b16.cont [4/8] 0, 128
        %459 = vxpose.xlu0.c.b16.cont [5/8] 0, 128
        %460 = vxpose.xlu0.c.b16.cont [6/8] 0, 128
        %461 = vxpose.xlu0.c.b16.cont [7/8] 0, 128
        %462 = vxpose.xlu0.c.b16.end [8/8] 0, 128
        %v463 = vpop.trf.xlu0
        %v464 = vpop.trf.xlu0
        %v465 = vpop.trf.xlu0
        %v466 = vpop.trf.xlu0
        %v467 = vpop.trf.xlu0
        %v468 = vpop.trf.xlu0
        %v469 = vpop.trf.xlu0
        %v470 = vpop.trf.xlu0
        %471 = vxpose.xlu0.c.b16.start [1/8] %v311, 128
        %472 = vxpose.xlu0.c.b16.cont [2/8] 0, 128
        %473 = vxpose.xlu0.c.b16.cont [3/8] 0, 128
        %474 = vxpose.xlu0.c.b16.cont [4/8] 0, 128
        %475 = vxpose.xlu0.c.b16.cont [5/8] 0, 128
        %476 = vxpose.xlu0.c.b16.cont [6/8] 0, 128
        %477 = vxpose.xlu0.c.b16.cont [7/8] 0, 128
        %478 = vxpose.xlu0.c.b16.end [8/8] 0, 128
        %v479 = vpop.trf.xlu0
        %v480 = vpop.trf.xlu0
        %v481 = vpop.trf.xlu0
        %v482 = vpop.trf.xlu0
        %v483 = vpop.trf.xlu0
        %v484 = vpop.trf.xlu0
        %v485 = vpop.trf.xlu0
        %v486 = vpop.trf.xlu0
        %487 = vxpose.xlu0.c.b16.start [1/8] %v312, 128
        %488 = vxpose.xlu0.c.b16.cont [2/8] 0, 128
        %489 = vxpose.xlu0.c.b16.cont [3/8] 0, 128
        %490 = vxpose.xlu0.c.b16.cont [4/8] 0, 128
        %491 = vxpose.xlu0.c.b16.cont [5/8] 0, 128
        %492 = vxpose.xlu0.c.b16.cont [6/8] 0, 128
        %493 = vxpose.xlu0.c.b16.cont [7/8] 0, 128
        %494 = vxpose.xlu0.c.b16.end [8/8] 0, 128
        %v495 = vpop.trf.xlu0
        %v496 = vpop.trf.xlu0
        %v497 = vpop.trf.xlu0
        %v498 = vpop.trf.xlu0
        %v499 = vpop.trf.xlu0
        %v500 = vpop.trf.xlu0
        %v501 = vpop.trf.xlu0
        %v502 = vpop.trf.xlu0
        %503 = vxpose.xlu0.c.b16.start [1/8] %v313, 128
        %504 = vxpose.xlu0.c.b16.cont [2/8] 0, 128
        %505 = vxpose.xlu0.c.b16.cont [3/8] 0, 128
        %506 = vxpose.xlu0.c.b16.cont [4/8] 0, 128
        %507 = vxpose.xlu0.c.b16.cont [5/8] 0, 128
        %508 = vxpose.xlu0.c.b16.cont [6/8] 0, 128
        %509 = vxpose.xlu0.c.b16.cont [7/8] 0, 128
        %510 = vxpose.xlu0.c.b16.end [8/8] 0, 128
        %v511 = vpop.trf.xlu0
        %v512 = vpop.trf.xlu0
        %v513 = vpop.trf.xlu0
        %v514 = vpop.trf.xlu0
        %v515 = vpop.trf.xlu0
        %v516 = vpop.trf.xlu0
        %v517 = vpop.trf.xlu0
        %v518 = vpop.trf.xlu0
        %519 = vxpose.xlu0.c.b16.start [1/8] %v314, 128
        %520 = vxpose.xlu0.c.b16.cont [2/8] 0, 128
        %521 = vxpose.xlu0.c.b16.cont [3/8] 0, 128
        %522 = vxpose.xlu0.c.b16.cont [4/8] 0, 128
        %523 = vxpose.xlu0.c.b16.cont [5/8] 0, 128
        %524 = vxpose.xlu0.c.b16.cont [6/8] 0, 128
        %525 = vxpose.xlu0.c.b16.cont [7/8] 0, 128
        %526 = vxpose.xlu0.c.b16.end [8/8] 0, 128
        %v527 = vpop.trf.xlu0
        %v528 = vpop.trf.xlu0
        %v529 = vpop.trf.xlu0
        %v530 = vpop.trf.xlu0
        %v531 = vpop.trf.xlu0
        %v532 = vpop.trf.xlu0
        %v533 = vpop.trf.xlu0
        %v534 = vpop.trf.xlu0
        %535 = vxpose.xlu0.c.b16.start [1/8] %v315, 128
        %536 = vxpose.xlu0.c.b16.cont [2/8] 0, 128
        %537 = vxpose.xlu0.c.b16.cont [3/8] 0, 128
        %538 = vxpose.xlu0.c.b16.cont [4/8] 0, 128
        %539 = vxpose.xlu0.c.b16.cont [5/8] 0, 128
        %540 = vxpose.xlu0.c.b16.cont [6/8] 0, 128
        %541 = vxpose.xlu0.c.b16.cont [7/8] 0, 128
        %542 = vxpose.xlu0.c.b16.end [8/8] 0, 128
        %v543 = vpop.trf.xlu0
        %v544 = vpop.trf.xlu0
        %v545 = vpop.trf.xlu0
        %v546 = vpop.trf.xlu0
        %v547 = vpop.trf.xlu0
        %v548 = vpop.trf.xlu0
        %v549 = vpop.trf.xlu0
        %v550 = vpop.trf.xlu0
        %551 = vxpose.xlu0.c.b16.start [1/8] %v316, 128
        %552 = vxpose.xlu0.c.b16.cont [2/8] 0, 128
        %553 = vxpose.xlu0.c.b16.cont [3/8] 0, 128
        %554 = vxpose.xlu0.c.b16.cont [4/8] 0, 128
        %555 = vxpose.xlu0.c.b16.cont [5/8] 0, 128
        %556 = vxpose.xlu0.c.b16.cont [6/8] 0, 128
        %557 = vxpose.xlu0.c.b16.cont [7/8] 0, 128
        %558 = vxpose.xlu0.c.b16.end [8/8] 0, 128
        %v559 = vpop.trf.xlu0
        %v560 = vpop.trf.xlu0
        %v561 = vpop.trf.xlu0
        %v562 = vpop.trf.xlu0
        %v563 = vpop.trf.xlu0
        %v564 = vpop.trf.xlu0
        %v565 = vpop.trf.xlu0
        %v566 = vpop.trf.xlu0
        %567 = vxpose.xlu0.c.b16.start [1/8] %v317, 128
        %568 = vxpose.xlu0.c.b16.cont [2/8] 0, 128
        %569 = vxpose.xlu0.c.b16.cont [3/8] 0, 128
        %570 = vxpose.xlu0.c.b16.cont [4/8] 0, 128
        %571 = vxpose.xlu0.c.b16.cont [5/8] 0, 128
        %572 = vxpose.xlu0.c.b16.cont [6/8] 0, 128
        %573 = vxpose.xlu0.c.b16.cont [7/8] 0, 128
        %574 = vxpose.xlu0.c.b16.end [8/8] 0, 128
        %v575 = vpop.trf.xlu0
        %v576 = vpop.trf.xlu0
        %v577 = vpop.trf.xlu0
        %v578 = vpop.trf.xlu0
        %v579 = vpop.trf.xlu0
        %v580 = vpop.trf.xlu0
        %v581 = vpop.trf.xlu0
        %v582 = vpop.trf.xlu0
        %v585 = vunpack.c.l.b16 %v318
        %v586 = vunpack.c.l.b16 %v319
        %v587 = vpack.c.b16 %v586, %v585
        %vm589 = vcmask 130048
        %v591 = vsel %vm589, %v335, 0
        %v594 = vsel %vm589, %v336, 0
        %v597 = vsel %vm589, %v337, 0
        %v600 = vsel %vm589, %v338, 0
        %v603 = vsel %vm589, %v339, 0
        %v606 = vsel %vm589, %v340, 0
        %v609 = vsel %vm589, %v341, 0
        %v612 = vsel %vm589, %v342, 0
        %v615 = vsel %vm589, %v351, 0
        %v618 = vsel %vm589, %v352, 0
        %v621 = vsel %vm589, %v353, 0
        %v624 = vsel %vm589, %v354, 0
        %v627 = vsel %vm589, %v355, 0
        %v630 = vsel %vm589, %v356, 0
        %v633 = vsel %vm589, %v357, 0
        %v636 = vsel %vm589, %v358, 0
        %v639 = vsel %vm589, %v367, 0
        %v642 = vsel %vm589, %v368, 0
        %v645 = vsel %vm589, %v369, 0
        %v648 = vsel %vm589, %v370, 0
        %v651 = vsel %vm589, %v371, 0
        %v654 = vsel %vm589, %v372, 0
        %v657 = vsel %vm589, %v373, 0
        %v660 = vsel %vm589, %v374, 0
        %v663 = vsel %vm589, %v383, 0
        %v666 = vsel %vm589, %v384, 0
        %v669 = vsel %vm589, %v385, 0
        %v672 = vsel %vm589, %v386, 0
        %v675 = vsel %vm589, %v387, 0
        %v678 = vsel %vm589, %v388, 0
        %v681 = vsel %vm589, %v389, 0
        %v684 = vsel %vm589, %v390, 0
        %v687 = vsel %vm589, %v399, 0
        %v690 = vsel %vm589, %v400, 0
        %v693 = vsel %vm589, %v401, 0
        %v696 = vsel %vm589, %v402, 0
        %v699 = vsel %vm589, %v403, 0
        %v702 = vsel %vm589, %v404, 0
        %v705 = vsel %vm589, %v405, 0
        %v708 = vsel %vm589, %v406, 0
        %v711 = vsel %vm589, %v415, 0
        %v714 = vsel %vm589, %v416, 0
        %v717 = vsel %vm589, %v417, 0
        %v720 = vsel %vm589, %v418, 0
        %v723 = vsel %vm589, %v419, 0
        %v726 = vsel %vm589, %v420, 0
        %v729 = vsel %vm589, %v421, 0
        %v732 = vsel %vm589, %v422, 0
        %v735 = vsel %vm589, %v431, 0
        %v738 = vsel %vm589, %v432, 0
        %v741 = vsel %vm589, %v433, 0
        %v744 = vsel %vm589, %v434, 0
        %v747 = vsel %vm589, %v435, 0
        %v750 = vsel %vm589, %v436, 0
        %v753 = vsel %vm589, %v437, 0
        %v756 = vsel %vm589, %v438, 0
        %v759 = vsel %vm589, %v447, 0
        %v762 = vsel %vm589, %v448, 0
        %v765 = vsel %vm589, %v449, 0
        %v768 = vsel %vm589, %v450, 0
        %v771 = vsel %vm589, %v451, 0
        %v774 = vsel %vm589, %v452, 0
        %v777 = vsel %vm589, %v453, 0
        %v780 = vsel %vm589, %v454, 0
        %v783 = vsel %vm589, %v463, 0
        %v786 = vsel %vm589, %v464, 0
        %v789 = vsel %vm589, %v465, 0
        %v792 = vsel %vm589, %v466, 0
        %v795 = vsel %vm589, %v467, 0
        %v798 = vsel %vm589, %v468, 0
        %v801 = vsel %vm589, %v469, 0
        %v804 = vsel %vm589, %v470, 0
        %v807 = vsel %vm589, %v479, 0
        %v810 = vsel %vm589, %v480, 0
        %v813 = vsel %vm589, %v481, 0
        %v816 = vsel %vm589, %v482, 0
        %v819 = vsel %vm589, %v483, 0
        %v822 = vsel %vm589, %v484, 0
        %v825 = vsel %vm589, %v485, 0
        %v828 = vsel %vm589, %v486, 0
        %v831 = vsel %vm589, %v495, 0
        %v834 = vsel %vm589, %v496, 0
        %v837 = vsel %vm589, %v497, 0
        %v840 = vsel %vm589, %v498, 0
        %v843 = vsel %vm589, %v499, 0
        %v846 = vsel %vm589, %v500, 0
        %v849 = vsel %vm589, %v501, 0
        %v852 = vsel %vm589, %v502, 0
        %v855 = vsel %vm589, %v511, 0
        %v858 = vsel %vm589, %v512, 0
        %v861 = vsel %vm589, %v513, 0
        %v864 = vsel %vm589, %v514, 0
        %v867 = vsel %vm589, %v515, 0
        %v870 = vsel %vm589, %v516, 0
        %v873 = vsel %vm589, %v517, 0
        %v876 = vsel %vm589, %v518, 0
        %v879 = vsel %vm589, %v527, 0
        %v882 = vsel %vm589, %v528, 0
        %v885 = vsel %vm589, %v529, 0
        %v888 = vsel %vm589, %v530, 0
        %v891 = vsel %vm589, %v531, 0
        %v894 = vsel %vm589, %v532, 0
        %v897 = vsel %vm589, %v533, 0
        %v900 = vsel %vm589, %v534, 0
        %v903 = vsel %vm589, %v543, 0
        %v906 = vsel %vm589, %v544, 0
        %v909 = vsel %vm589, %v545, 0
        %v912 = vsel %vm589, %v546, 0
        %v915 = vsel %vm589, %v547, 0
        %v918 = vsel %vm589, %v548, 0
        %v921 = vsel %vm589, %v549, 0
        %v924 = vsel %vm589, %v550, 0
        %v927 = vsel %vm589, %v559, 0
        %v930 = vsel %vm589, %v560, 0
        %v933 = vsel %vm589, %v561, 0
        %v936 = vsel %vm589, %v562, 0
        %v939 = vsel %vm589, %v563, 0
        %v942 = vsel %vm589, %v564, 0
        %v945 = vsel %vm589, %v565, 0
        %v948 = vsel %vm589, %v566, 0
        %v951 = vsel %vm589, %v575, 0
        %v954 = vsel %vm589, %v576, 0
        %v957 = vsel %vm589, %v577, 0
        %v960 = vsel %vm589, %v578, 0
        %v963 = vsel %vm589, %v579, 0
        %v966 = vsel %vm589, %v580, 0
        %v969 = vsel %vm589, %v581, 0
        %v972 = vsel %vm589, %v582, 0
        %974 = vmatprep.subr.bf16.mxu0 0
        %975 = vmatpush1.bf16.msra.mxu0 %v587
        %976 = vmatprep.subr.bf16.mxu0 0
        %977 = vmatpush1.bf16.msra.mxu0 0
        %978 = vmatprep.subr.bf16.mxu0 0
        %979 = vmatpush1.bf16.msra.mxu0 0
        %980 = vmatprep.subr.bf16.mxu0 0
        %981 = vmatpush1.bf16.msra.mxu0 0
        %982 = vmatprep.subr.bf16.mxu0 0
        %983 = vmatpush1.bf16.msra.mxu0 0
        %984 = vmatprep.subr.bf16.mxu0 0
        %985 = vmatpush1.bf16.msra.mxu0 0
        %986 = vmatprep.subr.bf16.mxu0 0
        %987 = vmatpush1.bf16.msra.mxu0 0
        %988 = vmatprep.subr.bf16.mxu0 0
        %989 = vmatpush1.bf16.msra.mxu0 0
        %990 = vmatprep.subr.bf16.mxu0 0
        %991 = vmatpush1.bf16.msra.mxu0 0
        %992 = vmatprep.subr.bf16.mxu0 0
        %993 = vmatpush1.bf16.msra.mxu0 0
        %994 = vmatprep.subr.bf16.mxu0 0
        %995 = vmatpush1.bf16.msra.mxu0 0
        %996 = vmatprep.subr.bf16.mxu0 0
        %997 = vmatpush1.bf16.msra.mxu0 0
        %998 = vmatprep.subr.bf16.mxu0 0
        %999 = vmatpush1.bf16.msra.mxu0 0
        %1000 = vmatprep.subr.bf16.mxu0 0
        %1001 = vmatpush1.bf16.msra.mxu0 0
        %1002 = vmatprep.subr.bf16.mxu0 0
        %1003 = vmatpush1.bf16.msra.mxu0 0
        %1004 = vmatprep.subr.bf16.mxu0 0
        %1005 = vmatpush1.bf16.msra.mxu0 0
        %1006 = vmatprep.mubr.bf16.mxu0 0
        %1007 = vmatmul.mubr.bf16.gmra.mrb[0].mxu0 %v591
        %v1008 = vpop.f32.mrb[0].mxu0
        %v1009 = vadd.f32 %v325, %v1008
        %v1010 = vpop.f32.mrb[0].mxu0
        %v1011 = vpop.f32.mrb[0].mxu0
        %v1012 = vadd.f32 %v325, %v1011
        %v1013 = vpop.f32.mrb[0].mxu0
        %1014 = vmatprep.mubr.bf16.mxu0 0
        %1015 = vmatmul.mubr.bf16.gmra.mrb[0].mxu0 %v594
        %v1016 = vpop.f32.mrb[0].mxu0
        %v1017 = vadd.f32 %v325, %v1016
        %v1018 = vpop.f32.mrb[0].mxu0
        %v1019 = vpop.f32.mrb[0].mxu0
        %v1020 = vadd.f32 %v325, %v1019
        %v1021 = vpop.f32.mrb[0].mxu0
        %1022 = vmatprep.mubr.bf16.mxu0 0
        %1023 = vmatmul.mubr.bf16.gmra.mrb[0].mxu0 %v597
        %v1024 = vpop.f32.mrb[0].mxu0
        %v1025 = vadd.f32 %v325, %v1024
        %v1026 = vpop.f32.mrb[0].mxu0
        %v1027 = vpop.f32.mrb[0].mxu0
        %v1028 = vadd.f32 %v325, %v1027
        %v1029 = vpop.f32.mrb[0].mxu0
        %1030 = vmatprep.mubr.bf16.mxu0 0
        %1031 = vmatmul.mubr.bf16.gmra.mrb[0].mxu0 %v600
        %v1032 = vpop.f32.mrb[0].mxu0
        %v1033 = vadd.f32 %v325, %v1032
        %v1034 = vpop.f32.mrb[0].mxu0
        %v1035 = vpop.f32.mrb[0].mxu0
        %v1036 = vadd.f32 %v325, %v1035
        %v1037 = vpop.f32.mrb[0].mxu0
        %1038 = vmatprep.mubr.bf16.mxu0 0
        %1039 = vmatmul.mubr.bf16.gmra.mrb[0].mxu0 %v603
        %v1040 = vpop.f32.mrb[0].mxu0
        %v1041 = vadd.f32 %v325, %v1040
        %v1042 = vpop.f32.mrb[0].mxu0
        %v1043 = vpop.f32.mrb[0].mxu0
        %v1044 = vadd.f32 %v325, %v1043
        %v1045 = vpop.f32.mrb[0].mxu0
        %1046 = vmatprep.mubr.bf16.mxu0 0
        %1047 = vmatmul.mubr.bf16.gmra.mrb[0].mxu0 %v606
        %v1048 = vpop.f32.mrb[0].mxu0
        %v1049 = vadd.f32 %v325, %v1048
        %v1050 = vpop.f32.mrb[0].mxu0
        %v1051 = vpop.f32.mrb[0].mxu0
        %v1052 = vadd.f32 %v325, %v1051
        %v1053 = vpop.f32.mrb[0].mxu0
        %1054 = vmatprep.mubr.bf16.mxu0 0
        %1055 = vmatmul.mubr.bf16.gmra.mrb[0].mxu0 %v609
        %v1056 = vpop.f32.mrb[0].mxu0
        %v1057 = vadd.f32 %v325, %v1056
        %v1058 = vpop.f32.mrb[0].mxu0
        %v1059 = vpop.f32.mrb[0].mxu0
        %v1060 = vadd.f32 %v325, %v1059
        %v1061 = vpop.f32.mrb[0].mxu0
        %1062 = vmatprep.mubr.bf16.mxu0 0
        %1063 = vmatmul.mubr.bf16.gmra.mrb[0].mxu0 %v612
        %v1064 = vpop.f32.mrb[0].mxu0
        %v1065 = vadd.f32 %v325, %v1064
        %v1066 = vpop.f32.mrb[0].mxu0
        %v1067 = vpop.f32.mrb[0].mxu0
        %v1068 = vadd.f32 %v325, %v1067
        %v1069 = vpop.f32.mrb[0].mxu0
        %1070 = vmatprep.mubr.bf16.mxu0 0
        %1071 = vmatmul.mubr.bf16.gmra.mrb[0].mxu0 %v615
        %v1072 = vpop.f32.mrb[0].mxu0
        %v1073 = vadd.f32 %v325, %v1072
        %v1074 = vpop.f32.mrb[0].mxu0
        %v1075 = vpop.f32.mrb[0].mxu0
        %v1076 = vadd.f32 %v325, %v1075
        %v1077 = vpop.f32.mrb[0].mxu0
        %1078 = vmatprep.mubr.bf16.mxu0 0
        %1079 = vmatmul.mubr.bf16.gmra.mrb[0].mxu0 %v618
        %v1080 = vpop.f32.mrb[0].mxu0
        %v1081 = vadd.f32 %v325, %v1080
        %v1082 = vpop.f32.mrb[0].mxu0
        %v1083 = vpop.f32.mrb[0].mxu0
        %v1084 = vadd.f32 %v325, %v1083
        %v1085 = vpop.f32.mrb[0].mxu0
        %1086 = vmatprep.mubr.bf16.mxu0 0
        %1087 = vmatmul.mubr.bf16.gmra.mrb[0].mxu0 %v621
        %v1088 = vpop.f32.mrb[0].mxu0
        %v1089 = vadd.f32 %v325, %v1088
        %v1090 = vpop.f32.mrb[0].mxu0
        %v1091 = vpop.f32.mrb[0].mxu0
        %v1092 = vadd.f32 %v325, %v1091
        %v1093 = vpop.f32.mrb[0].mxu0
        %1094 = vmatprep.mubr.bf16.mxu0 0
        %1095 = vmatmul.mubr.bf16.gmra.mrb[0].mxu0 %v624
        %v1096 = vpop.f32.mrb[0].mxu0
        %v1097 = vadd.f32 %v325, %v1096
        %v1098 = vpop.f32.mrb[0].mxu0
        %v1099 = vpop.f32.mrb[0].mxu0
        %v1100 = vadd.f32 %v325, %v1099
        %v1101 = vpop.f32.mrb[0].mxu0
        %1102 = vmatprep.mubr.bf16.mxu0 0
        %1103 = vmatmul.mubr.bf16.gmra.mrb[0].mxu0 %v627
        %v1104 = vpop.f32.mrb[0].mxu0
        %v1105 = vadd.f32 %v325, %v1104
        %v1106 = vpop.f32.mrb[0].mxu0
        %v1107 = vpop.f32.mrb[0].mxu0
        %v1108 = vadd.f32 %v325, %v1107
        %v1109 = vpop.f32.mrb[0].mxu0
        %1110 = vmatprep.mubr.bf16.mxu0 0
        %1111 = vmatmul.mubr.bf16.gmra.mrb[0].mxu0 %v630
        %v1112 = vpop.f32.mrb[0].mxu0
        %v1113 = vadd.f32 %v325, %v1112
        %v1114 = vpop.f32.mrb[0].mxu0
        %v1115 = vpop.f32.mrb[0].mxu0
        %v1116 = vadd.f32 %v325, %v1115
        %v1117 = vpop.f32.mrb[0].mxu0
        %1118 = vmatprep.mubr.bf16.mxu0 0
        %1119 = vmatmul.mubr.bf16.gmra.mrb[0].mxu0 %v633
        %v1120 = vpop.f32.mrb[0].mxu0
        %v1121 = vadd.f32 %v325, %v1120
        %v1122 = vpop.f32.mrb[0].mxu0
        %v1123 = vpop.f32.mrb[0].mxu0
        %v1124 = vadd.f32 %v325, %v1123
        %v1125 = vpop.f32.mrb[0].mxu0
        %1126 = vmatprep.mubr.bf16.mxu0 0
        %1127 = vmatmul.mubr.bf16.gmra.mrb[0].mxu0 %v636
        %v1128 = vpop.f32.mrb[0].mxu0
        %v1129 = vadd.f32 %v325, %v1128
        %v1130 = vpop.f32.mrb[0].mxu0
        %v1131 = vpop.f32.mrb[0].mxu0
        %v1132 = vadd.f32 %v325, %v1131
        %v1133 = vpop.f32.mrb[0].mxu0
        %1134 = vmatprep.mubr.bf16.mxu0 0
        %1135 = vmatmul.mubr.bf16.gmra.mrb[0].mxu0 %v639
        %v1136 = vpop.f32.mrb[0].mxu0
        %v1137 = vadd.f32 %v325, %v1136
        %v1138 = vpop.f32.mrb[0].mxu0
        %v1139 = vpop.f32.mrb[0].mxu0
        %v1140 = vadd.f32 %v325, %v1139
        %v1141 = vpop.f32.mrb[0].mxu0
        %1142 = vmatprep.mubr.bf16.mxu0 0
        %1143 = vmatmul.mubr.bf16.gmra.mrb[0].mxu0 %v642
        %v1144 = vpop.f32.mrb[0].mxu0
        %v1145 = vadd.f32 %v325, %v1144
        %v1146 = vpop.f32.mrb[0].mxu0
        %v1147 = vpop.f32.mrb[0].mxu0
        %v1148 = vadd.f32 %v325, %v1147
        %v1149 = vpop.f32.mrb[0].mxu0
        %1150 = vmatprep.mubr.bf16.mxu0 0
        %1151 = vmatmul.mubr.bf16.gmra.mrb[0].mxu0 %v645
        %v1152 = vpop.f32.mrb[0].mxu0
        %v1153 = vadd.f32 %v325, %v1152
        %v1154 = vpop.f32.mrb[0].mxu0
        %v1155 = vpop.f32.mrb[0].mxu0
        %v1156 = vadd.f32 %v325, %v1155
        %v1157 = vpop.f32.mrb[0].mxu0
        %1158 = vmatprep.mubr.bf16.mxu0 0
        %1159 = vmatmul.mubr.bf16.gmra.mrb[0].mxu0 %v648
        %v1160 = vpop.f32.mrb[0].mxu0
        %v1161 = vadd.f32 %v325, %v1160
        %v1162 = vpop.f32.mrb[0].mxu0
        %v1163 = vpop.f32.mrb[0].mxu0
        %v1164 = vadd.f32 %v325, %v1163
        %v1165 = vpop.f32.mrb[0].mxu0
        %1166 = vmatprep.mubr.bf16.mxu0 0
        %1167 = vmatmul.mubr.bf16.gmra.mrb[0].mxu0 %v651
        %v1168 = vpop.f32.mrb[0].mxu0
        %v1169 = vadd.f32 %v325, %v1168
        %v1170 = vpop.f32.mrb[0].mxu0
        %v1171 = vpop.f32.mrb[0].mxu0
        %v1172 = vadd.f32 %v325, %v1171
        %v1173 = vpop.f32.mrb[0].mxu0
        %1174 = vmatprep.mubr.bf16.mxu0 0
        %1175 = vmatmul.mubr.bf16.gmra.mrb[0].mxu0 %v654
        %v1176 = vpop.f32.mrb[0].mxu0
        %v1177 = vadd.f32 %v325, %v1176
        %v1178 = vpop.f32.mrb[0].mxu0
        %v1179 = vpop.f32.mrb[0].mxu0
        %v1180 = vadd.f32 %v325, %v1179
        %v1181 = vpop.f32.mrb[0].mxu0
        %1182 = vmatprep.mubr.bf16.mxu0 0
        %1183 = vmatmul.mubr.bf16.gmra.mrb[0].mxu0 %v657
        %v1184 = vpop.f32.mrb[0].mxu0
        %v1185 = vadd.f32 %v325, %v1184
        %v1186 = vpop.f32.mrb[0].mxu0
        %v1187 = vpop.f32.mrb[0].mxu0
        %v1188 = vadd.f32 %v325, %v1187
        %v1189 = vpop.f32.mrb[0].mxu0
        %1190 = vmatprep.mubr.bf16.mxu0 0
        %1191 = vmatmul.mubr.bf16.gmra.mrb[0].mxu0 %v660
        %v1192 = vpop.f32.mrb[0].mxu0
        %v1193 = vadd.f32 %v325, %v1192
        %v1194 = vpop.f32.mrb[0].mxu0
        %v1195 = vpop.f32.mrb[0].mxu0
        %v1196 = vadd.f32 %v325, %v1195
        %v1197 = vpop.f32.mrb[0].mxu0
        %1198 = vmatprep.mubr.bf16.mxu0 0
        %1199 = vmatmul.mubr.bf16.gmra.mrb[0].mxu0 %v663
        %v1200 = vpop.f32.mrb[0].mxu0
        %v1201 = vadd.f32 %v325, %v1200
        %v1202 = vpop.f32.mrb[0].mxu0
        %v1203 = vpop.f32.mrb[0].mxu0
        %v1204 = vadd.f32 %v325, %v1203
        %v1205 = vpop.f32.mrb[0].mxu0
        %1206 = vmatprep.mubr.bf16.mxu0 0
        %1207 = vmatmul.mubr.bf16.gmra.mrb[0].mxu0 %v666
        %v1208 = vpop.f32.mrb[0].mxu0
        %v1209 = vadd.f32 %v325, %v1208
        %v1210 = vpop.f32.mrb[0].mxu0
        %v1211 = vpop.f32.mrb[0].mxu0
        %v1212 = vadd.f32 %v325, %v1211
        %v1213 = vpop.f32.mrb[0].mxu0
        %1214 = vmatprep.mubr.bf16.mxu0 0
        %1215 = vmatmul.mubr.bf16.gmra.mrb[0].mxu0 %v669
        %v1216 = vpop.f32.mrb[0].mxu0
        %v1217 = vadd.f32 %v325, %v1216
        %v1218 = vpop.f32.mrb[0].mxu0
        %v1219 = vpop.f32.mrb[0].mxu0
        %v1220 = vadd.f32 %v325, %v1219
        %v1221 = vpop.f32.mrb[0].mxu0
        %1222 = vmatprep.mubr.bf16.mxu0 0
        %1223 = vmatmul.mubr.bf16.gmra.mrb[0].mxu0 %v672
        %v1224 = vpop.f32.mrb[0].mxu0
        %v1225 = vadd.f32 %v325, %v1224
        %v1226 = vpop.f32.mrb[0].mxu0
        %v1227 = vpop.f32.mrb[0].mxu0
        %v1228 = vadd.f32 %v325, %v1227
        %v1229 = vpop.f32.mrb[0].mxu0
        %1230 = vmatprep.mubr.bf16.mxu0 0
        %1231 = vmatmul.mubr.bf16.gmra.mrb[0].mxu0 %v675
        %v1232 = vpop.f32.mrb[0].mxu0
        %v1233 = vadd.f32 %v325, %v1232
        %v1234 = vpop.f32.mrb[0].mxu0
        %v1235 = vpop.f32.mrb[0].mxu0
        %v1236 = vadd.f32 %v325, %v1235
        %v1237 = vpop.f32.mrb[0].mxu0
        %1238 = vmatprep.mubr.bf16.mxu0 0
        %1239 = vmatmul.mubr.bf16.gmra.mrb[0].mxu0 %v678
        %v1240 = vpop.f32.mrb[0].mxu0
        %v1241 = vadd.f32 %v325, %v1240
        %v1242 = vpop.f32.mrb[0].mxu0
        %v1243 = vpop.f32.mrb[0].mxu0
        %v1244 = vadd.f32 %v325, %v1243
        %v1245 = vpop.f32.mrb[0].mxu0
        %1246 = vmatprep.mubr.bf16.mxu0 0
        %1247 = vmatmul.mubr.bf16.gmra.mrb[0].mxu0 %v681
        %v1248 = vpop.f32.mrb[0].mxu0
        %v1249 = vadd.f32 %v325, %v1248
        %v1250 = vpop.f32.mrb[0].mxu0
        %v1251 = vpop.f32.mrb[0].mxu0
        %v1252 = vadd.f32 %v325, %v1251
        %v1253 = vpop.f32.mrb[0].mxu0
        %1254 = vmatprep.mubr.bf16.mxu0 0
        %1255 = vmatmul.mubr.bf16.gmra.mrb[0].mxu0 %v684
        %v1256 = vpop.f32.mrb[0].mxu0
        %v1257 = vadd.f32 %v325, %v1256
        %v1258 = vpop.f32.mrb[0].mxu0
        %v1259 = vpop.f32.mrb[0].mxu0
        %v1260 = vadd.f32 %v325, %v1259
        %v1261 = vpop.f32.mrb[0].mxu0
        %1262 = vmatprep.mubr.bf16.mxu0 0
        %1263 = vmatmul.mubr.bf16.gmra.mrb[0].mxu0 %v687
        %v1264 = vpop.f32.mrb[0].mxu0
        %v1265 = vadd.f32 %v325, %v1264
        %v1266 = vpop.f32.mrb[0].mxu0
        %v1267 = vpop.f32.mrb[0].mxu0
        %v1268 = vadd.f32 %v325, %v1267
        %v1269 = vpop.f32.mrb[0].mxu0
        %1270 = vmatprep.mubr.bf16.mxu0 0
        %1271 = vmatmul.mubr.bf16.gmra.mrb[0].mxu0 %v690
        %v1272 = vpop.f32.mrb[0].mxu0
        %v1273 = vadd.f32 %v325, %v1272
        %v1274 = vpop.f32.mrb[0].mxu0
        %v1275 = vpop.f32.mrb[0].mxu0
        %v1276 = vadd.f32 %v325, %v1275
        %v1277 = vpop.f32.mrb[0].mxu0
        %1278 = vmatprep.mubr.bf16.mxu0 0
        %1279 = vmatmul.mubr.bf16.gmra.mrb[0].mxu0 %v693
        %v1280 = vpop.f32.mrb[0].mxu0
        %v1281 = vadd.f32 %v325, %v1280
        %v1282 = vpop.f32.mrb[0].mxu0
        %v1283 = vpop.f32.mrb[0].mxu0
        %v1284 = vadd.f32 %v325, %v1283
        %v1285 = vpop.f32.mrb[0].mxu0
        %1286 = vmatprep.mubr.bf16.mxu0 0
        %1287 = vmatmul.mubr.bf16.gmra.mrb[0].mxu0 %v696
        %v1288 = vpop.f32.mrb[0].mxu0
        %v1289 = vadd.f32 %v325, %v1288
        %v1290 = vpop.f32.mrb[0].mxu0
        %v1291 = vpop.f32.mrb[0].mxu0
        %v1292 = vadd.f32 %v325, %v1291
        %v1293 = vpop.f32.mrb[0].mxu0
        %1294 = vmatprep.mubr.bf16.mxu0 0
        %1295 = vmatmul.mubr.bf16.gmra.mrb[0].mxu0 %v699
        %v1296 = vpop.f32.mrb[0].mxu0
        %v1297 = vadd.f32 %v325, %v1296
        %v1298 = vpop.f32.mrb[0].mxu0
        %v1299 = vpop.f32.mrb[0].mxu0
        %v1300 = vadd.f32 %v325, %v1299
        %v1301 = vpop.f32.mrb[0].mxu0
        %1302 = vmatprep.mubr.bf16.mxu0 0
        %1303 = vmatmul.mubr.bf16.gmra.mrb[0].mxu0 %v702
        %v1304 = vpop.f32.mrb[0].mxu0
        %v1305 = vadd.f32 %v325, %v1304
        %v1306 = vpop.f32.mrb[0].mxu0
        %v1307 = vpop.f32.mrb[0].mxu0
        %v1308 = vadd.f32 %v325, %v1307
        %v1309 = vpop.f32.mrb[0].mxu0
        %1310 = vmatprep.mubr.bf16.mxu0 0
        %1311 = vmatmul.mubr.bf16.gmra.mrb[0].mxu0 %v705
        %v1312 = vpop.f32.mrb[0].mxu0
        %v1313 = vadd.f32 %v325, %v1312
        %v1314 = vpop.f32.mrb[0].mxu0
        %v1315 = vpop.f32.mrb[0].mxu0
        %v1316 = vadd.f32 %v325, %v1315
        %v1317 = vpop.f32.mrb[0].mxu0
        %1318 = vmatprep.mubr.bf16.mxu0 0
        %1319 = vmatmul.mubr.bf16.gmra.mrb[0].mxu0 %v708
        %v1320 = vpop.f32.mrb[0].mxu0
        %v1321 = vadd.f32 %v325, %v1320
        %v1322 = vpop.f32.mrb[0].mxu0
        %v1323 = vpop.f32.mrb[0].mxu0
        %v1324 = vadd.f32 %v325, %v1323
        %v1325 = vpop.f32.mrb[0].mxu0
        %1326 = vmatprep.mubr.bf16.mxu0 0
        %1327 = vmatmul.mubr.bf16.gmra.mrb[0].mxu0 %v711
        %v1328 = vpop.f32.mrb[0].mxu0
        %v1329 = vadd.f32 %v325, %v1328
        %v1330 = vpop.f32.mrb[0].mxu0
        %v1331 = vpop.f32.mrb[0].mxu0
        %v1332 = vadd.f32 %v325, %v1331
        %v1333 = vpop.f32.mrb[0].mxu0
        %1334 = vmatprep.mubr.bf16.mxu0 0
        %1335 = vmatmul.mubr.bf16.gmra.mrb[0].mxu0 %v714
        %v1336 = vpop.f32.mrb[0].mxu0
        %v1337 = vadd.f32 %v325, %v1336
        %v1338 = vpop.f32.mrb[0].mxu0
        %v1339 = vpop.f32.mrb[0].mxu0
        %v1340 = vadd.f32 %v325, %v1339
        %v1341 = vpop.f32.mrb[0].mxu0
        %1342 = vmatprep.mubr.bf16.mxu0 0
        %1343 = vmatmul.mubr.bf16.gmra.mrb[0].mxu0 %v717
        %v1344 = vpop.f32.mrb[0].mxu0
        %v1345 = vadd.f32 %v325, %v1344
        %v1346 = vpop.f32.mrb[0].mxu0
        %v1347 = vpop.f32.mrb[0].mxu0
        %v1348 = vadd.f32 %v325, %v1347
        %v1349 = vpop.f32.mrb[0].mxu0
        %1350 = vmatprep.mubr.bf16.mxu0 0
        %1351 = vmatmul.mubr.bf16.gmra.mrb[0].mxu0 %v720
        %v1352 = vpop.f32.mrb[0].mxu0
        %v1353 = vadd.f32 %v325, %v1352
        %v1354 = vpop.f32.mrb[0].mxu0
        %v1355 = vpop.f32.mrb[0].mxu0
        %v1356 = vadd.f32 %v325, %v1355
        %v1357 = vpop.f32.mrb[0].mxu0
        %1358 = vmatprep.mubr.bf16.mxu0 0
        %1359 = vmatmul.mubr.bf16.gmra.mrb[0].mxu0 %v723
        %v1360 = vpop.f32.mrb[0].mxu0
        %v1361 = vadd.f32 %v325, %v1360
        %v1362 = vpop.f32.mrb[0].mxu0
        %v1363 = vpop.f32.mrb[0].mxu0
        %v1364 = vadd.f32 %v325, %v1363
        %v1365 = vpop.f32.mrb[0].mxu0
        %1366 = vmatprep.mubr.bf16.mxu0 0
        %1367 = vmatmul.mubr.bf16.gmra.mrb[0].mxu0 %v726
        %v1368 = vpop.f32.mrb[0].mxu0
        %v1369 = vadd.f32 %v325, %v1368
        %v1370 = vpop.f32.mrb[0].mxu0
        %v1371 = vpop.f32.mrb[0].mxu0
        %v1372 = vadd.f32 %v325, %v1371
        %v1373 = vpop.f32.mrb[0].mxu0
        %1374 = vmatprep.mubr.bf16.mxu0 0
        %1375 = vmatmul.mubr.bf16.gmra.mrb[0].mxu0 %v729
        %v1376 = vpop.f32.mrb[0].mxu0
        %v1377 = vadd.f32 %v325, %v1376
        %v1378 = vpop.f32.mrb[0].mxu0
        %v1379 = vpop.f32.mrb[0].mxu0
        %v1380 = vadd.f32 %v325, %v1379
        %v1381 = vpop.f32.mrb[0].mxu0
        %1382 = vmatprep.mubr.bf16.mxu0 0
        %1383 = vmatmul.mubr.bf16.gmra.mrb[0].mxu0 %v732
        %v1384 = vpop.f32.mrb[0].mxu0
        %v1385 = vadd.f32 %v325, %v1384
        %v1386 = vpop.f32.mrb[0].mxu0
        %v1387 = vpop.f32.mrb[0].mxu0
        %v1388 = vadd.f32 %v325, %v1387
        %v1389 = vpop.f32.mrb[0].mxu0
        %1390 = vmatprep.mubr.bf16.mxu0 0
        %1391 = vmatmul.mubr.bf16.gmra.mrb[0].mxu0 %v735
        %v1392 = vpop.f32.mrb[0].mxu0
        %v1393 = vadd.f32 %v325, %v1392
        %v1394 = vpop.f32.mrb[0].mxu0
        %v1395 = vpop.f32.mrb[0].mxu0
        %v1396 = vadd.f32 %v325, %v1395
        %v1397 = vpop.f32.mrb[0].mxu0
        %1398 = vmatprep.mubr.bf16.mxu0 0
        %1399 = vmatmul.mubr.bf16.gmra.mrb[0].mxu0 %v738
        %v1400 = vpop.f32.mrb[0].mxu0
        %v1401 = vadd.f32 %v325, %v1400
        %v1402 = vpop.f32.mrb[0].mxu0
        %v1403 = vpop.f32.mrb[0].mxu0
        %v1404 = vadd.f32 %v325, %v1403
        %v1405 = vpop.f32.mrb[0].mxu0
        %1406 = vmatprep.mubr.bf16.mxu0 0
        %1407 = vmatmul.mubr.bf16.gmra.mrb[0].mxu0 %v741
        %v1408 = vpop.f32.mrb[0].mxu0
        %v1409 = vadd.f32 %v325, %v1408
        %v1410 = vpop.f32.mrb[0].mxu0
        %v1411 = vpop.f32.mrb[0].mxu0
        %v1412 = vadd.f32 %v325, %v1411
        %v1413 = vpop.f32.mrb[0].mxu0
        %1414 = vmatprep.mubr.bf16.mxu0 0
        %1415 = vmatmul.mubr.bf16.gmra.mrb[0].mxu0 %v744
        %v1416 = vpop.f32.mrb[0].mxu0
        %v1417 = vadd.f32 %v325, %v1416
        %v1418 = vpop.f32.mrb[0].mxu0
        %v1419 = vpop.f32.mrb[0].mxu0
        %v1420 = vadd.f32 %v325, %v1419
        %v1421 = vpop.f32.mrb[0].mxu0
        %1422 = vmatprep.mubr.bf16.mxu0 0
        %1423 = vmatmul.mubr.bf16.gmra.mrb[0].mxu0 %v747
        %v1424 = vpop.f32.mrb[0].mxu0
        %v1425 = vadd.f32 %v325, %v1424
        %v1426 = vpop.f32.mrb[0].mxu0
        %v1427 = vpop.f32.mrb[0].mxu0
        %v1428 = vadd.f32 %v325, %v1427
        %v1429 = vpop.f32.mrb[0].mxu0
        %1430 = vmatprep.mubr.bf16.mxu0 0
        %1431 = vmatmul.mubr.bf16.gmra.mrb[0].mxu0 %v750
        %v1432 = vpop.f32.mrb[0].mxu0
        %v1433 = vadd.f32 %v325, %v1432
        %v1434 = vpop.f32.mrb[0].mxu0
        %v1435 = vpop.f32.mrb[0].mxu0
        %v1436 = vadd.f32 %v325, %v1435
        %v1437 = vpop.f32.mrb[0].mxu0
        %1438 = vmatprep.mubr.bf16.mxu0 0
        %1439 = vmatmul.mubr.bf16.gmra.mrb[0].mxu0 %v753
        %v1440 = vpop.f32.mrb[0].mxu0
        %v1441 = vadd.f32 %v325, %v1440
        %v1442 = vpop.f32.mrb[0].mxu0
        %v1443 = vpop.f32.mrb[0].mxu0
        %v1444 = vadd.f32 %v325, %v1443
        %v1445 = vpop.f32.mrb[0].mxu0
        %1446 = vmatprep.mubr.bf16.mxu0 0
        %1447 = vmatmul.mubr.bf16.gmra.mrb[0].mxu0 %v756
        %v1448 = vpop.f32.mrb[0].mxu0
        %v1449 = vadd.f32 %v325, %v1448
        %v1450 = vpop.f32.mrb[0].mxu0
        %v1451 = vpop.f32.mrb[0].mxu0
        %v1452 = vadd.f32 %v325, %v1451
        %v1453 = vpop.f32.mrb[0].mxu0
        %1454 = vmatprep.mubr.bf16.mxu0 0
        %1455 = vmatmul.mubr.bf16.gmra.mrb[0].mxu0 %v759
        %v1456 = vpop.f32.mrb[0].mxu0
        %v1457 = vadd.f32 %v325, %v1456
        %v1458 = vpop.f32.mrb[0].mxu0
        %v1459 = vpop.f32.mrb[0].mxu0
        %v1460 = vadd.f32 %v325, %v1459
        %v1461 = vpop.f32.mrb[0].mxu0
        %1462 = vmatprep.mubr.bf16.mxu0 0
        %1463 = vmatmul.mubr.bf16.gmra.mrb[0].mxu0 %v762
        %v1464 = vpop.f32.mrb[0].mxu0
        %v1465 = vadd.f32 %v325, %v1464
        %v1466 = vpop.f32.mrb[0].mxu0
        %v1467 = vpop.f32.mrb[0].mxu0
        %v1468 = vadd.f32 %v325, %v1467
        %v1469 = vpop.f32.mrb[0].mxu0
        %1470 = vmatprep.mubr.bf16.mxu0 0
        %1471 = vmatmul.mubr.bf16.gmra.mrb[0].mxu0 %v765
        %v1472 = vpop.f32.mrb[0].mxu0
        %v1473 = vadd.f32 %v325, %v1472
        %v1474 = vpop.f32.mrb[0].mxu0
        %v1475 = vpop.f32.mrb[0].mxu0
        %v1476 = vadd.f32 %v325, %v1475
        %v1477 = vpop.f32.mrb[0].mxu0
        %1478 = vmatprep.mubr.bf16.mxu0 0
        %1479 = vmatmul.mubr.bf16.gmra.mrb[0].mxu0 %v768
        %v1480 = vpop.f32.mrb[0].mxu0
        %v1481 = vadd.f32 %v325, %v1480
        %v1482 = vpop.f32.mrb[0].mxu0
        %v1483 = vpop.f32.mrb[0].mxu0
        %v1484 = vadd.f32 %v325, %v1483
        %v1485 = vpop.f32.mrb[0].mxu0
        %1486 = vmatprep.mubr.bf16.mxu0 0
        %1487 = vmatmul.mubr.bf16.gmra.mrb[0].mxu0 %v771
        %v1488 = vpop.f32.mrb[0].mxu0
        %v1489 = vadd.f32 %v325, %v1488
        %v1490 = vpop.f32.mrb[0].mxu0
        %v1491 = vpop.f32.mrb[0].mxu0
        %v1492 = vadd.f32 %v325, %v1491
        %v1493 = vpop.f32.mrb[0].mxu0
        %1494 = vmatprep.mubr.bf16.mxu0 0
        %1495 = vmatmul.mubr.bf16.gmra.mrb[0].mxu0 %v774
        %v1496 = vpop.f32.mrb[0].mxu0
        %v1497 = vadd.f32 %v325, %v1496
        %v1498 = vpop.f32.mrb[0].mxu0
        %v1499 = vpop.f32.mrb[0].mxu0
        %v1500 = vadd.f32 %v325, %v1499
        %v1501 = vpop.f32.mrb[0].mxu0
        %1502 = vmatprep.mubr.bf16.mxu0 0
        %1503 = vmatmul.mubr.bf16.gmra.mrb[0].mxu0 %v777
        %v1504 = vpop.f32.mrb[0].mxu0
        %v1505 = vadd.f32 %v325, %v1504
        %v1506 = vpop.f32.mrb[0].mxu0
        %v1507 = vpop.f32.mrb[0].mxu0
        %v1508 = vadd.f32 %v325, %v1507
        %v1509 = vpop.f32.mrb[0].mxu0
        %1510 = vmatprep.mubr.bf16.mxu0 0
        %1511 = vmatmul.mubr.bf16.gmra.mrb[0].mxu0 %v780
        %v1512 = vpop.f32.mrb[0].mxu0
        %v1513 = vadd.f32 %v325, %v1512
        %v1514 = vpop.f32.mrb[0].mxu0
        %v1515 = vpop.f32.mrb[0].mxu0
        %v1516 = vadd.f32 %v325, %v1515
        %v1517 = vpop.f32.mrb[0].mxu0
        %1518 = vmatprep.mubr.bf16.mxu0 0
        %1519 = vmatmul.mubr.bf16.gmra.mrb[0].mxu0 %v783
        %v1520 = vpop.f32.mrb[0].mxu0
        %v1521 = vadd.f32 %v325, %v1520
        %v1522 = vpop.f32.mrb[0].mxu0
        %v1523 = vpop.f32.mrb[0].mxu0
        %v1524 = vadd.f32 %v325, %v1523
        %v1525 = vpop.f32.mrb[0].mxu0
        %1526 = vmatprep.mubr.bf16.mxu0 0
        %1527 = vmatmul.mubr.bf16.gmra.mrb[0].mxu0 %v786
        %v1528 = vpop.f32.mrb[0].mxu0
        %v1529 = vadd.f32 %v325, %v1528
        %v1530 = vpop.f32.mrb[0].mxu0
        %v1531 = vpop.f32.mrb[0].mxu0
        %v1532 = vadd.f32 %v325, %v1531
        %v1533 = vpop.f32.mrb[0].mxu0
        %1534 = vmatprep.mubr.bf16.mxu0 0
        %1535 = vmatmul.mubr.bf16.gmra.mrb[0].mxu0 %v789
        %v1536 = vpop.f32.mrb[0].mxu0
        %v1537 = vadd.f32 %v325, %v1536
        %v1538 = vpop.f32.mrb[0].mxu0
        %v1539 = vpop.f32.mrb[0].mxu0
        %v1540 = vadd.f32 %v325, %v1539
        %v1541 = vpop.f32.mrb[0].mxu0
        %1542 = vmatprep.mubr.bf16.mxu0 0
        %1543 = vmatmul.mubr.bf16.gmra.mrb[0].mxu0 %v792
        %v1544 = vpop.f32.mrb[0].mxu0
        %v1545 = vadd.f32 %v325, %v1544
        %v1546 = vpop.f32.mrb[0].mxu0
        %v1547 = vpop.f32.mrb[0].mxu0
        %v1548 = vadd.f32 %v325, %v1547
        %v1549 = vpop.f32.mrb[0].mxu0
        %1550 = vmatprep.mubr.bf16.mxu0 0
        %1551 = vmatmul.mubr.bf16.gmra.mrb[0].mxu0 %v795
        %v1552 = vpop.f32.mrb[0].mxu0
        %v1553 = vadd.f32 %v325, %v1552
        %v1554 = vpop.f32.mrb[0].mxu0
        %v1555 = vpop.f32.mrb[0].mxu0
        %v1556 = vadd.f32 %v325, %v1555
        %v1557 = vpop.f32.mrb[0].mxu0
        %1558 = vmatprep.mubr.bf16.mxu0 0
        %1559 = vmatmul.mubr.bf16.gmra.mrb[0].mxu0 %v798
        %v1560 = vpop.f32.mrb[0].mxu0
        %v1561 = vadd.f32 %v325, %v1560
        %v1562 = vpop.f32.mrb[0].mxu0
        %v1563 = vpop.f32.mrb[0].mxu0
        %v1564 = vadd.f32 %v325, %v1563
        %v1565 = vpop.f32.mrb[0].mxu0
        %1566 = vmatprep.mubr.bf16.mxu0 0
        %1567 = vmatmul.mubr.bf16.gmra.mrb[0].mxu0 %v801
        %v1568 = vpop.f32.mrb[0].mxu0
        %v1569 = vadd.f32 %v325, %v1568
        %v1570 = vpop.f32.mrb[0].mxu0
        %v1571 = vpop.f32.mrb[0].mxu0
        %v1572 = vadd.f32 %v325, %v1571
        %v1573 = vpop.f32.mrb[0].mxu0
        %1574 = vmatprep.mubr.bf16.mxu0 0
        %1575 = vmatmul.mubr.bf16.gmra.mrb[0].mxu0 %v804
        %v1576 = vpop.f32.mrb[0].mxu0
        %v1577 = vadd.f32 %v325, %v1576
        %v1578 = vpop.f32.mrb[0].mxu0
        %v1579 = vpop.f32.mrb[0].mxu0
        %v1580 = vadd.f32 %v325, %v1579
        %v1581 = vpop.f32.mrb[0].mxu0
        %1582 = vmatprep.mubr.bf16.mxu0 0
        %1583 = vmatmul.mubr.bf16.gmra.mrb[0].mxu0 %v807
        %v1584 = vpop.f32.mrb[0].mxu0
        %v1585 = vadd.f32 %v325, %v1584
        %v1586 = vpop.f32.mrb[0].mxu0
        %v1587 = vpop.f32.mrb[0].mxu0
        %v1588 = vadd.f32 %v325, %v1587
        %v1589 = vpop.f32.mrb[0].mxu0
        %1590 = vmatprep.mubr.bf16.mxu0 0
        %1591 = vmatmul.mubr.bf16.gmra.mrb[0].mxu0 %v810
        %v1592 = vpop.f32.mrb[0].mxu0
        %v1593 = vadd.f32 %v325, %v1592
        %v1594 = vpop.f32.mrb[0].mxu0
        %v1595 = vpop.f32.mrb[0].mxu0
        %v1596 = vadd.f32 %v325, %v1595
        %v1597 = vpop.f32.mrb[0].mxu0
        %1598 = vmatprep.mubr.bf16.mxu0 0
        %1599 = vmatmul.mubr.bf16.gmra.mrb[0].mxu0 %v813
        %v1600 = vpop.f32.mrb[0].mxu0
        %v1601 = vadd.f32 %v325, %v1600
        %v1602 = vpop.f32.mrb[0].mxu0
        %v1603 = vpop.f32.mrb[0].mxu0
        %v1604 = vadd.f32 %v325, %v1603
        %v1605 = vpop.f32.mrb[0].mxu0
        %1606 = vmatprep.mubr.bf16.mxu0 0
        %1607 = vmatmul.mubr.bf16.gmra.mrb[0].mxu0 %v816
        %v1608 = vpop.f32.mrb[0].mxu0
        %v1609 = vadd.f32 %v325, %v1608
        %v1610 = vpop.f32.mrb[0].mxu0
        %v1611 = vpop.f32.mrb[0].mxu0
        %v1612 = vadd.f32 %v325, %v1611
        %v1613 = vpop.f32.mrb[0].mxu0
        %1614 = vmatprep.mubr.bf16.mxu0 0
        %1615 = vmatmul.mubr.bf16.gmra.mrb[0].mxu0 %v819
        %v1616 = vpop.f32.mrb[0].mxu0
        %v1617 = vadd.f32 %v325, %v1616
        %v1618 = vpop.f32.mrb[0].mxu0
        %v1619 = vpop.f32.mrb[0].mxu0
        %v1620 = vadd.f32 %v325, %v1619
        %v1621 = vpop.f32.mrb[0].mxu0
        %1622 = vmatprep.mubr.bf16.mxu0 0
        %1623 = vmatmul.mubr.bf16.gmra.mrb[0].mxu0 %v822
        %v1624 = vpop.f32.mrb[0].mxu0
        %v1625 = vadd.f32 %v325, %v1624
        %v1626 = vpop.f32.mrb[0].mxu0
        %v1627 = vpop.f32.mrb[0].mxu0
        %v1628 = vadd.f32 %v325, %v1627
        %v1629 = vpop.f32.mrb[0].mxu0
        %1630 = vmatprep.mubr.bf16.mxu0 0
        %1631 = vmatmul.mubr.bf16.gmra.mrb[0].mxu0 %v825
        %v1632 = vpop.f32.mrb[0].mxu0
        %v1633 = vadd.f32 %v325, %v1632
        %v1634 = vpop.f32.mrb[0].mxu0
        %v1635 = vpop.f32.mrb[0].mxu0
        %v1636 = vadd.f32 %v325, %v1635
        %v1637 = vpop.f32.mrb[0].mxu0
        %1638 = vmatprep.mubr.bf16.mxu0 0
        %1639 = vmatmul.mubr.bf16.gmra.mrb[0].mxu0 %v828
        %v1640 = vpop.f32.mrb[0].mxu0
        %v1641 = vadd.f32 %v325, %v1640
        %v1642 = vpop.f32.mrb[0].mxu0
        %v1643 = vpop.f32.mrb[0].mxu0
        %v1644 = vadd.f32 %v325, %v1643
        %v1645 = vpop.f32.mrb[0].mxu0
        %1646 = vmatprep.mubr.bf16.mxu0 0
        %1647 = vmatmul.mubr.bf16.gmra.mrb[0].mxu0 %v831
        %v1648 = vpop.f32.mrb[0].mxu0
        %v1649 = vadd.f32 %v325, %v1648
        %v1650 = vpop.f32.mrb[0].mxu0
        %v1651 = vpop.f32.mrb[0].mxu0
        %v1652 = vadd.f32 %v325, %v1651
        %v1653 = vpop.f32.mrb[0].mxu0
        %1654 = vmatprep.mubr.bf16.mxu0 0
        %1655 = vmatmul.mubr.bf16.gmra.mrb[0].mxu0 %v834
        %v1656 = vpop.f32.mrb[0].mxu0
        %v1657 = vadd.f32 %v325, %v1656
        %v1658 = vpop.f32.mrb[0].mxu0
        %v1659 = vpop.f32.mrb[0].mxu0
        %v1660 = vadd.f32 %v325, %v1659
        %v1661 = vpop.f32.mrb[0].mxu0
        %1662 = vmatprep.mubr.bf16.mxu0 0
        %1663 = vmatmul.mubr.bf16.gmra.mrb[0].mxu0 %v837
        %v1664 = vpop.f32.mrb[0].mxu0
        %v1665 = vadd.f32 %v325, %v1664
        %v1666 = vpop.f32.mrb[0].mxu0
        %v1667 = vpop.f32.mrb[0].mxu0
        %v1668 = vadd.f32 %v325, %v1667
        %v1669 = vpop.f32.mrb[0].mxu0
        %1670 = vmatprep.mubr.bf16.mxu0 0
        %1671 = vmatmul.mubr.bf16.gmra.mrb[0].mxu0 %v840
        %v1672 = vpop.f32.mrb[0].mxu0
        %v1673 = vadd.f32 %v325, %v1672
        %v1674 = vpop.f32.mrb[0].mxu0
        %v1675 = vpop.f32.mrb[0].mxu0
        %v1676 = vadd.f32 %v325, %v1675
        %v1677 = vpop.f32.mrb[0].mxu0
        %1678 = vmatprep.mubr.bf16.mxu0 0
        %1679 = vmatmul.mubr.bf16.gmra.mrb[0].mxu0 %v843
        %v1680 = vpop.f32.mrb[0].mxu0
        %v1681 = vadd.f32 %v325, %v1680
        %v1682 = vpop.f32.mrb[0].mxu0
        %v1683 = vpop.f32.mrb[0].mxu0
        %v1684 = vadd.f32 %v325, %v1683
        %v1685 = vpop.f32.mrb[0].mxu0
        %1686 = vmatprep.mubr.bf16.mxu0 0
        %1687 = vmatmul.mubr.bf16.gmra.mrb[0].mxu0 %v846
        %v1688 = vpop.f32.mrb[0].mxu0
        %v1689 = vadd.f32 %v325, %v1688
        %v1690 = vpop.f32.mrb[0].mxu0
        %v1691 = vpop.f32.mrb[0].mxu0
        %v1692 = vadd.f32 %v325, %v1691
        %v1693 = vpop.f32.mrb[0].mxu0
        %1694 = vmatprep.mubr.bf16.mxu0 0
        %1695 = vmatmul.mubr.bf16.gmra.mrb[0].mxu0 %v849
        %v1696 = vpop.f32.mrb[0].mxu0
        %v1697 = vadd.f32 %v325, %v1696
        %v1698 = vpop.f32.mrb[0].mxu0
        %v1699 = vpop.f32.mrb[0].mxu0
        %v1700 = vadd.f32 %v325, %v1699
        %v1701 = vpop.f32.mrb[0].mxu0
        %1702 = vmatprep.mubr.bf16.mxu0 0
        %1703 = vmatmul.mubr.bf16.gmra.mrb[0].mxu0 %v852
        %v1704 = vpop.f32.mrb[0].mxu0
        %v1705 = vadd.f32 %v325, %v1704
        %v1706 = vpop.f32.mrb[0].mxu0
        %v1707 = vpop.f32.mrb[0].mxu0
        %v1708 = vadd.f32 %v325, %v1707
        %v1709 = vpop.f32.mrb[0].mxu0
        %1710 = vmatprep.mubr.bf16.mxu0 0
        %1711 = vmatmul.mubr.bf16.gmra.mrb[0].mxu0 %v855
        %v1712 = vpop.f32.mrb[0].mxu0
        %v1713 = vadd.f32 %v325, %v1712
        %v1714 = vpop.f32.mrb[0].mxu0
        %v1715 = vpop.f32.mrb[0].mxu0
        %v1716 = vadd.f32 %v325, %v1715
        %v1717 = vpop.f32.mrb[0].mxu0
        %1718 = vmatprep.mubr.bf16.mxu0 0
        %1719 = vmatmul.mubr.bf16.gmra.mrb[0].mxu0 %v858
        %v1720 = vpop.f32.mrb[0].mxu0
        %v1721 = vadd.f32 %v325, %v1720
        %v1722 = vpop.f32.mrb[0].mxu0
        %v1723 = vpop.f32.mrb[0].mxu0
        %v1724 = vadd.f32 %v325, %v1723
        %v1725 = vpop.f32.mrb[0].mxu0
        %1726 = vmatprep.mubr.bf16.mxu0 0
        %1727 = vmatmul.mubr.bf16.gmra.mrb[0].mxu0 %v861
        %v1728 = vpop.f32.mrb[0].mxu0
        %v1729 = vadd.f32 %v325, %v1728
        %v1730 = vpop.f32.mrb[0].mxu0
        %v1731 = vpop.f32.mrb[0].mxu0
        %v1732 = vadd.f32 %v325, %v1731
        %v1733 = vpop.f32.mrb[0].mxu0
        %1734 = vmatprep.mubr.bf16.mxu0 0
        %1735 = vmatmul.mubr.bf16.gmra.mrb[0].mxu0 %v864
        %v1736 = vpop.f32.mrb[0].mxu0
        %v1737 = vadd.f32 %v325, %v1736
        %v1738 = vpop.f32.mrb[0].mxu0
        %v1739 = vpop.f32.mrb[0].mxu0
        %v1740 = vadd.f32 %v325, %v1739
        %v1741 = vpop.f32.mrb[0].mxu0
        %1742 = vmatprep.mubr.bf16.mxu0 0
        %1743 = vmatmul.mubr.bf16.gmra.mrb[0].mxu0 %v867
        %v1744 = vpop.f32.mrb[0].mxu0
        %v1745 = vadd.f32 %v325, %v1744
        %v1746 = vpop.f32.mrb[0].mxu0
        %v1747 = vpop.f32.mrb[0].mxu0
        %v1748 = vadd.f32 %v325, %v1747
        %v1749 = vpop.f32.mrb[0].mxu0
        %1750 = vmatprep.mubr.bf16.mxu0 0
        %1751 = vmatmul.mubr.bf16.gmra.mrb[0].mxu0 %v870
        %v1752 = vpop.f32.mrb[0].mxu0
        %v1753 = vadd.f32 %v325, %v1752
        %v1754 = vpop.f32.mrb[0].mxu0
        %v1755 = vpop.f32.mrb[0].mxu0
        %v1756 = vadd.f32 %v325, %v1755
        %v1757 = vpop.f32.mrb[0].mxu0
        %1758 = vmatprep.mubr.bf16.mxu0 0
        %1759 = vmatmul.mubr.bf16.gmra.mrb[0].mxu0 %v873
        %v1760 = vpop.f32.mrb[0].mxu0
        %v1761 = vadd.f32 %v325, %v1760
        %v1762 = vpop.f32.mrb[0].mxu0
        %v1763 = vpop.f32.mrb[0].mxu0
        %v1764 = vadd.f32 %v325, %v1763
        %v1765 = vpop.f32.mrb[0].mxu0
        %1766 = vmatprep.mubr.bf16.mxu0 0
        %1767 = vmatmul.mubr.bf16.gmra.mrb[0].mxu0 %v876
        %v1768 = vpop.f32.mrb[0].mxu0
        %v1769 = vadd.f32 %v325, %v1768
        %v1770 = vpop.f32.mrb[0].mxu0
        %v1771 = vpop.f32.mrb[0].mxu0
        %v1772 = vadd.f32 %v325, %v1771
        %v1773 = vpop.f32.mrb[0].mxu0
        %1774 = vmatprep.mubr.bf16.mxu0 0
        %1775 = vmatmul.mubr.bf16.gmra.mrb[0].mxu0 %v879
        %v1776 = vpop.f32.mrb[0].mxu0
        %v1777 = vadd.f32 %v325, %v1776
        %v1778 = vpop.f32.mrb[0].mxu0
        %v1779 = vpop.f32.mrb[0].mxu0
        %v1780 = vadd.f32 %v325, %v1779
        %v1781 = vpop.f32.mrb[0].mxu0
        %1782 = vmatprep.mubr.bf16.mxu0 0
        %1783 = vmatmul.mubr.bf16.gmra.mrb[0].mxu0 %v882
        %v1784 = vpop.f32.mrb[0].mxu0
        %v1785 = vadd.f32 %v325, %v1784
        %v1786 = vpop.f32.mrb[0].mxu0
        %v1787 = vpop.f32.mrb[0].mxu0
        %v1788 = vadd.f32 %v325, %v1787
        %v1789 = vpop.f32.mrb[0].mxu0
        %1790 = vmatprep.mubr.bf16.mxu0 0
        %1791 = vmatmul.mubr.bf16.gmra.mrb[0].mxu0 %v885
        %v1792 = vpop.f32.mrb[0].mxu0
        %v1793 = vadd.f32 %v325, %v1792
        %v1794 = vpop.f32.mrb[0].mxu0
        %v1795 = vpop.f32.mrb[0].mxu0
        %v1796 = vadd.f32 %v325, %v1795
        %v1797 = vpop.f32.mrb[0].mxu0
        %1798 = vmatprep.mubr.bf16.mxu0 0
        %1799 = vmatmul.mubr.bf16.gmra.mrb[0].mxu0 %v888
        %v1800 = vpop.f32.mrb[0].mxu0
        %v1801 = vadd.f32 %v325, %v1800
        %v1802 = vpop.f32.mrb[0].mxu0
        %v1803 = vpop.f32.mrb[0].mxu0
        %v1804 = vadd.f32 %v325, %v1803
        %v1805 = vpop.f32.mrb[0].mxu0
        %1806 = vmatprep.mubr.bf16.mxu0 0
        %1807 = vmatmul.mubr.bf16.gmra.mrb[0].mxu0 %v891
        %v1808 = vpop.f32.mrb[0].mxu0
        %v1809 = vadd.f32 %v325, %v1808
        %v1810 = vpop.f32.mrb[0].mxu0
        %v1811 = vpop.f32.mrb[0].mxu0
        %v1812 = vadd.f32 %v325, %v1811
        %v1813 = vpop.f32.mrb[0].mxu0
        %1814 = vmatprep.mubr.bf16.mxu0 0
        %1815 = vmatmul.mubr.bf16.gmra.mrb[0].mxu0 %v894
        %v1816 = vpop.f32.mrb[0].mxu0
        %v1817 = vadd.f32 %v325, %v1816
        %v1818 = vpop.f32.mrb[0].mxu0
        %v1819 = vpop.f32.mrb[0].mxu0
        %v1820 = vadd.f32 %v325, %v1819
        %v1821 = vpop.f32.mrb[0].mxu0
        %1822 = vmatprep.mubr.bf16.mxu0 0
        %1823 = vmatmul.mubr.bf16.gmra.mrb[0].mxu0 %v897
        %v1824 = vpop.f32.mrb[0].mxu0
        %v1825 = vadd.f32 %v325, %v1824
        %v1826 = vpop.f32.mrb[0].mxu0
        %v1827 = vpop.f32.mrb[0].mxu0
        %v1828 = vadd.f32 %v325, %v1827
        %v1829 = vpop.f32.mrb[0].mxu0
        %1830 = vmatprep.mubr.bf16.mxu0 0
        %1831 = vmatmul.mubr.bf16.gmra.mrb[0].mxu0 %v900
        %v1832 = vpop.f32.mrb[0].mxu0
        %v1833 = vadd.f32 %v325, %v1832
        %v1834 = vpop.f32.mrb[0].mxu0
        %v1835 = vpop.f32.mrb[0].mxu0
        %v1836 = vadd.f32 %v325, %v1835
        %v1837 = vpop.f32.mrb[0].mxu0
        %1838 = vmatprep.mubr.bf16.mxu0 0
        %1839 = vmatmul.mubr.bf16.gmra.mrb[0].mxu0 %v903
        %v1840 = vpop.f32.mrb[0].mxu0
        %v1841 = vadd.f32 %v325, %v1840
        %v1842 = vpop.f32.mrb[0].mxu0
        %v1843 = vpop.f32.mrb[0].mxu0
        %v1844 = vadd.f32 %v325, %v1843
        %v1845 = vpop.f32.mrb[0].mxu0
        %1846 = vmatprep.mubr.bf16.mxu0 0
        %1847 = vmatmul.mubr.bf16.gmra.mrb[0].mxu0 %v906
        %v1848 = vpop.f32.mrb[0].mxu0
        %v1849 = vadd.f32 %v325, %v1848
        %v1850 = vpop.f32.mrb[0].mxu0
        %v1851 = vpop.f32.mrb[0].mxu0
        %v1852 = vadd.f32 %v325, %v1851
        %v1853 = vpop.f32.mrb[0].mxu0
        %1854 = vmatprep.mubr.bf16.mxu0 0
        %1855 = vmatmul.mubr.bf16.gmra.mrb[0].mxu0 %v909
        %v1856 = vpop.f32.mrb[0].mxu0
        %v1857 = vadd.f32 %v325, %v1856
        %v1858 = vpop.f32.mrb[0].mxu0
        %v1859 = vpop.f32.mrb[0].mxu0
        %v1860 = vadd.f32 %v325, %v1859
        %v1861 = vpop.f32.mrb[0].mxu0
        %1862 = vmatprep.mubr.bf16.mxu0 0
        %1863 = vmatmul.mubr.bf16.gmra.mrb[0].mxu0 %v912
        %v1864 = vpop.f32.mrb[0].mxu0
        %v1865 = vadd.f32 %v325, %v1864
        %v1866 = vpop.f32.mrb[0].mxu0
        %v1867 = vpop.f32.mrb[0].mxu0
        %v1868 = vadd.f32 %v325, %v1867
        %v1869 = vpop.f32.mrb[0].mxu0
        %1870 = vmatprep.mubr.bf16.mxu0 0
        %1871 = vmatmul.mubr.bf16.gmra.mrb[0].mxu0 %v915
        %v1872 = vpop.f32.mrb[0].mxu0
        %v1873 = vadd.f32 %v325, %v1872
        %v1874 = vpop.f32.mrb[0].mxu0
        %v1875 = vpop.f32.mrb[0].mxu0
        %v1876 = vadd.f32 %v325, %v1875
        %v1877 = vpop.f32.mrb[0].mxu0
        %1878 = vmatprep.mubr.bf16.mxu0 0
        %1879 = vmatmul.mubr.bf16.gmra.mrb[0].mxu0 %v918
        %v1880 = vpop.f32.mrb[0].mxu0
        %v1881 = vadd.f32 %v325, %v1880
        %v1882 = vpop.f32.mrb[0].mxu0
        %v1883 = vpop.f32.mrb[0].mxu0
        %v1884 = vadd.f32 %v325, %v1883
        %v1885 = vpop.f32.mrb[0].mxu0
        %1886 = vmatprep.mubr.bf16.mxu0 0
        %1887 = vmatmul.mubr.bf16.gmra.mrb[0].mxu0 %v921
        %v1888 = vpop.f32.mrb[0].mxu0
        %v1889 = vadd.f32 %v325, %v1888
        %v1890 = vpop.f32.mrb[0].mxu0
        %v1891 = vpop.f32.mrb[0].mxu0
        %v1892 = vadd.f32 %v325, %v1891
        %v1893 = vpop.f32.mrb[0].mxu0
        %1894 = vmatprep.mubr.bf16.mxu0 0
        %1895 = vmatmul.mubr.bf16.gmra.mrb[0].mxu0 %v924
        %v1896 = vpop.f32.mrb[0].mxu0
        %v1897 = vadd.f32 %v325, %v1896
        %v1898 = vpop.f32.mrb[0].mxu0
        %v1899 = vpop.f32.mrb[0].mxu0
        %v1900 = vadd.f32 %v325, %v1899
        %v1901 = vpop.f32.mrb[0].mxu0
        %1902 = vmatprep.mubr.bf16.mxu0 0
        %1903 = vmatmul.mubr.bf16.gmra.mrb[0].mxu0 %v927
        %v1904 = vpop.f32.mrb[0].mxu0
        %v1905 = vadd.f32 %v325, %v1904
        %v1906 = vpop.f32.mrb[0].mxu0
        %v1907 = vpop.f32.mrb[0].mxu0
        %v1908 = vadd.f32 %v325, %v1907
        %v1909 = vpop.f32.mrb[0].mxu0
        %1910 = vmatprep.mubr.bf16.mxu0 0
        %1911 = vmatmul.mubr.bf16.gmra.mrb[0].mxu0 %v930
        %v1912 = vpop.f32.mrb[0].mxu0
        %v1913 = vadd.f32 %v325, %v1912
        %v1914 = vpop.f32.mrb[0].mxu0
        %v1915 = vpop.f32.mrb[0].mxu0
        %v1916 = vadd.f32 %v325, %v1915
        %v1917 = vpop.f32.mrb[0].mxu0
        %1918 = vmatprep.mubr.bf16.mxu0 0
        %1919 = vmatmul.mubr.bf16.gmra.mrb[0].mxu0 %v933
        %v1920 = vpop.f32.mrb[0].mxu0
        %v1921 = vadd.f32 %v325, %v1920
        %v1922 = vpop.f32.mrb[0].mxu0
        %v1923 = vpop.f32.mrb[0].mxu0
        %v1924 = vadd.f32 %v325, %v1923
        %v1925 = vpop.f32.mrb[0].mxu0
        %1926 = vmatprep.mubr.bf16.mxu0 0
        %1927 = vmatmul.mubr.bf16.gmra.mrb[0].mxu0 %v936
        %v1928 = vpop.f32.mrb[0].mxu0
        %v1929 = vadd.f32 %v325, %v1928
        %v1930 = vpop.f32.mrb[0].mxu0
        %v1931 = vpop.f32.mrb[0].mxu0
        %v1932 = vadd.f32 %v325, %v1931
        %v1933 = vpop.f32.mrb[0].mxu0
        %1934 = vmatprep.mubr.bf16.mxu0 0
        %1935 = vmatmul.mubr.bf16.gmra.mrb[0].mxu0 %v939
        %v1936 = vpop.f32.mrb[0].mxu0
        %v1937 = vadd.f32 %v325, %v1936
        %v1938 = vpop.f32.mrb[0].mxu0
        %v1939 = vpop.f32.mrb[0].mxu0
        %v1940 = vadd.f32 %v325, %v1939
        %v1941 = vpop.f32.mrb[0].mxu0
        %1942 = vmatprep.mubr.bf16.mxu0 0
        %1943 = vmatmul.mubr.bf16.gmra.mrb[0].mxu0 %v942
        %v1944 = vpop.f32.mrb[0].mxu0
        %v1945 = vadd.f32 %v325, %v1944
        %v1946 = vpop.f32.mrb[0].mxu0
        %v1947 = vpop.f32.mrb[0].mxu0
        %v1948 = vadd.f32 %v325, %v1947
        %v1949 = vpop.f32.mrb[0].mxu0
        %1950 = vmatprep.mubr.bf16.mxu0 0
        %1951 = vmatmul.mubr.bf16.gmra.mrb[0].mxu0 %v945
        %v1952 = vpop.f32.mrb[0].mxu0
        %v1953 = vadd.f32 %v325, %v1952
        %v1954 = vpop.f32.mrb[0].mxu0
        %v1955 = vpop.f32.mrb[0].mxu0
        %v1956 = vadd.f32 %v325, %v1955
        %v1957 = vpop.f32.mrb[0].mxu0
        %1958 = vmatprep.mubr.bf16.mxu0 0
        %1959 = vmatmul.mubr.bf16.gmra.mrb[0].mxu0 %v948
        %v1960 = vpop.f32.mrb[0].mxu0
        %v1961 = vadd.f32 %v325, %v1960
        %v1962 = vpop.f32.mrb[0].mxu0
        %v1963 = vpop.f32.mrb[0].mxu0
        %v1964 = vadd.f32 %v325, %v1963
        %v1965 = vpop.f32.mrb[0].mxu0
        %1966 = vmatprep.mubr.bf16.mxu0 0
        %1967 = vmatmul.mubr.bf16.gmra.mrb[0].mxu0 %v951
        %v1968 = vpop.f32.mrb[0].mxu0
        %v1969 = vadd.f32 %v325, %v1968
        %v1970 = vpop.f32.mrb[0].mxu0
        %v1971 = vpop.f32.mrb[0].mxu0
        %v1972 = vadd.f32 %v325, %v1971
        %v1973 = vpop.f32.mrb[0].mxu0
        %1974 = vmatprep.mubr.bf16.mxu0 0
        %1975 = vmatmul.mubr.bf16.gmra.mrb[0].mxu0 %v954
        %v1976 = vpop.f32.mrb[0].mxu0
        %v1977 = vadd.f32 %v325, %v1976
        %v1978 = vpop.f32.mrb[0].mxu0
        %v1979 = vpop.f32.mrb[0].mxu0
        %v1980 = vadd.f32 %v325, %v1979
        %v1981 = vpop.f32.mrb[0].mxu0
        %1982 = vmatprep.mubr.bf16.mxu0 0
        %1983 = vmatmul.mubr.bf16.gmra.mrb[0].mxu0 %v957
        %v1984 = vpop.f32.mrb[0].mxu0
        %v1985 = vadd.f32 %v325, %v1984
        %v1986 = vpop.f32.mrb[0].mxu0
        %v1987 = vpop.f32.mrb[0].mxu0
        %v1988 = vadd.f32 %v325, %v1987
        %v1989 = vpop.f32.mrb[0].mxu0
        %1990 = vmatprep.mubr.bf16.mxu0 0
        %1991 = vmatmul.mubr.bf16.gmra.mrb[0].mxu0 %v960
        %v1992 = vpop.f32.mrb[0].mxu0
        %v1993 = vadd.f32 %v325, %v1992
        %v1994 = vpop.f32.mrb[0].mxu0
        %v1995 = vpop.f32.mrb[0].mxu0
        %v1996 = vadd.f32 %v325, %v1995
        %v1997 = vpop.f32.mrb[0].mxu0
        %1998 = vmatprep.mubr.bf16.mxu0 0
        %1999 = vmatmul.mubr.bf16.gmra.mrb[0].mxu0 %v963
        %v2000 = vpop.f32.mrb[0].mxu0
        %v2001 = vadd.f32 %v325, %v2000
        %v2002 = vpop.f32.mrb[0].mxu0
        %v2003 = vpop.f32.mrb[0].mxu0
        %v2004 = vadd.f32 %v325, %v2003
        %v2005 = vpop.f32.mrb[0].mxu0
        %2006 = vmatprep.mubr.bf16.mxu0 0
        %2007 = vmatmul.mubr.bf16.gmra.mrb[0].mxu0 %v966
        %v2008 = vpop.f32.mrb[0].mxu0
        %v2009 = vadd.f32 %v325, %v2008
        %v2010 = vpop.f32.mrb[0].mxu0
        %v2011 = vpop.f32.mrb[0].mxu0
        %v2012 = vadd.f32 %v325, %v2011
        %v2013 = vpop.f32.mrb[0].mxu0
        %2014 = vmatprep.mubr.bf16.mxu0 0
        %2015 = vmatmul.mubr.bf16.gmra.mrb[0].mxu0 %v969
        %v2016 = vpop.f32.mrb[0].mxu0
        %v2017 = vadd.f32 %v325, %v2016
        %v2018 = vpop.f32.mrb[0].mxu0
        %v2019 = vpop.f32.mrb[0].mxu0
        %v2020 = vadd.f32 %v325, %v2019
        %v2021 = vpop.f32.mrb[0].mxu0
        %2022 = vmatprep.mubr.bf16.mxu0 0
        %2023 = vmatmul.mubr.bf16.gmra.mrb[0].mxu0 %v972
        %v2024 = vpop.f32.mrb[0].mxu0
        %v2025 = vadd.f32 %v325, %v2024
        %v2026 = vpop.f32.mrb[0].mxu0
        %v2027 = vpop.f32.mrb[0].mxu0
        %v2028 = vadd.f32 %v325, %v2027
        %v2029 = vpop.f32.mrb[0].mxu0
        %2030 = vdwg.mxu0
        %p2031 = scmp.eq.s32.totalorder %s31, 0
        // Predicated region
        $region45: #{tpu_custom_call.1} parent=31 // pred_check
          %p2032 = pneg %p2031
        $region46: #{tpu_custom_call.1} parent=31 // pred_check_branch
          %2034 = sbr.rel (%p2032) target = $region48
        $region47: #{tpu_custom_call.1} parent=31 // pred_region
          %vm2035 = vcmask 516096
          %2036 = vst.msk [vmem:[%s261] sm:$0x1] %vm2035, 0.0
          %2037 = vst.msk [vmem:[%s267] sm:$0x1] %vm2035, 0.0
        $region48: #{tpu_custom_call.1} parent=31 // pred_fallthru
          _
        %v2038 = vld [vmem:[%s261] sm:$0x1]
        %vm2039 = vcmask 523264
        %v2040 = vsel %vm2039, %v1009, 0.0
        %v2041 = vsel %vm2039, %v1012, 0.0
        %v2042 = vadd.f32 %v2040, %v2041
        %v2043 = vsel %vm2039, %v1017, 0.0
        %v2044 = vadd.f32 %v2042, %v2043
        %v2045 = vsel %vm2039, %v1020, 0.0
        %v2046 = vadd.f32 %v2044, %v2045
        %v2047 = vsel %vm2039, %v1025, 0.0
        %v2048 = vadd.f32 %v2046, %v2047
        %v2049 = vsel %vm2039, %v1028, 0.0
        %v2050 = vadd.f32 %v2048, %v2049
        %v2051 = vsel %vm2039, %v1033, 0.0
        %v2052 = vadd.f32 %v2050, %v2051
        %v2053 = vsel %vm2039, %v1036, 0.0
        %v2054 = vadd.f32 %v2052, %v2053
        %v2055 = vsel %vm2039, %v1041, 0.0
        %v2056 = vadd.f32 %v2054, %v2055
        %v2057 = vsel %vm2039, %v1044, 0.0
        %v2058 = vadd.f32 %v2056, %v2057
        %v2059 = vsel %vm2039, %v1049, 0.0
        %v2060 = vadd.f32 %v2058, %v2059
        %v2061 = vsel %vm2039, %v1052, 0.0
        %v2062 = vadd.f32 %v2060, %v2061
        %v2063 = vsel %vm2039, %v1057, 0.0
        %v2064 = vadd.f32 %v2062, %v2063
        %v2065 = vsel %vm2039, %v1060, 0.0
        %v2066 = vadd.f32 %v2064, %v2065
        %v2067 = vsel %vm2039, %v1065, 0.0
        %v2068 = vadd.f32 %v2066, %v2067
        %v2069 = vsel %vm2039, %v1068, 0.0
        %v2070 = vadd.f32 %v2068, %v2069
        %v2071 = vsel %vm2039, %v1073, 0.0
        %v2072 = vadd.f32 %v2070, %v2071
        %v2073 = vsel %vm2039, %v1076, 0.0
        %v2074 = vadd.f32 %v2072, %v2073
        %v2075 = vsel %vm2039, %v1081, 0.0
        %v2076 = vadd.f32 %v2074, %v2075
        %v2077 = vsel %vm2039, %v1084, 0.0
        %v2078 = vadd.f32 %v2076, %v2077
        %v2079 = vsel %vm2039, %v1089, 0.0
        %v2080 = vadd.f32 %v2078, %v2079
        %v2081 = vsel %vm2039, %v1092, 0.0
        %v2082 = vadd.f32 %v2080, %v2081
        %v2083 = vsel %vm2039, %v1097, 0.0
        %v2084 = vadd.f32 %v2082, %v2083
        %v2085 = vsel %vm2039, %v1100, 0.0
        %v2086 = vadd.f32 %v2084, %v2085
        %v2087 = vsel %vm2039, %v1105, 0.0
        %v2088 = vadd.f32 %v2086, %v2087
        %v2089 = vsel %vm2039, %v1108, 0.0
        %v2090 = vadd.f32 %v2088, %v2089
        %v2091 = vsel %vm2039, %v1113, 0.0
        %v2092 = vadd.f32 %v2090, %v2091
        %v2093 = vsel %vm2039, %v1116, 0.0
        %v2094 = vadd.f32 %v2092, %v2093
        %v2095 = vsel %vm2039, %v1121, 0.0
        %v2096 = vadd.f32 %v2094, %v2095
        %v2097 = vsel %vm2039, %v1124, 0.0
        %v2098 = vadd.f32 %v2096, %v2097
        %v2099 = vsel %vm2039, %v1129, 0.0
        %v2100 = vadd.f32 %v2098, %v2099
        %v2101 = vsel %vm2039, %v1132, 0.0
        %v2102 = vadd.f32 %v2100, %v2101
        %v2103 = vsel %vm2039, %v1137, 0.0
        %v2104 = vadd.f32 %v2102, %v2103
        %v2105 = vsel %vm2039, %v1140, 0.0
        %v2106 = vadd.f32 %v2104, %v2105
        %v2107 = vsel %vm2039, %v1145, 0.0
        %v2108 = vadd.f32 %v2106, %v2107
        %v2109 = vsel %vm2039, %v1148, 0.0
        %v2110 = vadd.f32 %v2108, %v2109
        %v2111 = vsel %vm2039, %v1153, 0.0
        %v2112 = vadd.f32 %v2110, %v2111
        %v2113 = vsel %vm2039, %v1156, 0.0
        %v2114 = vadd.f32 %v2112, %v2113
        %v2115 = vsel %vm2039, %v1161, 0.0
        %v2116 = vadd.f32 %v2114, %v2115
        %v2117 = vsel %vm2039, %v1164, 0.0
        %v2118 = vadd.f32 %v2116, %v2117
        %v2119 = vsel %vm2039, %v1169, 0.0
        %v2120 = vadd.f32 %v2118, %v2119
        %v2121 = vsel %vm2039, %v1172, 0.0
        %v2122 = vadd.f32 %v2120, %v2121
        %v2123 = vsel %vm2039, %v1177, 0.0
        %v2124 = vadd.f32 %v2122, %v2123
        %v2125 = vsel %vm2039, %v1180, 0.0
        %v2126 = vadd.f32 %v2124, %v2125
        %v2127 = vsel %vm2039, %v1185, 0.0
        %v2128 = vadd.f32 %v2126, %v2127
        %v2129 = vsel %vm2039, %v1188, 0.0
        %v2130 = vadd.f32 %v2128, %v2129
        %v2131 = vsel %vm2039, %v1193, 0.0
        %v2132 = vadd.f32 %v2130, %v2131
        %v2133 = vsel %vm2039, %v1196, 0.0
        %v2134 = vadd.f32 %v2132, %v2133
        %v2135 = vsel %vm2039, %v1201, 0.0
        %v2136 = vadd.f32 %v2134, %v2135
        %v2137 = vsel %vm2039, %v1204, 0.0
        %v2138 = vadd.f32 %v2136, %v2137
        %v2139 = vsel %vm2039, %v1209, 0.0
        %v2140 = vadd.f32 %v2138, %v2139
        %v2141 = vsel %vm2039, %v1212, 0.0
        %v2142 = vadd.f32 %v2140, %v2141
        %v2143 = vsel %vm2039, %v1217, 0.0
        %v2144 = vadd.f32 %v2142, %v2143
        %v2145 = vsel %vm2039, %v1220, 0.0
        %v2146 = vadd.f32 %v2144, %v2145
        %v2147 = vsel %vm2039, %v1225, 0.0
        %v2148 = vadd.f32 %v2146, %v2147
        %v2149 = vsel %vm2039, %v1228, 0.0
        %v2150 = vadd.f32 %v2148, %v2149
        %v2151 = vsel %vm2039, %v1233, 0.0
        %v2152 = vadd.f32 %v2150, %v2151
        %v2153 = vsel %vm2039, %v1236, 0.0
        %v2154 = vadd.f32 %v2152, %v2153
        %v2155 = vsel %vm2039, %v1241, 0.0
        %v2156 = vadd.f32 %v2154, %v2155
        %v2157 = vsel %vm2039, %v1244, 0.0
        %v2158 = vadd.f32 %v2156, %v2157
        %v2159 = vsel %vm2039, %v1249, 0.0
        %v2160 = vadd.f32 %v2158, %v2159
        %v2161 = vsel %vm2039, %v1252, 0.0
        %v2162 = vadd.f32 %v2160, %v2161
        %v2163 = vsel %vm2039, %v1257, 0.0
        %v2164 = vadd.f32 %v2162, %v2163
        %v2165 = vsel %vm2039, %v1260, 0.0
        %v2166 = vadd.f32 %v2164, %v2165
        %v2167 = vsel %vm2039, %v1265, 0.0
        %v2168 = vadd.f32 %v2166, %v2167
        %v2169 = vsel %vm2039, %v1268, 0.0
        %v2170 = vadd.f32 %v2168, %v2169
        %v2171 = vsel %vm2039, %v1273, 0.0
        %v2172 = vadd.f32 %v2170, %v2171
        %v2173 = vsel %vm2039, %v1276, 0.0
        %v2174 = vadd.f32 %v2172, %v2173
        %v2175 = vsel %vm2039, %v1281, 0.0
        %v2176 = vadd.f32 %v2174, %v2175
        %v2177 = vsel %vm2039, %v1284, 0.0
        %v2178 = vadd.f32 %v2176, %v2177
        %v2179 = vsel %vm2039, %v1289, 0.0
        %v2180 = vadd.f32 %v2178, %v2179
        %v2181 = vsel %vm2039, %v1292, 0.0
        %v2182 = vadd.f32 %v2180, %v2181
        %v2183 = vsel %vm2039, %v1297, 0.0
        %v2184 = vadd.f32 %v2182, %v2183
        %v2185 = vsel %vm2039, %v1300, 0.0
        %v2186 = vadd.f32 %v2184, %v2185
        %v2187 = vsel %vm2039, %v1305, 0.0
        %v2188 = vadd.f32 %v2186, %v2187
        %v2189 = vsel %vm2039, %v1308, 0.0
        %v2190 = vadd.f32 %v2188, %v2189
        %v2191 = vsel %vm2039, %v1313, 0.0
        %v2192 = vadd.f32 %v2190, %v2191
        %v2193 = vsel %vm2039, %v1316, 0.0
        %v2194 = vadd.f32 %v2192, %v2193
        %v2195 = vsel %vm2039, %v1321, 0.0
        %v2196 = vadd.f32 %v2194, %v2195
        %v2197 = vsel %vm2039, %v1324, 0.0
        %v2198 = vadd.f32 %v2196, %v2197
        %v2199 = vsel %vm2039, %v1329, 0.0
        %v2200 = vadd.f32 %v2198, %v2199
        %v2201 = vsel %vm2039, %v1332, 0.0
        %v2202 = vadd.f32 %v2200, %v2201
        %v2203 = vsel %vm2039, %v1337, 0.0
        %v2204 = vadd.f32 %v2202, %v2203
        %v2205 = vsel %vm2039, %v1340, 0.0
        %v2206 = vadd.f32 %v2204, %v2205
        %v2207 = vsel %vm2039, %v1345, 0.0
        %v2208 = vadd.f32 %v2206, %v2207
        %v2209 = vsel %vm2039, %v1348, 0.0
        %v2210 = vadd.f32 %v2208, %v2209
        %v2211 = vsel %vm2039, %v1353, 0.0
        %v2212 = vadd.f32 %v2210, %v2211
        %v2213 = vsel %vm2039, %v1356, 0.0
        %v2214 = vadd.f32 %v2212, %v2213
        %v2215 = vsel %vm2039, %v1361, 0.0
        %v2216 = vadd.f32 %v2214, %v2215
        %v2217 = vsel %vm2039, %v1364, 0.0
        %v2218 = vadd.f32 %v2216, %v2217
        %v2219 = vsel %vm2039, %v1369, 0.0
        %v2220 = vadd.f32 %v2218, %v2219
        %v2221 = vsel %vm2039, %v1372, 0.0
        %v2222 = vadd.f32 %v2220, %v2221
        %v2223 = vsel %vm2039, %v1377, 0.0
        %v2224 = vadd.f32 %v2222, %v2223
        %v2225 = vsel %vm2039, %v1380, 0.0
        %v2226 = vadd.f32 %v2224, %v2225
        %v2227 = vsel %vm2039, %v1385, 0.0
        %v2228 = vadd.f32 %v2226, %v2227
        %v2229 = vsel %vm2039, %v1388, 0.0
        %v2230 = vadd.f32 %v2228, %v2229
        %v2231 = vsel %vm2039, %v1393, 0.0
        %v2232 = vadd.f32 %v2230, %v2231
        %v2233 = vsel %vm2039, %v1396, 0.0
        %v2234 = vadd.f32 %v2232, %v2233
        %v2235 = vsel %vm2039, %v1401, 0.0
        %v2236 = vadd.f32 %v2234, %v2235
        %v2237 = vsel %vm2039, %v1404, 0.0
        %v2238 = vadd.f32 %v2236, %v2237
        %v2239 = vsel %vm2039, %v1409, 0.0
        %v2240 = vadd.f32 %v2238, %v2239
        %v2241 = vsel %vm2039, %v1412, 0.0
        %v2242 = vadd.f32 %v2240, %v2241
        %v2243 = vsel %vm2039, %v1417, 0.0
        %v2244 = vadd.f32 %v2242, %v2243
        %v2245 = vsel %vm2039, %v1420, 0.0
        %v2246 = vadd.f32 %v2244, %v2245
        %v2247 = vsel %vm2039, %v1425, 0.0
        %v2248 = vadd.f32 %v2246, %v2247
        %v2249 = vsel %vm2039, %v1428, 0.0
        %v2250 = vadd.f32 %v2248, %v2249
        %v2251 = vsel %vm2039, %v1433, 0.0
        %v2252 = vadd.f32 %v2250, %v2251
        %v2253 = vsel %vm2039, %v1436, 0.0
        %v2254 = vadd.f32 %v2252, %v2253
        %v2255 = vsel %vm2039, %v1441, 0.0
        %v2256 = vadd.f32 %v2254, %v2255
        %v2257 = vsel %vm2039, %v1444, 0.0
        %v2258 = vadd.f32 %v2256, %v2257
        %v2259 = vsel %vm2039, %v1449, 0.0
        %v2260 = vadd.f32 %v2258, %v2259
        %v2261 = vsel %vm2039, %v1452, 0.0
        %v2262 = vadd.f32 %v2260, %v2261
        %v2263 = vsel %vm2039, %v1457, 0.0
        %v2264 = vadd.f32 %v2262, %v2263
        %v2265 = vsel %vm2039, %v1460, 0.0
        %v2266 = vadd.f32 %v2264, %v2265
        %v2267 = vsel %vm2039, %v1465, 0.0
        %v2268 = vadd.f32 %v2266, %v2267
        %v2269 = vsel %vm2039, %v1468, 0.0
        %v2270 = vadd.f32 %v2268, %v2269
        %v2271 = vsel %vm2039, %v1473, 0.0
        %v2272 = vadd.f32 %v2270, %v2271
        %v2273 = vsel %vm2039, %v1476, 0.0
        %v2274 = vadd.f32 %v2272, %v2273
        %v2275 = vsel %vm2039, %v1481, 0.0
        %v2276 = vadd.f32 %v2274, %v2275
        %v2277 = vsel %vm2039, %v1484, 0.0
        %v2278 = vadd.f32 %v2276, %v2277
        %v2279 = vsel %vm2039, %v1489, 0.0
        %v2280 = vadd.f32 %v2278, %v2279
        %v2281 = vsel %vm2039, %v1492, 0.0
        %v2282 = vadd.f32 %v2280, %v2281
        %v2283 = vsel %vm2039, %v1497, 0.0
        %v2284 = vadd.f32 %v2282, %v2283
        %v2285 = vsel %vm2039, %v1500, 0.0
        %v2286 = vadd.f32 %v2284, %v2285
        %v2287 = vsel %vm2039, %v1505, 0.0
        %v2288 = vadd.f32 %v2286, %v2287
        %v2289 = vsel %vm2039, %v1508, 0.0
        %v2290 = vadd.f32 %v2288, %v2289
        %v2291 = vsel %vm2039, %v1513, 0.0
        %v2292 = vadd.f32 %v2290, %v2291
        %v2293 = vsel %vm2039, %v1516, 0.0
        %v2294 = vadd.f32 %v2292, %v2293
        %v2295 = vsel %vm2039, %v1521, 0.0
        %v2296 = vadd.f32 %v2294, %v2295
        %v2297 = vsel %vm2039, %v1524, 0.0
        %v2298 = vadd.f32 %v2296, %v2297
        %v2299 = vsel %vm2039, %v1529, 0.0
        %v2300 = vadd.f32 %v2298, %v2299
        %v2301 = vsel %vm2039, %v1532, 0.0
        %v2302 = vadd.f32 %v2300, %v2301
        %v2303 = vsel %vm2039, %v1537, 0.0
        %v2304 = vadd.f32 %v2302, %v2303
        %v2305 = vsel %vm2039, %v1540, 0.0
        %v2306 = vadd.f32 %v2304, %v2305
        %v2307 = vsel %vm2039, %v1545, 0.0
        %v2308 = vadd.f32 %v2306, %v2307
        %v2309 = vsel %vm2039, %v1548, 0.0
        %v2310 = vadd.f32 %v2308, %v2309
        %v2311 = vsel %vm2039, %v1553, 0.0
        %v2312 = vadd.f32 %v2310, %v2311
        %v2313 = vsel %vm2039, %v1556, 0.0
        %v2314 = vadd.f32 %v2312, %v2313
        %v2315 = vsel %vm2039, %v1561, 0.0
        %v2316 = vadd.f32 %v2314, %v2315
        %v2317 = vsel %vm2039, %v1564, 0.0
        %v2318 = vadd.f32 %v2316, %v2317
        %v2319 = vsel %vm2039, %v1569, 0.0
        %v2320 = vadd.f32 %v2318, %v2319
        %v2321 = vsel %vm2039, %v1572, 0.0
        %v2322 = vadd.f32 %v2320, %v2321
        %v2323 = vsel %vm2039, %v1577, 0.0
        %v2324 = vadd.f32 %v2322, %v2323
        %v2325 = vsel %vm2039, %v1580, 0.0
        %v2326 = vadd.f32 %v2324, %v2325
        %v2327 = vsel %vm2039, %v1585, 0.0
        %v2328 = vadd.f32 %v2326, %v2327
        %v2329 = vsel %vm2039, %v1588, 0.0
        %v2330 = vadd.f32 %v2328, %v2329
        %v2331 = vsel %vm2039, %v1593, 0.0
        %v2332 = vadd.f32 %v2330, %v2331
        %v2333 = vsel %vm2039, %v1596, 0.0
        %v2334 = vadd.f32 %v2332, %v2333
        %v2335 = vsel %vm2039, %v1601, 0.0
        %v2336 = vadd.f32 %v2334, %v2335
        %v2337 = vsel %vm2039, %v1604, 0.0
        %v2338 = vadd.f32 %v2336, %v2337
        %v2339 = vsel %vm2039, %v1609, 0.0
        %v2340 = vadd.f32 %v2338, %v2339
        %v2341 = vsel %vm2039, %v1612, 0.0
        %v2342 = vadd.f32 %v2340, %v2341
        %v2343 = vsel %vm2039, %v1617, 0.0
        %v2344 = vadd.f32 %v2342, %v2343
        %v2345 = vsel %vm2039, %v1620, 0.0
        %v2346 = vadd.f32 %v2344, %v2345
        %v2347 = vsel %vm2039, %v1625, 0.0
        %v2348 = vadd.f32 %v2346, %v2347
        %v2349 = vsel %vm2039, %v1628, 0.0
        %v2350 = vadd.f32 %v2348, %v2349
        %v2351 = vsel %vm2039, %v1633, 0.0
        %v2352 = vadd.f32 %v2350, %v2351
        %v2353 = vsel %vm2039, %v1636, 0.0
        %v2354 = vadd.f32 %v2352, %v2353
        %v2355 = vsel %vm2039, %v1641, 0.0
        %v2356 = vadd.f32 %v2354, %v2355
        %v2357 = vsel %vm2039, %v1644, 0.0
        %v2358 = vadd.f32 %v2356, %v2357
        %v2359 = vsel %vm2039, %v1649, 0.0
        %v2360 = vadd.f32 %v2358, %v2359
        %v2361 = vsel %vm2039, %v1652, 0.0
        %v2362 = vadd.f32 %v2360, %v2361
        %v2363 = vsel %vm2039, %v1657, 0.0
        %v2364 = vadd.f32 %v2362, %v2363
        %v2365 = vsel %vm2039, %v1660, 0.0
        %v2366 = vadd.f32 %v2364, %v2365
        %v2367 = vsel %vm2039, %v1665, 0.0
        %v2368 = vadd.f32 %v2366, %v2367
        %v2369 = vsel %vm2039, %v1668, 0.0
        %v2370 = vadd.f32 %v2368, %v2369
        %v2371 = vsel %vm2039, %v1673, 0.0
        %v2372 = vadd.f32 %v2370, %v2371
        %v2373 = vsel %vm2039, %v1676, 0.0
        %v2374 = vadd.f32 %v2372, %v2373
        %v2375 = vsel %vm2039, %v1681, 0.0
        %v2376 = vadd.f32 %v2374, %v2375
        %v2377 = vsel %vm2039, %v1684, 0.0
        %v2378 = vadd.f32 %v2376, %v2377
        %v2379 = vsel %vm2039, %v1689, 0.0
        %v2380 = vadd.f32 %v2378, %v2379
        %v2381 = vsel %vm2039, %v1692, 0.0
        %v2382 = vadd.f32 %v2380, %v2381
        %v2383 = vsel %vm2039, %v1697, 0.0
        %v2384 = vadd.f32 %v2382, %v2383
        %v2385 = vsel %vm2039, %v1700, 0.0
        %v2386 = vadd.f32 %v2384, %v2385
        %v2387 = vsel %vm2039, %v1705, 0.0
        %v2388 = vadd.f32 %v2386, %v2387
        %v2389 = vsel %vm2039, %v1708, 0.0
        %v2390 = vadd.f32 %v2388, %v2389
        %v2391 = vsel %vm2039, %v1713, 0.0
        %v2392 = vadd.f32 %v2390, %v2391
        %v2393 = vsel %vm2039, %v1716, 0.0
        %v2394 = vadd.f32 %v2392, %v2393
        %v2395 = vsel %vm2039, %v1721, 0.0
        %v2396 = vadd.f32 %v2394, %v2395
        %v2397 = vsel %vm2039, %v1724, 0.0
        %v2398 = vadd.f32 %v2396, %v2397
        %v2399 = vsel %vm2039, %v1729, 0.0
        %v2400 = vadd.f32 %v2398, %v2399
        %v2401 = vsel %vm2039, %v1732, 0.0
        %v2402 = vadd.f32 %v2400, %v2401
        %v2403 = vsel %vm2039, %v1737, 0.0
        %v2404 = vadd.f32 %v2402, %v2403
        %v2405 = vsel %vm2039, %v1740, 0.0
        %v2406 = vadd.f32 %v2404, %v2405
        %v2407 = vsel %vm2039, %v1745, 0.0
        %v2408 = vadd.f32 %v2406, %v2407
        %v2409 = vsel %vm2039, %v1748, 0.0
        %v2410 = vadd.f32 %v2408, %v2409
        %v2411 = vsel %vm2039, %v1753, 0.0
        %v2412 = vadd.f32 %v2410, %v2411
        %v2413 = vsel %vm2039, %v1756, 0.0
        %v2414 = vadd.f32 %v2412, %v2413
        %v2415 = vsel %vm2039, %v1761, 0.0
        %v2416 = vadd.f32 %v2414, %v2415
        %v2417 = vsel %vm2039, %v1764, 0.0
        %v2418 = vadd.f32 %v2416, %v2417
        %v2419 = vsel %vm2039, %v1769, 0.0
        %v2420 = vadd.f32 %v2418, %v2419
        %v2421 = vsel %vm2039, %v1772, 0.0
        %v2422 = vadd.f32 %v2420, %v2421
        %v2423 = vsel %vm2039, %v1777, 0.0
        %v2424 = vadd.f32 %v2422, %v2423
        %v2425 = vsel %vm2039, %v1780, 0.0
        %v2426 = vadd.f32 %v2424, %v2425
        %v2427 = vsel %vm2039, %v1785, 0.0
        %v2428 = vadd.f32 %v2426, %v2427
        %v2429 = vsel %vm2039, %v1788, 0.0
        %v2430 = vadd.f32 %v2428, %v2429
        %v2431 = vsel %vm2039, %v1793, 0.0
        %v2432 = vadd.f32 %v2430, %v2431
        %v2433 = vsel %vm2039, %v1796, 0.0
        %v2434 = vadd.f32 %v2432, %v2433
        %v2435 = vsel %vm2039, %v1801, 0.0
        %v2436 = vadd.f32 %v2434, %v2435
        %v2437 = vsel %vm2039, %v1804, 0.0
        %v2438 = vadd.f32 %v2436, %v2437
        %v2439 = vsel %vm2039, %v1809, 0.0
        %v2440 = vadd.f32 %v2438, %v2439
        %v2441 = vsel %vm2039, %v1812, 0.0
        %v2442 = vadd.f32 %v2440, %v2441
        %v2443 = vsel %vm2039, %v1817, 0.0
        %v2444 = vadd.f32 %v2442, %v2443
        %v2445 = vsel %vm2039, %v1820, 0.0
        %v2446 = vadd.f32 %v2444, %v2445
        %v2447 = vsel %vm2039, %v1825, 0.0
        %v2448 = vadd.f32 %v2446, %v2447
        %v2449 = vsel %vm2039, %v1828, 0.0
        %v2450 = vadd.f32 %v2448, %v2449
        %v2451 = vsel %vm2039, %v1833, 0.0
        %v2452 = vadd.f32 %v2450, %v2451
        %v2453 = vsel %vm2039, %v1836, 0.0
        %v2454 = vadd.f32 %v2452, %v2453
        %v2455 = vsel %vm2039, %v1841, 0.0
        %v2456 = vadd.f32 %v2454, %v2455
        %v2457 = vsel %vm2039, %v1844, 0.0
        %v2458 = vadd.f32 %v2456, %v2457
        %v2459 = vsel %vm2039, %v1849, 0.0
        %v2460 = vadd.f32 %v2458, %v2459
        %v2461 = vsel %vm2039, %v1852, 0.0
        %v2462 = vadd.f32 %v2460, %v2461
        %v2463 = vsel %vm2039, %v1857, 0.0
        %v2464 = vadd.f32 %v2462, %v2463
        %v2465 = vsel %vm2039, %v1860, 0.0
        %v2466 = vadd.f32 %v2464, %v2465
        %v2467 = vsel %vm2039, %v1865, 0.0
        %v2468 = vadd.f32 %v2466, %v2467
        %v2469 = vsel %vm2039, %v1868, 0.0
        %v2470 = vadd.f32 %v2468, %v2469
        %v2471 = vsel %vm2039, %v1873, 0.0
        %v2472 = vadd.f32 %v2470, %v2471
        %v2473 = vsel %vm2039, %v1876, 0.0
        %v2474 = vadd.f32 %v2472, %v2473
        %v2475 = vsel %vm2039, %v1881, 0.0
        %v2476 = vadd.f32 %v2474, %v2475
        %v2477 = vsel %vm2039, %v1884, 0.0
        %v2478 = vadd.f32 %v2476, %v2477
        %v2479 = vsel %vm2039, %v1889, 0.0
        %v2480 = vadd.f32 %v2478, %v2479
        %v2481 = vsel %vm2039, %v1892, 0.0
        %v2482 = vadd.f32 %v2480, %v2481
        %v2483 = vsel %vm2039, %v1897, 0.0
        %v2484 = vadd.f32 %v2482, %v2483
        %v2485 = vsel %vm2039, %v1900, 0.0
        %v2486 = vadd.f32 %v2484, %v2485
        %v2487 = vsel %vm2039, %v1905, 0.0
        %v2488 = vadd.f32 %v2486, %v2487
        %v2489 = vsel %vm2039, %v1908, 0.0
        %v2490 = vadd.f32 %v2488, %v2489
        %v2491 = vsel %vm2039, %v1913, 0.0
        %v2492 = vadd.f32 %v2490, %v2491
        %v2493 = vsel %vm2039, %v1916, 0.0
        %v2494 = vadd.f32 %v2492, %v2493
        %v2495 = vsel %vm2039, %v1921, 0.0
        %v2496 = vadd.f32 %v2494, %v2495
        %v2497 = vsel %vm2039, %v1924, 0.0
        %v2498 = vadd.f32 %v2496, %v2497
        %v2499 = vsel %vm2039, %v1929, 0.0
        %v2500 = vadd.f32 %v2498, %v2499
        %v2501 = vsel %vm2039, %v1932, 0.0
        %v2502 = vadd.f32 %v2500, %v2501
        %v2503 = vsel %vm2039, %v1937, 0.0
        %v2504 = vadd.f32 %v2502, %v2503
        %v2505 = vsel %vm2039, %v1940, 0.0
        %v2506 = vadd.f32 %v2504, %v2505
        %v2507 = vsel %vm2039, %v1945, 0.0
        %v2508 = vadd.f32 %v2506, %v2507
        %v2509 = vsel %vm2039, %v1948, 0.0
        %v2510 = vadd.f32 %v2508, %v2509
        %v2511 = vsel %vm2039, %v1953, 0.0
        %v2512 = vadd.f32 %v2510, %v2511
        %v2513 = vsel %vm2039, %v1956, 0.0
        %v2514 = vadd.f32 %v2512, %v2513
        %v2515 = vsel %vm2039, %v1961, 0.0
        %v2516 = vadd.f32 %v2514, %v2515
        %v2517 = vsel %vm2039, %v1964, 0.0
        %v2518 = vadd.f32 %v2516, %v2517
        %v2519 = vsel %vm2039, %v1969, 0.0
        %v2520 = vadd.f32 %v2518, %v2519
        %v2521 = vsel %vm2039, %v1972, 0.0
        %v2522 = vadd.f32 %v2520, %v2521
        %v2523 = vsel %vm2039, %v1977, 0.0
        %v2524 = vadd.f32 %v2522, %v2523
        %v2525 = vsel %vm2039, %v1980, 0.0
        %v2526 = vadd.f32 %v2524, %v2525
        %v2527 = vsel %vm2039, %v1985, 0.0
        %v2528 = vadd.f32 %v2526, %v2527
        %v2529 = vsel %vm2039, %v1988, 0.0
        %v2530 = vadd.f32 %v2528, %v2529
        %v2531 = vsel %vm2039, %v1993, 0.0
        %v2532 = vadd.f32 %v2530, %v2531
        %v2533 = vsel %vm2039, %v1996, 0.0
        %v2534 = vadd.f32 %v2532, %v2533
        %v2535 = vsel %vm2039, %v2001, 0.0
        %v2536 = vadd.f32 %v2534, %v2535
        %v2537 = vsel %vm2039, %v2004, 0.0
        %v2538 = vadd.f32 %v2536, %v2537
        %v2539 = vsel %vm2039, %v2009, 0.0
        %v2540 = vadd.f32 %v2538, %v2539
        %v2541 = vsel %vm2039, %v2012, 0.0
        %v2542 = vadd.f32 %v2540, %v2541
        %v2543 = vsel %vm2039, %v2017, 0.0
        %v2544 = vadd.f32 %v2542, %v2543
        %v2545 = vsel %vm2039, %v2020, 0.0
        %v2546 = vadd.f32 %v2544, %v2545
        %v2547 = vsel %vm2039, %v2025, 0.0
        %v2548 = vadd.f32 %v2546, %v2547
        %v2549 = vsel %vm2039, %v2028, 0.0
        %v2550 = vadd.f32 %v2548, %v2549
        %v2551 = vrot.slane %v2550, 4
        %v2552 = vadd.f32 %v2550, %v2551
        %v2553 = vrot.slane %v2552, 2
        %v2554 = vadd.f32 %v2552, %v2553
        %v2555 = vrot.slane %v2554, 1
        %v2556 = vadd.f32 %v2554, %v2555
        %v2557 = vadd.f32 %v2038, %v2556
        %vm2558 = vcmask 516096
        %2559 = vst.msk [vmem:[%s261] sm:$0x1] %vm2558, %v2557
        %v2560 = vld [vmem:[%s267] sm:$0x1]
        %v2561 = vmul.f32 %v1009, %v1009
        %v2562 = vmul.f32 %v1012, %v1012
        %v2563 = vmul.f32 %v1017, %v1017
        %v2564 = vmul.f32 %v1020, %v1020
        %v2565 = vmul.f32 %v1025, %v1025
        %v2566 = vmul.f32 %v1028, %v1028
        %v2567 = vmul.f32 %v1033, %v1033
        %v2568 = vmul.f32 %v1036, %v1036
        %v2569 = vmul.f32 %v1041, %v1041
        %v2570 = vmul.f32 %v1044, %v1044
        %v2571 = vmul.f32 %v1049, %v1049
        %v2572 = vmul.f32 %v1052, %v1052
        %v2573 = vmul.f32 %v1057, %v1057
        %v2574 = vmul.f32 %v1060, %v1060
        %v2575 = vmul.f32 %v1065, %v1065
        %v2576 = vmul.f32 %v1068, %v1068
        %v2577 = vmul.f32 %v1073, %v1073
        %v2578 = vmul.f32 %v1076, %v1076
        %v2579 = vmul.f32 %v1081, %v1081
        %v2580 = vmul.f32 %v1084, %v1084
        %v2581 = vmul.f32 %v1089, %v1089
        %v2582 = vmul.f32 %v1092, %v1092
        %v2583 = vmul.f32 %v1097, %v1097
        %v2584 = vmul.f32 %v1100, %v1100
        %v2585 = vmul.f32 %v1105, %v1105
        %v2586 = vmul.f32 %v1108, %v1108
        %v2587 = vmul.f32 %v1113, %v1113
        %v2588 = vmul.f32 %v1116, %v1116
        %v2589 = vmul.f32 %v1121, %v1121
        %v2590 = vmul.f32 %v1124, %v1124
        %v2591 = vmul.f32 %v1129, %v1129
        %v2592 = vmul.f32 %v1132, %v1132
        %v2593 = vmul.f32 %v1137, %v1137
        %v2594 = vmul.f32 %v1140, %v1140
        %v2595 = vmul.f32 %v1145, %v1145
        %v2596 = vmul.f32 %v1148, %v1148
        %v2597 = vmul.f32 %v1153, %v1153
        %v2598 = vmul.f32 %v1156, %v1156
        %v2599 = vmul.f32 %v1161, %v1161
        %v2600 = vmul.f32 %v1164, %v1164
        %v2601 = vmul.f32 %v1169, %v1169
        %v2602 = vmul.f32 %v1172, %v1172
        %v2603 = vmul.f32 %v1177, %v1177
        %v2604 = vmul.f32 %v1180, %v1180
        %v2605 = vmul.f32 %v1185, %v1185
        %v2606 = vmul.f32 %v1188, %v1188
        %v2607 = vmul.f32 %v1193, %v1193
        %v2608 = vmul.f32 %v1196, %v1196
        %v2609 = vmul.f32 %v1201, %v1201
        %v2610 = vmul.f32 %v1204, %v1204
        %v2611 = vmul.f32 %v1209, %v1209
        %v2612 = vmul.f32 %v1212, %v1212
        %v2613 = vmul.f32 %v1217, %v1217
        %v2614 = vmul.f32 %v1220, %v1220
        %v2615 = vmul.f32 %v1225, %v1225
        %v2616 = vmul.f32 %v1228, %v1228
        %v2617 = vmul.f32 %v1233, %v1233
        %v2618 = vmul.f32 %v1236, %v1236
        %v2619 = vmul.f32 %v1241, %v1241
        %v2620 = vmul.f32 %v1244, %v1244
        %v2621 = vmul.f32 %v1249, %v1249
        %v2622 = vmul.f32 %v1252, %v1252
        %v2623 = vmul.f32 %v1257, %v1257
        %v2624 = vmul.f32 %v1260, %v1260
        %v2625 = vmul.f32 %v1265, %v1265
        %v2626 = vmul.f32 %v1268, %v1268
        %v2627 = vmul.f32 %v1273, %v1273
        %v2628 = vmul.f32 %v1276, %v1276
        %v2629 = vmul.f32 %v1281, %v1281
        %v2630 = vmul.f32 %v1284, %v1284
        %v2631 = vmul.f32 %v1289, %v1289
        %v2632 = vmul.f32 %v1292, %v1292
        %v2633 = vmul.f32 %v1297, %v1297
        %v2634 = vmul.f32 %v1300, %v1300
        %v2635 = vmul.f32 %v1305, %v1305
        %v2636 = vmul.f32 %v1308, %v1308
        %v2637 = vmul.f32 %v1313, %v1313
        %v2638 = vmul.f32 %v1316, %v1316
        %v2639 = vmul.f32 %v1321, %v1321
        %v2640 = vmul.f32 %v1324, %v1324
        %v2641 = vmul.f32 %v1329, %v1329
        %v2642 = vmul.f32 %v1332, %v1332
        %v2643 = vmul.f32 %v1337, %v1337
        %v2644 = vmul.f32 %v1340, %v1340
        %v2645 = vmul.f32 %v1345, %v1345
        %v2646 = vmul.f32 %v1348, %v1348
        %v2647 = vmul.f32 %v1353, %v1353
        %v2648 = vmul.f32 %v1356, %v1356
        %v2649 = vmul.f32 %v1361, %v1361
        %v2650 = vmul.f32 %v1364, %v1364
        %v2651 = vmul.f32 %v1369, %v1369
        %v2652 = vmul.f32 %v1372, %v1372
        %v2653 = vmul.f32 %v1377, %v1377
        %v2654 = vmul.f32 %v1380, %v1380
        %v2655 = vmul.f32 %v1385, %v1385
        %v2656 = vmul.f32 %v1388, %v1388
        %v2657 = vmul.f32 %v1393, %v1393
        %v2658 = vmul.f32 %v1396, %v1396
        %v2659 = vmul.f32 %v1401, %v1401
        %v2660 = vmul.f32 %v1404, %v1404
        %v2661 = vmul.f32 %v1409, %v1409
        %v2662 = vmul.f32 %v1412, %v1412
        %v2663 = vmul.f32 %v1417, %v1417
        %v2664 = vmul.f32 %v1420, %v1420
        %v2665 = vmul.f32 %v1425, %v1425
        %v2666 = vmul.f32 %v1428, %v1428
        %v2667 = vmul.f32 %v1433, %v1433
        %v2668 = vmul.f32 %v1436, %v1436
        %v2669 = vmul.f32 %v1441, %v1441
        %v2670 = vmul.f32 %v1444, %v1444
        %v2671 = vmul.f32 %v1449, %v1449
        %v2672 = vmul.f32 %v1452, %v1452
        %v2673 = vmul.f32 %v1457, %v1457
        %v2674 = vmul.f32 %v1460, %v1460
        %v2675 = vmul.f32 %v1465, %v1465
        %v2676 = vmul.f32 %v1468, %v1468
        %v2677 = vmul.f32 %v1473, %v1473
        %v2678 = vmul.f32 %v1476, %v1476
        %v2679 = vmul.f32 %v1481, %v1481
        %v2680 = vmul.f32 %v1484, %v1484
        %v2681 = vmul.f32 %v1489, %v1489
        %v2682 = vmul.f32 %v1492, %v1492
        %v2683 = vmul.f32 %v1497, %v1497
        %v2684 = vmul.f32 %v1500, %v1500
        %v2685 = vmul.f32 %v1505, %v1505
        %v2686 = vmul.f32 %v1508, %v1508
        %v2687 = vmul.f32 %v1513, %v1513
        %v2688 = vmul.f32 %v1516, %v1516
        %v2689 = vmul.f32 %v1521, %v1521
        %v2690 = vmul.f32 %v1524, %v1524
        %v2691 = vmul.f32 %v1529, %v1529
        %v2692 = vmul.f32 %v1532, %v1532
        %v2693 = vmul.f32 %v1537, %v1537
        %v2694 = vmul.f32 %v1540, %v1540
        %v2695 = vmul.f32 %v1545, %v1545
        %v2696 = vmul.f32 %v1548, %v1548
        %v2697 = vmul.f32 %v1553, %v1553
        %v2698 = vmul.f32 %v1556, %v1556
        %v2699 = vmul.f32 %v1561, %v1561
        %v2700 = vmul.f32 %v1564, %v1564
        %v2701 = vmul.f32 %v1569, %v1569
        %v2702 = vmul.f32 %v1572, %v1572
        %v2703 = vmul.f32 %v1577, %v1577
        %v2704 = vmul.f32 %v1580, %v1580
        %v2705 = vmul.f32 %v1585, %v1585
        %v2706 = vmul.f32 %v1588, %v1588
        %v2707 = vmul.f32 %v1593, %v1593
        %v2708 = vmul.f32 %v1596, %v1596
        %v2709 = vmul.f32 %v1601, %v1601
        %v2710 = vmul.f32 %v1604, %v1604
        %v2711 = vmul.f32 %v1609, %v1609
        %v2712 = vmul.f32 %v1612, %v1612
        %v2713 = vmul.f32 %v1617, %v1617
        %v2714 = vmul.f32 %v1620, %v1620
        %v2715 = vmul.f32 %v1625, %v1625
        %v2716 = vmul.f32 %v1628, %v1628
        %v2717 = vmul.f32 %v1633, %v1633
        %v2718 = vmul.f32 %v1636, %v1636
        %v2719 = vmul.f32 %v1641, %v1641
        %v2720 = vmul.f32 %v1644, %v1644
        %v2721 = vmul.f32 %v1649, %v1649
        %v2722 = vmul.f32 %v1652, %v1652
        %v2723 = vmul.f32 %v1657, %v1657
        %v2724 = vmul.f32 %v1660, %v1660
        %v2725 = vmul.f32 %v1665, %v1665
        %v2726 = vmul.f32 %v1668, %v1668
        %v2727 = vmul.f32 %v1673, %v1673
        %v2728 = vmul.f32 %v1676, %v1676
        %v2729 = vmul.f32 %v1681, %v1681
        %v2730 = vmul.f32 %v1684, %v1684
        %v2731 = vmul.f32 %v1689, %v1689
        %v2732 = vmul.f32 %v1692, %v1692
        %v2733 = vmul.f32 %v1697, %v1697
        %v2734 = vmul.f32 %v1700, %v1700
        %v2735 = vmul.f32 %v1705, %v1705
        %v2736 = vmul.f32 %v1708, %v1708
        %v2737 = vmul.f32 %v1713, %v1713
        %v2738 = vmul.f32 %v1716, %v1716
        %v2739 = vmul.f32 %v1721, %v1721
        %v2740 = vmul.f32 %v1724, %v1724
        %v2741 = vmul.f32 %v1729, %v1729
        %v2742 = vmul.f32 %v1732, %v1732
        %v2743 = vmul.f32 %v1737, %v1737
        %v2744 = vmul.f32 %v1740, %v1740
        %v2745 = vmul.f32 %v1745, %v1745
        %v2746 = vmul.f32 %v1748, %v1748
        %v2747 = vmul.f32 %v1753, %v1753
        %v2748 = vmul.f32 %v1756, %v1756
        %v2749 = vmul.f32 %v1761, %v1761
        %v2750 = vmul.f32 %v1764, %v1764
        %v2751 = vmul.f32 %v1769, %v1769
        %v2752 = vmul.f32 %v1772, %v1772
        %v2753 = vmul.f32 %v1777, %v1777
        %v2754 = vmul.f32 %v1780, %v1780
        %v2755 = vmul.f32 %v1785, %v1785
        %v2756 = vmul.f32 %v1788, %v1788
        %v2757 = vmul.f32 %v1793, %v1793
        %v2758 = vmul.f32 %v1796, %v1796
        %v2759 = vmul.f32 %v1801, %v1801
        %v2760 = vmul.f32 %v1804, %v1804
        %v2761 = vmul.f32 %v1809, %v1809
        %v2762 = vmul.f32 %v1812, %v1812
        %v2763 = vmul.f32 %v1817, %v1817
        %v2764 = vmul.f32 %v1820, %v1820
        %v2765 = vmul.f32 %v1825, %v1825
        %v2766 = vmul.f32 %v1828, %v1828
        %v2767 = vmul.f32 %v1833, %v1833
        %v2768 = vmul.f32 %v1836, %v1836
        %v2769 = vmul.f32 %v1841, %v1841
        %v2770 = vmul.f32 %v1844, %v1844
        %v2771 = vmul.f32 %v1849, %v1849
        %v2772 = vmul.f32 %v1852, %v1852
        %v2773 = vmul.f32 %v1857, %v1857
        %v2774 = vmul.f32 %v1860, %v1860
        %v2775 = vmul.f32 %v1865, %v1865
        %v2776 = vmul.f32 %v1868, %v1868
        %v2777 = vmul.f32 %v1873, %v1873
        %v2778 = vmul.f32 %v1876, %v1876
        %v2779 = vmul.f32 %v1881, %v1881
        %v2780 = vmul.f32 %v1884, %v1884
        %v2781 = vmul.f32 %v1889, %v1889
        %v2782 = vmul.f32 %v1892, %v1892
        %v2783 = vmul.f32 %v1897, %v1897
        %v2784 = vmul.f32 %v1900, %v1900
        %v2785 = vmul.f32 %v1905, %v1905
        %v2786 = vmul.f32 %v1908, %v1908
        %v2787 = vmul.f32 %v1913, %v1913
        %v2788 = vmul.f32 %v1916, %v1916
        %v2789 = vmul.f32 %v1921, %v1921
        %v2790 = vmul.f32 %v1924, %v1924
        %v2791 = vmul.f32 %v1929, %v1929
        %v2792 = vmul.f32 %v1932, %v1932
        %v2793 = vmul.f32 %v1937, %v1937
        %v2794 = vmul.f32 %v1940, %v1940
        %v2795 = vmul.f32 %v1945, %v1945
        %v2796 = vmul.f32 %v1948, %v1948
        %v2797 = vmul.f32 %v1953, %v1953
        %v2798 = vmul.f32 %v1956, %v1956
        %v2799 = vmul.f32 %v1961, %v1961
        %v2800 = vmul.f32 %v1964, %v1964
        %v2801 = vmul.f32 %v1969, %v1969
        %v2802 = vmul.f32 %v1972, %v1972
        %v2803 = vmul.f32 %v1977, %v1977
        %v2804 = vmul.f32 %v1980, %v1980
        %v2805 = vmul.f32 %v1985, %v1985
        %v2806 = vmul.f32 %v1988, %v1988
        %v2807 = vmul.f32 %v1993, %v1993
        %v2808 = vmul.f32 %v1996, %v1996
        %v2809 = vmul.f32 %v2001, %v2001
        %v2810 = vmul.f32 %v2004, %v2004
        %v2811 = vmul.f32 %v2009, %v2009
        %v2812 = vmul.f32 %v2012, %v2012
        %v2813 = vmul.f32 %v2017, %v2017
        %v2814 = vmul.f32 %v2020, %v2020
        %v2815 = vmul.f32 %v2025, %v2025
        %v2816 = vmul.f32 %v2028, %v2028
        %v2817 = vsel %vm2039, %v2561, 0.0
        %v2818 = vsel %vm2039, %v2562, 0.0
        %v2819 = vadd.f32 %v2817, %v2818
        %v2820 = vsel %vm2039, %v2563, 0.0
        %v2821 = vadd.f32 %v2819, %v2820
        %v2822 = vsel %vm2039, %v2564, 0.0
        %v2823 = vadd.f32 %v2821, %v2822
        %v2824 = vsel %vm2039, %v2565, 0.0
        %v2825 = vadd.f32 %v2823, %v2824
        %v2826 = vsel %vm2039, %v2566, 0.0
        %v2827 = vadd.f32 %v2825, %v2826
        %v2828 = vsel %vm2039, %v2567, 0.0
        %v2829 = vadd.f32 %v2827, %v2828
        %v2830 = vsel %vm2039, %v2568, 0.0
        %v2831 = vadd.f32 %v2829, %v2830
        %v2832 = vsel %vm2039, %v2569, 0.0
        %v2833 = vadd.f32 %v2831, %v2832
        %v2834 = vsel %vm2039, %v2570, 0.0
        %v2835 = vadd.f32 %v2833, %v2834
        %v2836 = vsel %vm2039, %v2571, 0.0
        %v2837 = vadd.f32 %v2835, %v2836
        %v2838 = vsel %vm2039, %v2572, 0.0
        %v2839 = vadd.f32 %v2837, %v2838
        %v2840 = vsel %vm2039, %v2573, 0.0
        %v2841 = vadd.f32 %v2839, %v2840
        %v2842 = vsel %vm2039, %v2574, 0.0
        %v2843 = vadd.f32 %v2841, %v2842
        %v2844 = vsel %vm2039, %v2575, 0.0
        %v2845 = vadd.f32 %v2843, %v2844
        %v2846 = vsel %vm2039, %v2576, 0.0
        %v2847 = vadd.f32 %v2845, %v2846
        %v2848 = vsel %vm2039, %v2577, 0.0
        %v2849 = vadd.f32 %v2847, %v2848
        %v2850 = vsel %vm2039, %v2578, 0.0
        %v2851 = vadd.f32 %v2849, %v2850
        %v2852 = vsel %vm2039, %v2579, 0.0
        %v2853 = vadd.f32 %v2851, %v2852
        %v2854 = vsel %vm2039, %v2580, 0.0
        %v2855 = vadd.f32 %v2853, %v2854
        %v2856 = vsel %vm2039, %v2581, 0.0
        %v2857 = vadd.f32 %v2855, %v2856
        %v2858 = vsel %vm2039, %v2582, 0.0
        %v2859 = vadd.f32 %v2857, %v2858
        %v2860 = vsel %vm2039, %v2583, 0.0
        %v2861 = vadd.f32 %v2859, %v2860
        %v2862 = vsel %vm2039, %v2584, 0.0
        %v2863 = vadd.f32 %v2861, %v2862
        %v2864 = vsel %vm2039, %v2585, 0.0
        %v2865 = vadd.f32 %v2863, %v2864
        %v2866 = vsel %vm2039, %v2586, 0.0
        %v2867 = vadd.f32 %v2865, %v2866
        %v2868 = vsel %vm2039, %v2587, 0.0
        %v2869 = vadd.f32 %v2867, %v2868
        %v2870 = vsel %vm2039, %v2588, 0.0
        %v2871 = vadd.f32 %v2869, %v2870
        %v2872 = vsel %vm2039, %v2589, 0.0
        %v2873 = vadd.f32 %v2871, %v2872
        %v2874 = vsel %vm2039, %v2590, 0.0
        %v2875 = vadd.f32 %v2873, %v2874
        %v2876 = vsel %vm2039, %v2591, 0.0
        %v2877 = vadd.f32 %v2875, %v2876
        %v2878 = vsel %vm2039, %v2592, 0.0
        %v2879 = vadd.f32 %v2877, %v2878
        %v2880 = vsel %vm2039, %v2593, 0.0
        %v2881 = vadd.f32 %v2879, %v2880
        %v2882 = vsel %vm2039, %v2594, 0.0
        %v2883 = vadd.f32 %v2881, %v2882
        %v2884 = vsel %vm2039, %v2595, 0.0
        %v2885 = vadd.f32 %v2883, %v2884
        %v2886 = vsel %vm2039, %v2596, 0.0
        %v2887 = vadd.f32 %v2885, %v2886
        %v2888 = vsel %vm2039, %v2597, 0.0
        %v2889 = vadd.f32 %v2887, %v2888
        %v2890 = vsel %vm2039, %v2598, 0.0
        %v2891 = vadd.f32 %v2889, %v2890
        %v2892 = vsel %vm2039, %v2599, 0.0
        %v2893 = vadd.f32 %v2891, %v2892
        %v2894 = vsel %vm2039, %v2600, 0.0
        %v2895 = vadd.f32 %v2893, %v2894
        %v2896 = vsel %vm2039, %v2601, 0.0
        %v2897 = vadd.f32 %v2895, %v2896
        %v2898 = vsel %vm2039, %v2602, 0.0
        %v2899 = vadd.f32 %v2897, %v2898
        %v2900 = vsel %vm2039, %v2603, 0.0
        %v2901 = vadd.f32 %v2899, %v2900
        %v2902 = vsel %vm2039, %v2604, 0.0
        %v2903 = vadd.f32 %v2901, %v2902
        %v2904 = vsel %vm2039, %v2605, 0.0
        %v2905 = vadd.f32 %v2903, %v2904
        %v2906 = vsel %vm2039, %v2606, 0.0
        %v2907 = vadd.f32 %v2905, %v2906
        %v2908 = vsel %vm2039, %v2607, 0.0
        %v2909 = vadd.f32 %v2907, %v2908
        %v2910 = vsel %vm2039, %v2608, 0.0
        %v2911 = vadd.f32 %v2909, %v2910
        %v2912 = vsel %vm2039, %v2609, 0.0
        %v2913 = vadd.f32 %v2911, %v2912
        %v2914 = vsel %vm2039, %v2610, 0.0
        %v2915 = vadd.f32 %v2913, %v2914
        %v2916 = vsel %vm2039, %v2611, 0.0
        %v2917 = vadd.f32 %v2915, %v2916
        %v2918 = vsel %vm2039, %v2612, 0.0
        %v2919 = vadd.f32 %v2917, %v2918
        %v2920 = vsel %vm2039, %v2613, 0.0
        %v2921 = vadd.f32 %v2919, %v2920
        %v2922 = vsel %vm2039, %v2614, 0.0
        %v2923 = vadd.f32 %v2921, %v2922
        %v2924 = vsel %vm2039, %v2615, 0.0
        %v2925 = vadd.f32 %v2923, %v2924
        %v2926 = vsel %vm2039, %v2616, 0.0
        %v2927 = vadd.f32 %v2925, %v2926
        %v2928 = vsel %vm2039, %v2617, 0.0
        %v2929 = vadd.f32 %v2927, %v2928
        %v2930 = vsel %vm2039, %v2618, 0.0
        %v2931 = vadd.f32 %v2929, %v2930
        %v2932 = vsel %vm2039, %v2619, 0.0
        %v2933 = vadd.f32 %v2931, %v2932
        %v2934 = vsel %vm2039, %v2620, 0.0
        %v2935 = vadd.f32 %v2933, %v2934
        %v2936 = vsel %vm2039, %v2621, 0.0
        %v2937 = vadd.f32 %v2935, %v2936
        %v2938 = vsel %vm2039, %v2622, 0.0
        %v2939 = vadd.f32 %v2937, %v2938
        %v2940 = vsel %vm2039, %v2623, 0.0
        %v2941 = vadd.f32 %v2939, %v2940
        %v2942 = vsel %vm2039, %v2624, 0.0
        %v2943 = vadd.f32 %v2941, %v2942
        %v2944 = vsel %vm2039, %v2625, 0.0
        %v2945 = vadd.f32 %v2943, %v2944
        %v2946 = vsel %vm2039, %v2626, 0.0
        %v2947 = vadd.f32 %v2945, %v2946
        %v2948 = vsel %vm2039, %v2627, 0.0
        %v2949 = vadd.f32 %v2947, %v2948
        %v2950 = vsel %vm2039, %v2628, 0.0
        %v2951 = vadd.f32 %v2949, %v2950
        %v2952 = vsel %vm2039, %v2629, 0.0
        %v2953 = vadd.f32 %v2951, %v2952
        %v2954 = vsel %vm2039, %v2630, 0.0
        %v2955 = vadd.f32 %v2953, %v2954
        %v2956 = vsel %vm2039, %v2631, 0.0
        %v2957 = vadd.f32 %v2955, %v2956
        %v2958 = vsel %vm2039, %v2632, 0.0
        %v2959 = vadd.f32 %v2957, %v2958
        %v2960 = vsel %vm2039, %v2633, 0.0
        %v2961 = vadd.f32 %v2959, %v2960
        %v2962 = vsel %vm2039, %v2634, 0.0
        %v2963 = vadd.f32 %v2961, %v2962
        %v2964 = vsel %vm2039, %v2635, 0.0
        %v2965 = vadd.f32 %v2963, %v2964
        %v2966 = vsel %vm2039, %v2636, 0.0
        %v2967 = vadd.f32 %v2965, %v2966
        %v2968 = vsel %vm2039, %v2637, 0.0
        %v2969 = vadd.f32 %v2967, %v2968
        %v2970 = vsel %vm2039, %v2638, 0.0
        %v2971 = vadd.f32 %v2969, %v2970
        %v2972 = vsel %vm2039, %v2639, 0.0
        %v2973 = vadd.f32 %v2971, %v2972
        %v2974 = vsel %vm2039, %v2640, 0.0
        %v2975 = vadd.f32 %v2973, %v2974
        %v2976 = vsel %vm2039, %v2641, 0.0
        %v2977 = vadd.f32 %v2975, %v2976
        %v2978 = vsel %vm2039, %v2642, 0.0
        %v2979 = vadd.f32 %v2977, %v2978
        %v2980 = vsel %vm2039, %v2643, 0.0
        %v2981 = vadd.f32 %v2979, %v2980
        %v2982 = vsel %vm2039, %v2644, 0.0
        %v2983 = vadd.f32 %v2981, %v2982
        %v2984 = vsel %vm2039, %v2645, 0.0
        %v2985 = vadd.f32 %v2983, %v2984
        %v2986 = vsel %vm2039, %v2646, 0.0
        %v2987 = vadd.f32 %v2985, %v2986
        %v2988 = vsel %vm2039, %v2647, 0.0
        %v2989 = vadd.f32 %v2987, %v2988
        %v2990 = vsel %vm2039, %v2648, 0.0
        %v2991 = vadd.f32 %v2989, %v2990
        %v2992 = vsel %vm2039, %v2649, 0.0
        %v2993 = vadd.f32 %v2991, %v2992
        %v2994 = vsel %vm2039, %v2650, 0.0
        %v2995 = vadd.f32 %v2993, %v2994
        %v2996 = vsel %vm2039, %v2651, 0.0
        %v2997 = vadd.f32 %v2995, %v2996
        %v2998 = vsel %vm2039, %v2652, 0.0
        %v2999 = vadd.f32 %v2997, %v2998
        %v3000 = vsel %vm2039, %v2653, 0.0
        %v3001 = vadd.f32 %v2999, %v3000
        %v3002 = vsel %vm2039, %v2654, 0.0
        %v3003 = vadd.f32 %v3001, %v3002
        %v3004 = vsel %vm2039, %v2655, 0.0
        %v3005 = vadd.f32 %v3003, %v3004
        %v3006 = vsel %vm2039, %v2656, 0.0
        %v3007 = vadd.f32 %v3005, %v3006
        %v3008 = vsel %vm2039, %v2657, 0.0
        %v3009 = vadd.f32 %v3007, %v3008
        %v3010 = vsel %vm2039, %v2658, 0.0
        %v3011 = vadd.f32 %v3009, %v3010
        %v3012 = vsel %vm2039, %v2659, 0.0
        %v3013 = vadd.f32 %v3011, %v3012
        %v3014 = vsel %vm2039, %v2660, 0.0
        %v3015 = vadd.f32 %v3013, %v3014
        %v3016 = vsel %vm2039, %v2661, 0.0
        %v3017 = vadd.f32 %v3015, %v3016
        %v3018 = vsel %vm2039, %v2662, 0.0
        %v3019 = vadd.f32 %v3017, %v3018
        %v3020 = vsel %vm2039, %v2663, 0.0
        %v3021 = vadd.f32 %v3019, %v3020
        %v3022 = vsel %vm2039, %v2664, 0.0
        %v3023 = vadd.f32 %v3021, %v3022
        %v3024 = vsel %vm2039, %v2665, 0.0
        %v3025 = vadd.f32 %v3023, %v3024
        %v3026 = vsel %vm2039, %v2666, 0.0
        %v3027 = vadd.f32 %v3025, %v3026
        %v3028 = vsel %vm2039, %v2667, 0.0
        %v3029 = vadd.f32 %v3027, %v3028
        %v3030 = vsel %vm2039, %v2668, 0.0
        %v3031 = vadd.f32 %v3029, %v3030
        %v3032 = vsel %vm2039, %v2669, 0.0
        %v3033 = vadd.f32 %v3031, %v3032
        %v3034 = vsel %vm2039, %v2670, 0.0
        %v3035 = vadd.f32 %v3033, %v3034
        %v3036 = vsel %vm2039, %v2671, 0.0
        %v3037 = vadd.f32 %v3035, %v3036
        %v3038 = vsel %vm2039, %v2672, 0.0
        %v3039 = vadd.f32 %v3037, %v3038
        %v3040 = vsel %vm2039, %v2673, 0.0
        %v3041 = vadd.f32 %v3039, %v3040
        %v3042 = vsel %vm2039, %v2674, 0.0
        %v3043 = vadd.f32 %v3041, %v3042
        %v3044 = vsel %vm2039, %v2675, 0.0
        %v3045 = vadd.f32 %v3043, %v3044
        %v3046 = vsel %vm2039, %v2676, 0.0
        %v3047 = vadd.f32 %v3045, %v3046
        %v3048 = vsel %vm2039, %v2677, 0.0
        %v3049 = vadd.f32 %v3047, %v3048
        %v3050 = vsel %vm2039, %v2678, 0.0
        %v3051 = vadd.f32 %v3049, %v3050
        %v3052 = vsel %vm2039, %v2679, 0.0
        %v3053 = vadd.f32 %v3051, %v3052
        %v3054 = vsel %vm2039, %v2680, 0.0
        %v3055 = vadd.f32 %v3053, %v3054
        %v3056 = vsel %vm2039, %v2681, 0.0
        %v3057 = vadd.f32 %v3055, %v3056
        %v3058 = vsel %vm2039, %v2682, 0.0
        %v3059 = vadd.f32 %v3057, %v3058
        %v3060 = vsel %vm2039, %v2683, 0.0
        %v3061 = vadd.f32 %v3059, %v3060
        %v3062 = vsel %vm2039, %v2684, 0.0
        %v3063 = vadd.f32 %v3061, %v3062
        %v3064 = vsel %vm2039, %v2685, 0.0
        %v3065 = vadd.f32 %v3063, %v3064
        %v3066 = vsel %vm2039, %v2686, 0.0
        %v3067 = vadd.f32 %v3065, %v3066
        %v3068 = vsel %vm2039, %v2687, 0.0
        %v3069 = vadd.f32 %v3067, %v3068
        %v3070 = vsel %vm2039, %v2688, 0.0
        %v3071 = vadd.f32 %v3069, %v3070
        %v3072 = vsel %vm2039, %v2689, 0.0
        %v3073 = vadd.f32 %v3071, %v3072
        %v3074 = vsel %vm2039, %v2690, 0.0
        %v3075 = vadd.f32 %v3073, %v3074
        %v3076 = vsel %vm2039, %v2691, 0.0
        %v3077 = vadd.f32 %v3075, %v3076
        %v3078 = vsel %vm2039, %v2692, 0.0
        %v3079 = vadd.f32 %v3077, %v3078
        %v3080 = vsel %vm2039, %v2693, 0.0
        %v3081 = vadd.f32 %v3079, %v3080
        %v3082 = vsel %vm2039, %v2694, 0.0
        %v3083 = vadd.f32 %v3081, %v3082
        %v3084 = vsel %vm2039, %v2695, 0.0
        %v3085 = vadd.f32 %v3083, %v3084
        %v3086 = vsel %vm2039, %v2696, 0.0
        %v3087 = vadd.f32 %v3085, %v3086
        %v3088 = vsel %vm2039, %v2697, 0.0
        %v3089 = vadd.f32 %v3087, %v3088
        %v3090 = vsel %vm2039, %v2698, 0.0
        %v3091 = vadd.f32 %v3089, %v3090
        %v3092 = vsel %vm2039, %v2699, 0.0
        %v3093 = vadd.f32 %v3091, %v3092
        %v3094 = vsel %vm2039, %v2700, 0.0
        %v3095 = vadd.f32 %v3093, %v3094
        %v3096 = vsel %vm2039, %v2701, 0.0
        %v3097 = vadd.f32 %v3095, %v3096
        %v3098 = vsel %vm2039, %v2702, 0.0
        %v3099 = vadd.f32 %v3097, %v3098
        %v3100 = vsel %vm2039, %v2703, 0.0
        %v3101 = vadd.f32 %v3099, %v3100
        %v3102 = vsel %vm2039, %v2704, 0.0
        %v3103 = vadd.f32 %v3101, %v3102
        %v3104 = vsel %vm2039, %v2705, 0.0
        %v3105 = vadd.f32 %v3103, %v3104
        %v3106 = vsel %vm2039, %v2706, 0.0
        %v3107 = vadd.f32 %v3105, %v3106
        %v3108 = vsel %vm2039, %v2707, 0.0
        %v3109 = vadd.f32 %v3107, %v3108
        %v3110 = vsel %vm2039, %v2708, 0.0
        %v3111 = vadd.f32 %v3109, %v3110
        %v3112 = vsel %vm2039, %v2709, 0.0
        %v3113 = vadd.f32 %v3111, %v3112
        %v3114 = vsel %vm2039, %v2710, 0.0
        %v3115 = vadd.f32 %v3113, %v3114
        %v3116 = vsel %vm2039, %v2711, 0.0
        %v3117 = vadd.f32 %v3115, %v3116
        %v3118 = vsel %vm2039, %v2712, 0.0
        %v3119 = vadd.f32 %v3117, %v3118
        %v3120 = vsel %vm2039, %v2713, 0.0
        %v3121 = vadd.f32 %v3119, %v3120
        %v3122 = vsel %vm2039, %v2714, 0.0
        %v3123 = vadd.f32 %v3121, %v3122
        %v3124 = vsel %vm2039, %v2715, 0.0
        %v3125 = vadd.f32 %v3123, %v3124
        %v3126 = vsel %vm2039, %v2716, 0.0
        %v3127 = vadd.f32 %v3125, %v3126
        %v3128 = vsel %vm2039, %v2717, 0.0
        %v3129 = vadd.f32 %v3127, %v3128
        %v3130 = vsel %vm2039, %v2718, 0.0
        %v3131 = vadd.f32 %v3129, %v3130
        %v3132 = vsel %vm2039, %v2719, 0.0
        %v3133 = vadd.f32 %v3131, %v3132
        %v3134 = vsel %vm2039, %v2720, 0.0
        %v3135 = vadd.f32 %v3133, %v3134
        %v3136 = vsel %vm2039, %v2721, 0.0
        %v3137 = vadd.f32 %v3135, %v3136
        %v3138 = vsel %vm2039, %v2722, 0.0
        %v3139 = vadd.f32 %v3137, %v3138
        %v3140 = vsel %vm2039, %v2723, 0.0
        %v3141 = vadd.f32 %v3139, %v3140
        %v3142 = vsel %vm2039, %v2724, 0.0
        %v3143 = vadd.f32 %v3141, %v3142
        %v3144 = vsel %vm2039, %v2725, 0.0
        %v3145 = vadd.f32 %v3143, %v3144
        %v3146 = vsel %vm2039, %v2726, 0.0
        %v3147 = vadd.f32 %v3145, %v3146
        %v3148 = vsel %vm2039, %v2727, 0.0
        %v3149 = vadd.f32 %v3147, %v3148
        %v3150 = vsel %vm2039, %v2728, 0.0
        %v3151 = vadd.f32 %v3149, %v3150
        %v3152 = vsel %vm2039, %v2729, 0.0
        %v3153 = vadd.f32 %v3151, %v3152
        %v3154 = vsel %vm2039, %v2730, 0.0
        %v3155 = vadd.f32 %v3153, %v3154
        %v3156 = vsel %vm2039, %v2731, 0.0
        %v3157 = vadd.f32 %v3155, %v3156
        %v3158 = vsel %vm2039, %v2732, 0.0
        %v3159 = vadd.f32 %v3157, %v3158
        %v3160 = vsel %vm2039, %v2733, 0.0
        %v3161 = vadd.f32 %v3159, %v3160
        %v3162 = vsel %vm2039, %v2734, 0.0
        %v3163 = vadd.f32 %v3161, %v3162
        %v3164 = vsel %vm2039, %v2735, 0.0
        %v3165 = vadd.f32 %v3163, %v3164
        %v3166 = vsel %vm2039, %v2736, 0.0
        %v3167 = vadd.f32 %v3165, %v3166
        %v3168 = vsel %vm2039, %v2737, 0.0
        %v3169 = vadd.f32 %v3167, %v3168
        %v3170 = vsel %vm2039, %v2738, 0.0
        %v3171 = vadd.f32 %v3169, %v3170
        %v3172 = vsel %vm2039, %v2739, 0.0
        %v3173 = vadd.f32 %v3171, %v3172
        %v3174 = vsel %vm2039, %v2740, 0.0
        %v3175 = vadd.f32 %v3173, %v3174
        %v3176 = vsel %vm2039, %v2741, 0.0
        %v3177 = vadd.f32 %v3175, %v3176
        %v3178 = vsel %vm2039, %v2742, 0.0
        %v3179 = vadd.f32 %v3177, %v3178
        %v3180 = vsel %vm2039, %v2743, 0.0
        %v3181 = vadd.f32 %v3179, %v3180
        %v3182 = vsel %vm2039, %v2744, 0.0
        %v3183 = vadd.f32 %v3181, %v3182
        %v3184 = vsel %vm2039, %v2745, 0.0
        %v3185 = vadd.f32 %v3183, %v3184
        %v3186 = vsel %vm2039, %v2746, 0.0
        %v3187 = vadd.f32 %v3185, %v3186
        %v3188 = vsel %vm2039, %v2747, 0.0
        %v3189 = vadd.f32 %v3187, %v3188
        %v3190 = vsel %vm2039, %v2748, 0.0
        %v3191 = vadd.f32 %v3189, %v3190
        %v3192 = vsel %vm2039, %v2749, 0.0
        %v3193 = vadd.f32 %v3191, %v3192
        %v3194 = vsel %vm2039, %v2750, 0.0
        %v3195 = vadd.f32 %v3193, %v3194
        %v3196 = vsel %vm2039, %v2751, 0.0
        %v3197 = vadd.f32 %v3195, %v3196
        %v3198 = vsel %vm2039, %v2752, 0.0
        %v3199 = vadd.f32 %v3197, %v3198
        %v3200 = vsel %vm2039, %v2753, 0.0
        %v3201 = vadd.f32 %v3199, %v3200
        %v3202 = vsel %vm2039, %v2754, 0.0
        %v3203 = vadd.f32 %v3201, %v3202
        %v3204 = vsel %vm2039, %v2755, 0.0
        %v3205 = vadd.f32 %v3203, %v3204
        %v3206 = vsel %vm2039, %v2756, 0.0
        %v3207 = vadd.f32 %v3205, %v3206
        %v3208 = vsel %vm2039, %v2757, 0.0
        %v3209 = vadd.f32 %v3207, %v3208
        %v3210 = vsel %vm2039, %v2758, 0.0
        %v3211 = vadd.f32 %v3209, %v3210
        %v3212 = vsel %vm2039, %v2759, 0.0
        %v3213 = vadd.f32 %v3211, %v3212
        %v3214 = vsel %vm2039, %v2760, 0.0
        %v3215 = vadd.f32 %v3213, %v3214
        %v3216 = vsel %vm2039, %v2761, 0.0
        %v3217 = vadd.f32 %v3215, %v3216
        %v3218 = vsel %vm2039, %v2762, 0.0
        %v3219 = vadd.f32 %v3217, %v3218
        %v3220 = vsel %vm2039, %v2763, 0.0
        %v3221 = vadd.f32 %v3219, %v3220
        %v3222 = vsel %vm2039, %v2764, 0.0
        %v3223 = vadd.f32 %v3221, %v3222
        %v3224 = vsel %vm2039, %v2765, 0.0
        %v3225 = vadd.f32 %v3223, %v3224
        %v3226 = vsel %vm2039, %v2766, 0.0
        %v3227 = vadd.f32 %v3225, %v3226
        %v3228 = vsel %vm2039, %v2767, 0.0
        %v3229 = vadd.f32 %v3227, %v3228
        %v3230 = vsel %vm2039, %v2768, 0.0
        %v3231 = vadd.f32 %v3229, %v3230
        %v3232 = vsel %vm2039, %v2769, 0.0
        %v3233 = vadd.f32 %v3231, %v3232
        %v3234 = vsel %vm2039, %v2770, 0.0
        %v3235 = vadd.f32 %v3233, %v3234
        %v3236 = vsel %vm2039, %v2771, 0.0
        %v3237 = vadd.f32 %v3235, %v3236
        %v3238 = vsel %vm2039, %v2772, 0.0
        %v3239 = vadd.f32 %v3237, %v3238
        %v3240 = vsel %vm2039, %v2773, 0.0
        %v3241 = vadd.f32 %v3239, %v3240
        %v3242 = vsel %vm2039, %v2774, 0.0
        %v3243 = vadd.f32 %v3241, %v3242
        %v3244 = vsel %vm2039, %v2775, 0.0
        %v3245 = vadd.f32 %v3243, %v3244
        %v3246 = vsel %vm2039, %v2776, 0.0
        %v3247 = vadd.f32 %v3245, %v3246
        %v3248 = vsel %vm2039, %v2777, 0.0
        %v3249 = vadd.f32 %v3247, %v3248
        %v3250 = vsel %vm2039, %v2778, 0.0
        %v3251 = vadd.f32 %v3249, %v3250
        %v3252 = vsel %vm2039, %v2779, 0.0
        %v3253 = vadd.f32 %v3251, %v3252
        %v3254 = vsel %vm2039, %v2780, 0.0
        %v3255 = vadd.f32 %v3253, %v3254
        %v3256 = vsel %vm2039, %v2781, 0.0
        %v3257 = vadd.f32 %v3255, %v3256
        %v3258 = vsel %vm2039, %v2782, 0.0
        %v3259 = vadd.f32 %v3257, %v3258
        %v3260 = vsel %vm2039, %v2783, 0.0
        %v3261 = vadd.f32 %v3259, %v3260
        %v3262 = vsel %vm2039, %v2784, 0.0
        %v3263 = vadd.f32 %v3261, %v3262
        %v3264 = vsel %vm2039, %v2785, 0.0
        %v3265 = vadd.f32 %v3263, %v3264
        %v3266 = vsel %vm2039, %v2786, 0.0
        %v3267 = vadd.f32 %v3265, %v3266
        %v3268 = vsel %vm2039, %v2787, 0.0
        %v3269 = vadd.f32 %v3267, %v3268
        %v3270 = vsel %vm2039, %v2788, 0.0
        %v3271 = vadd.f32 %v3269, %v3270
        %v3272 = vsel %vm2039, %v2789, 0.0
        %v3273 = vadd.f32 %v3271, %v3272
        %v3274 = vsel %vm2039, %v2790, 0.0
        %v3275 = vadd.f32 %v3273, %v3274
        %v3276 = vsel %vm2039, %v2791, 0.0
        %v3277 = vadd.f32 %v3275, %v3276
        %v3278 = vsel %vm2039, %v2792, 0.0
        %v3279 = vadd.f32 %v3277, %v3278
        %v3280 = vsel %vm2039, %v2793, 0.0
        %v3281 = vadd.f32 %v3279, %v3280
        %v3282 = vsel %vm2039, %v2794, 0.0
        %v3283 = vadd.f32 %v3281, %v3282
        %v3284 = vsel %vm2039, %v2795, 0.0
        %v3285 = vadd.f32 %v3283, %v3284
        %v3286 = vsel %vm2039, %v2796, 0.0
        %v3287 = vadd.f32 %v3285, %v3286
        %v3288 = vsel %vm2039, %v2797, 0.0
        %v3289 = vadd.f32 %v3287, %v3288
        %v3290 = vsel %vm2039, %v2798, 0.0
        %v3291 = vadd.f32 %v3289, %v3290
        %v3292 = vsel %vm2039, %v2799, 0.0
        %v3293 = vadd.f32 %v3291, %v3292
        %v3294 = vsel %vm2039, %v2800, 0.0
        %v3295 = vadd.f32 %v3293, %v3294
        %v3296 = vsel %vm2039, %v2801, 0.0
        %v3297 = vadd.f32 %v3295, %v3296
        %v3298 = vsel %vm2039, %v2802, 0.0
        %v3299 = vadd.f32 %v3297, %v3298
        %v3300 = vsel %vm2039, %v2803, 0.0
        %v3301 = vadd.f32 %v3299, %v3300
        %v3302 = vsel %vm2039, %v2804, 0.0
        %v3303 = vadd.f32 %v3301, %v3302
        %v3304 = vsel %vm2039, %v2805, 0.0
        %v3305 = vadd.f32 %v3303, %v3304
        %v3306 = vsel %vm2039, %v2806, 0.0
        %v3307 = vadd.f32 %v3305, %v3306
        %v3308 = vsel %vm2039, %v2807, 0.0
        %v3309 = vadd.f32 %v3307, %v3308
        %v3310 = vsel %vm2039, %v2808, 0.0
        %v3311 = vadd.f32 %v3309, %v3310
        %v3312 = vsel %vm2039, %v2809, 0.0
        %v3313 = vadd.f32 %v3311, %v3312
        %v3314 = vsel %vm2039, %v2810, 0.0
        %v3315 = vadd.f32 %v3313, %v3314
        %v3316 = vsel %vm2039, %v2811, 0.0
        %v3317 = vadd.f32 %v3315, %v3316
        %v3318 = vsel %vm2039, %v2812, 0.0
        %v3319 = vadd.f32 %v3317, %v3318
        %v3320 = vsel %vm2039, %v2813, 0.0
        %v3321 = vadd.f32 %v3319, %v3320
        %v3322 = vsel %vm2039, %v2814, 0.0
        %v3323 = vadd.f32 %v3321, %v3322
        %v3324 = vsel %vm2039, %v2815, 0.0
        %v3325 = vadd.f32 %v3323, %v3324
        %v3326 = vsel %vm2039, %v2816, 0.0
        %v3327 = vadd.f32 %v3325, %v3326
        %v3328 = vrot.slane %v3327, 4
        %v3329 = vadd.f32 %v3327, %v3328
        %v3330 = vrot.slane %v3329, 2
        %v3331 = vadd.f32 %v3329, %v3330
        %v3332 = vrot.slane %v3331, 1
        %v3333 = vadd.f32 %v3331, %v3332
        %v3334 = vadd.f32 %v2560, %v3333
        %3335 = vst.msk [vmem:[%s267] sm:$0x1] %vm2558, %v3334
        %s3336 = sand.u32 %s116, 1
        %s3337 = scalar_lea.sflag [#allocation4], %s3336
        %s3338 = sand.u32 %s116, 1
        %s3339 = scalar_lea.vmem [#allocation8], %s3338
        %s3340 = sand.u32 %s142, 1
        %s3341 = scalar_lea.sflag [#allocation10], %s3340
        %s3342 = sand.u32 %s142, 1
        %s3343 = scalar_lea.vmem [#allocation9], %s3342
        // Predicated region
        $region49: #{tpu_custom_call.1} parent=31 // pred_check
          %p3344 = pneg %p126
        $region50: #{tpu_custom_call.1} parent=31 // pred_check_branch
          %3346 = sbr.rel (%p3344) target = $region52
        $region51: #{tpu_custom_call.1} parent=31 // pred_region
          %s3348 = ssub.s32 16, 16
          %3349 = vsyncadd %s3337, %s3348
          %s3350 = smul.addr %s30, 16
          %s3351 = scalar_lea.hbm %s3, %s3350
          %s3353 = sshll.u32 %s3339, 4
          %s3354 = int_to_ptr.vmem [resolvable:$true] %s3353
          %3356 = dma.vmem_to_hbm [thread:$0]  %s3354, 16, %s3351, %s3337
        $region52: #{tpu_custom_call.1} parent=31 // pred_fallthru
          _
        // Predicated region
        $region53: #{tpu_custom_call.1} parent=31 // pred_check
          %p3357 = pneg %p152
        $region54: #{tpu_custom_call.1} parent=31 // pred_check_branch
          %3359 = sbr.rel (%p3357) target = $region56
        $region55: #{tpu_custom_call.1} parent=31 // pred_region
          %s3361 = ssub.s32 16, 16
          %3362 = vsyncadd %s3341, %s3361
          %s3363 = smul.addr %s30, 16
          %s3364 = scalar_lea.hbm %s4, %s3363
          %s3366 = sshll.u32 %s3343, 4
          %s3367 = int_to_ptr.vmem [resolvable:$true] %s3366
          %3369 = dma.vmem_to_hbm [thread:$0]  %s3367, 16, %s3364, %s3341
        $region56: #{tpu_custom_call.1} parent=31 // pred_fallthru
          _
      $region32: #{tpu_custom_call.1} parent=5 // pred_fallthru
        _
      %p3370 = scmp.le.s32.totalorder 2, %s21
      // Predicated region
      $region57: #{tpu_custom_call.1} parent=5 // pred_check
        %p3371 = pneg %p3370
      $region58: #{tpu_custom_call.1} parent=5 // pred_check_branch
        %3373 = sbr.rel (%p3371) target = $region60
      $region59: #{tpu_custom_call.1} parent=5 // pred_region
        %s3374 = ssub.s32 %s21, 2
        // Predicated region
        $region61: #{tpu_custom_call.1} parent=59 // pred_check
          %p3375 = pneg %p132
        $region62: #{tpu_custom_call.1} parent=59 // pred_check_branch
          %3377 = sbr.rel (%p3375) target = $region64
        $region63: #{tpu_custom_call.1} parent=59 // pred_region
          %s3378 = sand.u32 %s117, 1
          %s3379 = scalar_lea.sflag [#allocation4], %s3378
          %s3380 = sand.u32 %s117, 1
          %s3381 = scalar_lea.vmem [#allocation8], %s3380
          %3382 = dma.done %s3379, 16
        $region64: #{tpu_custom_call.1} parent=59 // pred_fallthru
          _
        // Predicated region
        $region65: #{tpu_custom_call.1} parent=59 // pred_check
          %p3383 = pneg %p158
        $region66: #{tpu_custom_call.1} parent=59 // pred_check_branch
          %3385 = sbr.rel (%p3383) target = $region68
        $region67: #{tpu_custom_call.1} parent=59 // pred_region
          %s3386 = sand.u32 %s143, 1
          %s3387 = scalar_lea.sflag [#allocation10], %s3386
          %s3388 = sand.u32 %s143, 1
          %s3389 = scalar_lea.vmem [#allocation9], %s3388
          %3390 = dma.done %s3387, 16
        $region68: #{tpu_custom_call.1} parent=59 // pred_fallthru
          _
      $region60: #{tpu_custom_call.1} parent=5 // pred_fallthru
        _
    $region6: #{tpu_custom_call.1} parent=1 // loop_footer
      %s25 = sadd.s32 1, %s21
    $region7: #{tpu_custom_call.1} parent=1 // loop_footer_branch
      %20 = sbr.rel target = $region3
    $region8: #{tpu_custom_call.1} parent=1 // loop_exit
      _
    %3391 = vsyncpa [#allocation3], 1
    %s3392 = scalar_lea.sflag [#allocation3], 1
    %3393 = vsyncpa %s3392, 1
    %3394 = vsyncpa [#allocation6], 1
    %3395 = vsyncpa [#allocation4], 1
    %s3396 = scalar_lea.sflag [#allocation4], 1
    %3397 = vsyncpa %s3396, 1
    %3398 = vsyncpa [#allocation10], 1
    %s3399 = scalar_lea.sflag [#allocation10], 1
    %3400 = vsyncpa %s3399, 1

</llo_original>
